<compile_context>
chip_gen: v7x
topology: tpu7x:2x2x1
jax: 0.10.0
libtpu: 0.0.40
codegen_flags: <defaults>
</compile_context>

<pallas_src>
import numpy as np
import jax
import jax.numpy as jnp
from jax.experimental import pallas as pl
from jax.experimental.pallas import tpu as pltpu

KSIZE, STRIDE, PAD = 4, 2, 1
BN_EPS = 1e-5          # nn.BatchNorm2d default eps
LRELU_SLOPE = 0.2      # nn.LeakyReLU(0.2)


# ---------------------------------------------------------------------------
# Static planning helpers (host side, shapes only).
# ---------------------------------------------------------------------------
def _plan(channels_img, features_d, h, w):
    chans = [channels_img, features_d, features_d * 2, features_d * 4,
             features_d * 8, 1]
    layers = []
    hh, ww = h, w
    for l in range(5):
        ho, wo = hh // 2, ww // 2
        hp = hh + 2
        layers.append(dict(
            cin=chans[l], cout=chans[l + 1],
            h_in=hh, w_in=ww,
            hp=hp,                                  # H-padded rows per image
            hp_stride=((hp + 7) // 8) * 8,          # 8-row aligned image pitch
            ho=ho, wo=wo,                           # output spatial dims
            k1=ww * chans[l],                       # lane width of one kh block
            ncols=wo * chans[l + 1],                # lane width of the output
        ))
        hh, ww = ho, wo
    return layers


def _w_placement(w_in, wo):
    """P[kw, j, q] = 1 iff unpadded input col j == 2*q + kw - 1.
    (kw taps that land on the W zero-pad are simply dropped, so activations
    are stored without W-pad columns.)"""
    p = np.zeros((KSIZE, w_in, wo), np.float32)
    for kw in range(KSIZE):
        for q in range(wo):
            j = 2 * q + kw - 1
            if 0 <= j < w_in:
                p[kw, j, q] = 1.0
    return p


def _conv_weight_matrix(w, w_in, wo):
    """torch layout (C_out, C_in, 4, 4) -> (4*w_in*C_in, wo*C_out) bf16,
    kh-stacked along the contraction axis so the whole conv is one GEMM."""
    p = jnp.asarray(_w_placement(w_in, wo))                       # (4, w_in, wo)
    m = jnp.einsum("xjq,ochx->hjcqo", p, w.astype(jnp.float32))   # 4,w_in,ci,wo,co
    kh, wi, cin, wq, cout = m.shape
    return m.reshape(kh * wi * cin, wq * cout).astype(jnp.bfloat16)


def _fold_mat(wo, cout):
    """F[(q, co), co'] = delta(co, co'): folds flattened (W, C) lanes to C."""
    return np.tile(np.eye(cout, dtype=np.float32), (wo, 1))


# ---------------------------------------------------------------------------
# The fused kernel.
# ---------------------------------------------------------------------------
def _make_kernel(n, layers):

    def lrelu(v):
        return jnp.where(v >= 0.0, v, LRELU_SLOPE * v)

    def store_padded(dst_ref, hps, hp, rows, get_block):
        """Zero the two H-halo rows per image, write the interior rows."""
        zero_row = jnp.zeros((1, dst_ref.shape[1]), dst_ref.dtype)
        for b in range(n):
            base = b * hps
            dst_ref[pl.ds(base, 1), :] = zero_row
            dst_ref[pl.ds(base + hp - 1, 1), :] = zero_row
            dst_ref[pl.ds(base + 1, rows), :] = get_block(b)

    def conv(src_ref, wm_ref, g_ref, cfg):
        """One stride-2 4x4 conv as a single bf16 GEMM.

        H direction of im2col: 4*n sublane-strided loads into the gathered
        operand G (the 4 kh blocks sit side by side on the lane axis).
        W direction + channel mixing live in the pre-stacked weight Wm."""
        ho, hps, k1 = cfg["ho"], cfg["hp_stride"], cfg["k1"]
        for b in range(n):
            for kh in range(KSIZE):
                g_ref[pl.ds(b * ho, ho), pl.ds(kh * k1, k1)] = (
                    src_ref[pl.ds(b * hps + kh, ho, stride=STRIDE), :]
                    .astype(jnp.bfloat16))
        gmat = g_ref[pl.ds(0, n * ho), pl.ds(0, KSIZE * k1)]
        return jnp.dot(gmat, wm_ref[...], preferred_element_type=jnp.float32)

    def bn_lrelu(z, f_ref, ft_ref, gamma_ref, beta_ref, count):
        """Training-mode BatchNorm2d (biased variance, single pass) + LeakyReLU.
        Per-channel fold and broadcast-back are two M=2 GEMMs (was 4 * M=1)."""
        ssum = jnp.sum(z, axis=0, keepdims=True)
        ssq = jnp.sum(z * z, axis=0, keepdims=True)
        stats = jnp.dot(jnp.concatenate([ssum, ssq], axis=0), f_ref[...],
                        preferred_element_type=jnp.float32) * (1.0 / count)
        mean = stats[0:1, :]
        var = jnp.maximum(stats[1:2, :] - mean * mean, 0.0)
        inv = jax.lax.rsqrt(var + BN_EPS)
        scale = gamma_ref[...] * inv                      # (1, C)
        shift = beta_ref[...] - mean * scale              # (1, C)
        bc = jnp.dot(jnp.concatenate([scale, shift], axis=0), ft_ref[...],
                     preferred_element_type=jnp.float32)  # (2, Wo*C)
        return lrelu(z * bc[0:1, :] + bc[1:2, :])

    def kernel(x_ref,
               wm1, b1,
               wm2, f2, ft2, ga2, be2,
               wm3, f3, ft3, ga3, be3,
               wm4, f4, ft4, ga4, be4,
               wm5, b5,
               o_ref,
               a0, a1, a2, a3, a4, gbuf):
        acts = (a0, a1, a2, a3, a4)

        # Stage the H-padded layer-1 input (halo zeroed here, not in XLA).
        c0 = layers[0]
        store_padded(a0, c0["hp_stride"], c0["hp"], c0["h_in"],
                     lambda b: x_ref[pl.ds(b * c0["h_in"], c0["h_in"]), :])

        # Layer 1: conv + bias + LeakyReLU(0.2).
        y = lrelu(conv(a0, wm1, gbuf, c0) + b1[...])
        c1 = layers[1]
        store_padded(a1, c1["hp_stride"], c1["hp"], c1["h_in"],
                     lambda b, y=y, ho=c0["ho"]: y[b * ho:(b + 1) * ho, :])

        # Layers 2-4: conv (bias dropped: cancelled by BN) + BN + LeakyReLU.
        bn_ops = ((wm2, f2, ft2, ga2, be2),
                  (wm3, f3, ft3, ga3, be3),
                  (wm4, f4, ft4, ga4, be4))
        for li in range(1, 4):
            cfg = layers[li]
            wm_r, f_r, ft_r, ga_r, be_r = bn_ops[li - 1]
            z = conv(acts[li], wm_r, gbuf, cfg)
            y = bn_lrelu(z, f_r, ft_r, ga_r, be_r,
                         float(n * cfg["ho"] * cfg["wo"]))
            nxt = layers[li + 1]
            store_padded(acts[li + 1], nxt["hp_stride"], nxt["hp"], nxt["h_in"],
                         lambda b, y=y, ho=cfg["ho"]: y[b * ho:(b + 1) * ho, :])

        # Layer 5 (C_out = 1) folded in: conv + bias + sigmoid.
        z = conv(a4, wm5, gbuf, layers[4]) + b5[...]
        o_ref[...] = 1.0 / (1.0 + jnp.exp(-z))

    return kernel


# ---------------------------------------------------------------------------
# Wrapper.
# ---------------------------------------------------------------------------
def _full_block(arr):
    zero = (0,) * arr.ndim
    return pl.BlockSpec(tuple(arr.shape), lambda i, _z=zero: _z)


def discriminator_forward(x, params):
    """x: (N, channels_img, H, W) f32 -> (N, 1, H/32, W/32) f32 in [0, 1]."""
    n, c0, h, w = x.shape
    assert h % 32 == 0 and w % 32 == 0, "need room for 5 stride-2 layers"
    features_d = params[0][0].shape[0]
    layers = _plan(c0, features_d, h, w)

    # NCHW -> (N*H, W*C): W-major / channel-minor lane layout (no padding here;
    # the H-halo is written inside the kernel).
    x_flat = x.astype(jnp.float32).transpose(0, 2, 3, 1).reshape(n * h, w * c0)

    ops = [x_flat]
    for l, (wt, b, gamma, beta) in enumerate(params):
        cfg = layers[l]
        ops.append(_conv_weight_matrix(wt, cfg["w_in"], cfg["wo"]))
        if l == 0:                       # bias + LeakyReLU
            ops.append(jnp.tile(b, cfg["wo"]).reshape(1, -1).astype(jnp.float32))
        elif l == 4:                     # bias + Sigmoid
            ops.append(b.reshape(1, 1).astype(jnp.float32))
        else:                            # BatchNorm layer (conv bias dropped)
            fold = jnp.asarray(_fold_mat(cfg["wo"], cfg["cout"]))
            ops.append(fold)                                      # (wo*c, c)
            ops.append(fold.T)                                    # (c, wo*c)
            ops.append(gamma.reshape(1, -1).astype(jnp.float32))  # (1, c)
            ops.append(beta.reshape(1, -1).astype(jnp.float32))   # (1, c)

    out_rows = n * layers[4]["ho"]
    out_cols = layers[4]["ncols"]        # == wo5 (C_out = 1)

    max_k1 = max(cfg["k1"] for cfg in layers)
    scratch_shapes = (
        [pltpu.VMEM((n * layers[l]["hp_stride"], layers[l]["k1"]), jnp.float32)
         for l in range(5)]                                        # a0..a4
        + [pltpu.VMEM((n * layers[0]["ho"], KSIZE * max_k1), jnp.bfloat16)])  # G

    grid_spec = pltpu.PrefetchScalarGridSpec(
        num_scalar_prefetch=0,
        grid=(1,),
        in_specs=[_full_block(a) for a in ops],
        out_specs=pl.BlockSpec((out_rows, out_cols), lambda i: (0, 0)),
        scratch_shapes=scratch_shapes,
    )

    out = pl.pallas_call(
        _make_kernel(n, layers),
        out_shape=jax.ShapeDtypeStruct((out_rows, out_cols), jnp.float32),
        grid_spec=grid_spec,
        compiler_params=pltpu.CompilerParams(
            dimension_semantics=("arbitrary",)),
    )(*ops)

    ho5, wo5 = layers[4]["ho"], layers[4]["wo"]
    return out.reshape(n, ho5, wo5, 1).transpose(0, 3, 1, 2)


# ---------------------------------------------------------------------------
# Reference, params, self-test.
# ---------------------------------------------------------------------------
def init_params(key, channels_img, features_d):
    """Deterministic synthetic parameters matching the module's layer shapes."""
    layer_io = [
        (channels_img,   features_d),
        (features_d,     features_d * 2),
        (features_d * 2, features_d * 4),
        (features_d * 4, features_d * 8),
        (features_d * 8, 1),
    ]
    params = []
    for cin, cout in layer_io:
        key, kw, kb, kg, ke = jax.random.split(key, 5)
        wt = 0.05 * jax.random.normal(kw, (cout, cin, KSIZE, KSIZE), jnp.float32)
        b = 0.01 * jax.random.normal(kb, (cout,), jnp.float32)
        gamma = 1.0 + 0.05 * jax.random.normal(kg, (cout,), jnp.float32)
        beta = 0.05 * jax.random.normal(ke, (cout,), jnp.float32)
        params.append((wt, b, gamma, beta))
    return params


def reference_forward(x, params):
    """Pure-JAX/XLA reference matching the PyTorch module (train-mode BN)."""
    y = x.astype(jnp.float32)
    for l, (wt, b, gamma, beta) in enumerate(params):
        y = jax.lax.conv_general_dilated(
            y, wt, window_strides=(STRIDE, STRIDE),
            padding=((PAD, PAD), (PAD, PAD)),
            dimension_numbers=("NCHW", "OIHW", "NCHW"),
            precision=jax.lax.Precision.HIGHEST)
        y = y + b.reshape(1, -1, 1, 1)
        if l in (1, 2, 3):
            mean = jnp.mean(y, axis=(0, 2, 3), keepdims=True)
            var = jnp.mean(jnp.square(y - mean), axis=(0, 2, 3), keepdims=True)
            y = (y - mean) * jax.lax.rsqrt(var + BN_EPS)
            y = y * gamma.reshape(1, -1, 1, 1) + beta.reshape(1, -1, 1, 1)
        if l < 4:
            y = jnp.where(y >= 0.0, y, LRELU_SLOPE * y)
        else:
            y = jax.nn.sigmoid(y)
    return y


if __name__ == "__main__":
    channels_img, features_d = 4, 8
    key = jax.random.PRNGKey(0)
    kx, kp = jax.random.split(key)
    # 32x32 input -> 16 -> 8 -> 4 -> 2 -> 1 spatial (module needs >= 32).
    x = jax.random.normal(kx, (2, channels_img, 32, 32), jnp.float32)
    params = init_params(kp, channels_img, features_d)

    y = jax.jit(discriminator_forward)(x, params)
    jax.block_until_ready(y)
    assert y.shape == (2, 1, 1, 1), y.shape
    assert bool(jnp.all(jnp.isfinite(y)))
    assert bool(jnp.all((y >= 0.0) & (y <= 1.0)))   # sigmoid output range

    # bf16 conv GEMMs -> loose absolute tolerance vs the f32 reference.
    y_ref = reference_forward(x, params)
    err = float(jnp.max(jnp.abs(y - y_ref)))
    assert err < 5e-2, f"max abs diff vs reference: {err}"
    print("KERNEL_OK")
</pallas_src>

<mosaic_0001>
module attributes {stable_mosaic.version = 11 : i64} {
  func.func @kernel(%arg0: i32, %arg1: memref<64x128xf32, #tpu.memory_space<vmem>>, %arg2: memref<512x128xbf16, #tpu.memory_space<vmem>>, %arg3: memref<1x128xf32, #tpu.memory_space<vmem>>, %arg4: memref<512x128xbf16, #tpu.memory_space<vmem>>, %arg5: memref<128x16xf32, #tpu.memory_space<vmem>>, %arg6: memref<16x128xf32, #tpu.memory_space<vmem>>, %arg7: memref<1x16xf32, #tpu.memory_space<vmem>>, %arg8: memref<1x16xf32, #tpu.memory_space<vmem>>, %arg9: memref<512x128xbf16, #tpu.memory_space<vmem>>, %arg10: memref<128x32xf32, #tpu.memory_space<vmem>>, %arg11: memref<32x128xf32, #tpu.memory_space<vmem>>, %arg12: memref<1x32xf32, #tpu.memory_space<vmem>>, %arg13: memref<1x32xf32, #tpu.memory_space<vmem>>, %arg14: memref<512x128xbf16, #tpu.memory_space<vmem>>, %arg15: memref<128x64xf32, #tpu.memory_space<vmem>>, %arg16: memref<64x128xf32, #tpu.memory_space<vmem>>, %arg17: memref<1x64xf32, #tpu.memory_space<vmem>>, %arg18: memref<1x64xf32, #tpu.memory_space<vmem>>, %arg19: memref<512x1xbf16, #tpu.memory_space<vmem>>, %arg20: memref<1x1xf32, #tpu.memory_space<vmem>>, %arg21: memref<2x1xf32, #tpu.memory_space<vmem>>, %arg22: memref<80x128xf32, #tpu.memory_space<vmem>>, %arg23: memref<48x128xf32, #tpu.memory_space<vmem>>, %arg24: memref<32x128xf32, #tpu.memory_space<vmem>>, %arg25: memref<16x128xf32, #tpu.memory_space<vmem>>, %arg26: memref<16x128xf32, #tpu.memory_space<vmem>>, %arg27: memref<32x512xbf16, #tpu.memory_space<vmem>>) attributes {dimension_semantics = [#tpu.dimension_semantics<arbitrary>], iteration_bounds = array<i64: 1>, scalar_prefetch = 0 : i64, scratch_operands = 6 : i64, tpu.core_type = #tpu.core_type<tc>, window_params = [{pipeline_mode = #tpu.pipeline_mode<synchronous>, transform_indices = @transform_0, window_bounds = array<i64: 64, 128>}, {pipeline_mode = #tpu.pipeline_mode<synchronous>, transform_indices = @transform_1, window_bounds = array<i64: 512, 128>}, {pipeline_mode = #tpu.pipeline_mode<synchronous>, transform_indices = @transform_2, window_bounds = array<i64: 1, 128>}, {pipeline_mode = #tpu.pipeline_mode<synchronous>, transform_indices = @transform_3, window_bounds = array<i64: 512, 128>}, {pipeline_mode = #tpu.pipeline_mode<synchronous>, transform_indices = @transform_4, window_bounds = array<i64: 128, 16>}, {pipeline_mode = #tpu.pipeline_mode<synchronous>, transform_indices = @transform_5, window_bounds = array<i64: 16, 128>}, {pipeline_mode = #tpu.pipeline_mode<synchronous>, transform_indices = @transform_6, window_bounds = array<i64: 1, 16>}, {pipeline_mode = #tpu.pipeline_mode<synchronous>, transform_indices = @transform_7, window_bounds = array<i64: 1, 16>}, {pipeline_mode = #tpu.pipeline_mode<synchronous>, transform_indices = @transform_8, window_bounds = array<i64: 512, 128>}, {pipeline_mode = #tpu.pipeline_mode<synchronous>, transform_indices = @transform_9, window_bounds = array<i64: 128, 32>}, {pipeline_mode = #tpu.pipeline_mode<synchronous>, transform_indices = @transform_10, window_bounds = array<i64: 32, 128>}, {pipeline_mode = #tpu.pipeline_mode<synchronous>, transform_indices = @transform_11, window_bounds = array<i64: 1, 32>}, {pipeline_mode = #tpu.pipeline_mode<synchronous>, transform_indices = @transform_12, window_bounds = array<i64: 1, 32>}, {pipeline_mode = #tpu.pipeline_mode<synchronous>, transform_indices = @transform_13, window_bounds = array<i64: 512, 128>}, {pipeline_mode = #tpu.pipeline_mode<synchronous>, transform_indices = @transform_14, window_bounds = array<i64: 128, 64>}, {pipeline_mode = #tpu.pipeline_mode<synchronous>, transform_indices = @transform_15, window_bounds = array<i64: 64, 128>}, {pipeline_mode = #tpu.pipeline_mode<synchronous>, transform_indices = @transform_16, window_bounds = array<i64: 1, 64>}, {pipeline_mode = #tpu.pipeline_mode<synchronous>, transform_indices = @transform_17, window_bounds = array<i64: 1, 64>}, {pipeline_mode = #tpu.pipeline_mode<synchronous>, transform_indices = @transform_18, window_bounds = array<i64: 512, 1>}, {pipeline_mode = #tpu.pipeline_mode<synchronous>, transform_indices = @transform_19, window_bounds = array<i64: 1, 1>}, {pipeline_mode = #tpu.pipeline_mode<synchronous>, transform_indices = @transform_20, window_bounds = array<i64: 2, 1>}]} {
    %cst = arith.constant 0.000000e+00 : f32
    %0 = vector.broadcast %cst : f32 to vector<1x128xf32>
    %c0 = arith.constant 0 : index
    %c0_0 = arith.constant 0 : index
    %1 = vector.load %arg22[%c0, %c0_0] : memref<80x128xf32, #tpu.memory_space<vmem>>, vector<1x128xf32>
    tpu.vector_store %arg22[%c0, %c0_0], %0 {strides = array<i32>} : memref<80x128xf32, #tpu.memory_space<vmem>>, vector<1x128xf32>,
    %c33 = arith.constant 33 : index
    %c0_1 = arith.constant 0 : index
    %2 = vector.load %arg22[%c33, %c0_1] : memref<80x128xf32, #tpu.memory_space<vmem>>, vector<1x128xf32>
    tpu.vector_store %arg22[%c33, %c0_1], %0 {strides = array<i32>} : memref<80x128xf32, #tpu.memory_space<vmem>>, vector<1x128xf32>,
    %c0_2 = arith.constant 0 : index
    %c0_3 = arith.constant 0 : index
    %3 = vector.load %arg1[%c0_2, %c0_3] : memref<64x128xf32, #tpu.memory_space<vmem>>, vector<32x128xf32>
    %c1 = arith.constant 1 : index
    %c0_4 = arith.constant 0 : index
    %4 = vector.load %arg22[%c1, %c0_4] : memref<80x128xf32, #tpu.memory_space<vmem>>, vector<32x128xf32>
    tpu.vector_store %arg22[%c1, %c0_4], %3 {strides = array<i32>} : memref<80x128xf32, #tpu.memory_space<vmem>>, vector<32x128xf32>,
    %c40 = arith.constant 40 : index
    %c0_5 = arith.constant 0 : index
    %5 = vector.load %arg22[%c40, %c0_5] : memref<80x128xf32, #tpu.memory_space<vmem>>, vector<1x128xf32>
    tpu.vector_store %arg22[%c40, %c0_5], %0 {strides = array<i32>} : memref<80x128xf32, #tpu.memory_space<vmem>>, vector<1x128xf32>,
    %c73 = arith.constant 73 : index
    %c0_6 = arith.constant 0 : index
    %6 = vector.load %arg22[%c73, %c0_6] : memref<80x128xf32, #tpu.memory_space<vmem>>, vector<1x128xf32>
    tpu.vector_store %arg22[%c73, %c0_6], %0 {strides = array<i32>} : memref<80x128xf32, #tpu.memory_space<vmem>>, vector<1x128xf32>,
    %c32 = arith.constant 32 : index
    %c0_7 = arith.constant 0 : index
    %7 = vector.load %arg1[%c32, %c0_7] : memref<64x128xf32, #tpu.memory_space<vmem>>, vector<32x128xf32>
    %c41 = arith.constant 41 : index
    %c0_8 = arith.constant 0 : index
    %8 = vector.load %arg22[%c41, %c0_8] : memref<80x128xf32, #tpu.memory_space<vmem>>, vector<32x128xf32>
    tpu.vector_store %arg22[%c41, %c0_8], %7 {strides = array<i32>} : memref<80x128xf32, #tpu.memory_space<vmem>>, vector<32x128xf32>,
    %c0_9 = arith.constant 0 : index
    %c0_10 = arith.constant 0 : index
    %9 = tpu.strided_load %arg22[%c0_9, %c0_10] {strides = array<i32: 2, 1>} : memref<80x128xf32, #tpu.memory_space<vmem>>, vector<16x128xf32>
    %10 = arith.truncf %9 : vector<16x128xf32> to vector<16x128xbf16>
    %c0_11 = arith.constant 0 : index
    %c0_12 = arith.constant 0 : index
    %11 = vector.load %arg27[%c0_11, %c0_12] : memref<32x512xbf16, #tpu.memory_space<vmem>>, vector<16x128xbf16>
    tpu.vector_store %arg27[%c0_11, %c0_12], %10 {strides = array<i32>} : memref<32x512xbf16, #tpu.memory_space<vmem>>, vector<16x128xbf16>,
    %c1_13 = arith.constant 1 : index
    %c0_14 = arith.constant 0 : index
    %12 = tpu.strided_load %arg22[%c1_13, %c0_14] {strides = array<i32: 2, 1>} : memref<80x128xf32, #tpu.memory_space<vmem>>, vector<16x128xf32>
    %13 = arith.truncf %12 : vector<16x128xf32> to vector<16x128xbf16>
    %c0_15 = arith.constant 0 : index
    %c128 = arith.constant 128 : index
    %14 = vector.load %arg27[%c0_15, %c128] : memref<32x512xbf16, #tpu.memory_space<vmem>>, vector<16x128xbf16>
    tpu.vector_store %arg27[%c0_15, %c128], %13 {strides = array<i32>} : memref<32x512xbf16, #tpu.memory_space<vmem>>, vector<16x128xbf16>,
    %c2 = arith.constant 2 : index
    %c0_16 = arith.constant 0 : index
    %15 = tpu.strided_load %arg22[%c2, %c0_16] {strides = array<i32: 2, 1>} : memref<80x128xf32, #tpu.memory_space<vmem>>, vector<16x128xf32>
    %16 = arith.truncf %15 : vector<16x128xf32> to vector<16x128xbf16>
    %c0_17 = arith.constant 0 : index
    %c256 = arith.constant 256 : index
    %17 = vector.load %arg27[%c0_17, %c256] : memref<32x512xbf16, #tpu.memory_space<vmem>>, vector<16x128xbf16>
    tpu.vector_store %arg27[%c0_17, %c256], %16 {strides = array<i32>} : memref<32x512xbf16, #tpu.memory_space<vmem>>, vector<16x128xbf16>,
    %c3 = arith.constant 3 : index
    %c0_18 = arith.constant 0 : index
    %18 = tpu.strided_load %arg22[%c3, %c0_18] {strides = array<i32: 2, 1>} : memref<80x128xf32, #tpu.memory_space<vmem>>, vector<16x128xf32>
    %19 = arith.truncf %18 : vector<16x128xf32> to vector<16x128xbf16>
    %c0_19 = arith.constant 0 : index
    %c384 = arith.constant 384 : index
    %20 = vector.load %arg27[%c0_19, %c384] : memref<32x512xbf16, #tpu.memory_space<vmem>>, vector<16x128xbf16>
    tpu.vector_store %arg27[%c0_19, %c384], %19 {strides = array<i32>} : memref<32x512xbf16, #tpu.memory_space<vmem>>, vector<16x128xbf16>,
    %c40_20 = arith.constant 40 : index
    %c0_21 = arith.constant 0 : index
    %21 = tpu.strided_load %arg22[%c40_20, %c0_21] {strides = array<i32: 2, 1>} : memref<80x128xf32, #tpu.memory_space<vmem>>, vector<16x128xf32>
    %22 = arith.truncf %21 : vector<16x128xf32> to vector<16x128xbf16>
    %c16 = arith.constant 16 : index
    %c0_22 = arith.constant 0 : index
    %23 = vector.load %arg27[%c16, %c0_22] : memref<32x512xbf16, #tpu.memory_space<vmem>>, vector<16x128xbf16>
    tpu.vector_store %arg27[%c16, %c0_22], %22 {strides = array<i32>} : memref<32x512xbf16, #tpu.memory_space<vmem>>, vector<16x128xbf16>,
    %c41_23 = arith.constant 41 : index
    %c0_24 = arith.constant 0 : index
    %24 = tpu.strided_load %arg22[%c41_23, %c0_24] {strides = array<i32: 2, 1>} : memref<80x128xf32, #tpu.memory_space<vmem>>, vector<16x128xf32>
    %25 = arith.truncf %24 : vector<16x128xf32> to vector<16x128xbf16>
    %c16_25 = arith.constant 16 : index
    %c128_26 = arith.constant 128 : index
    %26 = vector.load %arg27[%c16_25, %c128_26] : memref<32x512xbf16, #tpu.memory_space<vmem>>, vector<16x128xbf16>
    tpu.vector_store %arg27[%c16_25, %c128_26], %25 {strides = array<i32>} : memref<32x512xbf16, #tpu.memory_space<vmem>>, vector<16x128xbf16>,
    %c42 = arith.constant 42 : index
    %c0_27 = arith.constant 0 : index
    %27 = tpu.strided_load %arg22[%c42, %c0_27] {strides = array<i32: 2, 1>} : memref<80x128xf32, #tpu.memory_space<vmem>>, vector<16x128xf32>
    %28 = arith.truncf %27 : vector<16x128xf32> to vector<16x128xbf16>
    %c16_28 = arith.constant 16 : index
    %c256_29 = arith.constant 256 : index
    %29 = vector.load %arg27[%c16_28, %c256_29] : memref<32x512xbf16, #tpu.memory_space<vmem>>, vector<16x128xbf16>
    tpu.vector_store %arg27[%c16_28, %c256_29], %28 {strides = array<i32>} : memref<32x512xbf16, #tpu.memory_space<vmem>>, vector<16x128xbf16>,
    %c43 = arith.constant 43 : index
    %c0_30 = arith.constant 0 : index
    %30 = tpu.strided_load %arg22[%c43, %c0_30] {strides = array<i32: 2, 1>} : memref<80x128xf32, #tpu.memory_space<vmem>>, vector<16x128xf32>
    %31 = arith.truncf %30 : vector<16x128xf32> to vector<16x128xbf16>
    %c16_31 = arith.constant 16 : index
    %c384_32 = arith.constant 384 : index
    %32 = vector.load %arg27[%c16_31, %c384_32] : memref<32x512xbf16, #tpu.memory_space<vmem>>, vector<16x128xbf16>
    tpu.vector_store %arg27[%c16_31, %c384_32], %31 {strides = array<i32>} : memref<32x512xbf16, #tpu.memory_space<vmem>>, vector<16x128xbf16>,
    %c0_33 = arith.constant 0 : index
    %c0_34 = arith.constant 0 : index
    %33 = vector.load %arg27[%c0_33, %c0_34] : memref<32x512xbf16, #tpu.memory_space<vmem>>, vector<32x512xbf16>
    %c0_35 = arith.constant 0 : index
    %c0_36 = arith.constant 0 : index
    %34 = vector.load %arg2[%c0_35, %c0_36] : memref<512x128xbf16, #tpu.memory_space<vmem>>, vector<512x128xbf16>
    %cst_37 = arith.constant dense<0.000000e+00> : vector<32x128xf32>
    %35 = tpu.matmul %33, %34, %cst_37 {dimension_numbers = #tpu.dot_dimension_numbers<[1], [0], [0], [1], [0, 0, 1, 1], [], []>} : vector<32x512xbf16>, vector<512x128xbf16>, vector<32x128xf32> -> vector<32x128xf32>
    %c0_38 = arith.constant 0 : index
    %c0_39 = arith.constant 0 : index
    %36 = vector.load %arg3[%c0_38, %c0_39] : memref<1x128xf32, #tpu.memory_space<vmem>>, vector<1x128xf32>
    %37 = vector.broadcast %36 : vector<1x128xf32> to vector<32x128xf32>
    %38 = arith.addf %35, %37 : vector<32x128xf32>
    %cst_40 = arith.constant 0.000000e+00 : f32
    %39 = vector.broadcast %cst_40 : f32 to vector<32x128xf32>
    %40 = arith.cmpf oge, %38, %39 : vector<32x128xf32>
    %cst_41 = arith.constant 2.000000e-01 : f32
    %41 = vector.broadcast %cst_41 : f32 to vector<32x128xf32>
    %42 = arith.mulf %41, %38 : vector<32x128xf32>
    %43 = arith.select %40, %38, %42 : vector<32x128xi1>, vector<32x128xf32>
    %cst_42 = arith.constant 0.000000e+00 : f32
    %44 = vector.broadcast %cst_42 : f32 to vector<1x128xf32>
    %c0_43 = arith.constant 0 : index
    %c0_44 = arith.constant 0 : index
    %45 = vector.load %arg23[%c0_43, %c0_44] : memref<48x128xf32, #tpu.memory_space<vmem>>, vector<1x128xf32>
    tpu.vector_store %arg23[%c0_43, %c0_44], %44 {strides = array<i32>} : memref<48x128xf32, #tpu.memory_space<vmem>>, vector<1x128xf32>,
    %c17 = arith.constant 17 : index
    %c0_45 = arith.constant 0 : index
    %46 = vector.load %arg23[%c17, %c0_45] : memref<48x128xf32, #tpu.memory_space<vmem>>, vector<1x128xf32>
    tpu.vector_store %arg23[%c17, %c0_45], %44 {strides = array<i32>} : memref<48x128xf32, #tpu.memory_space<vmem>>, vector<1x128xf32>,
    %47 = vector.extract_strided_slice %43 {offsets = [0, 0], sizes = [16, 128], strides = [1, 1]} : vector<32x128xf32> to vector<16x128xf32>
    %c1_46 = arith.constant 1 : index
    %c0_47 = arith.constant 0 : index
    %48 = vector.load %arg23[%c1_46, %c0_47] : memref<48x128xf32, #tpu.memory_space<vmem>>, vector<16x128xf32>
    tpu.vector_store %arg23[%c1_46, %c0_47], %47 {strides = array<i32>} : memref<48x128xf32, #tpu.memory_space<vmem>>, vector<16x128xf32>,
    %c24 = arith.constant 24 : index
    %c0_48 = arith.constant 0 : index
    %49 = vector.load %arg23[%c24, %c0_48] : memref<48x128xf32, #tpu.memory_space<vmem>>, vector<1x128xf32>
    tpu.vector_store %arg23[%c24, %c0_48], %44 {strides = array<i32>} : memref<48x128xf32, #tpu.memory_space<vmem>>, vector<1x128xf32>,
    %c41_49 = arith.constant 41 : index
    %c0_50 = arith.constant 0 : index
    %50 = vector.load %arg23[%c41_49, %c0_50] : memref<48x128xf32, #tpu.memory_space<vmem>>, vector<1x128xf32>
    tpu.vector_store %arg23[%c41_49, %c0_50], %44 {strides = array<i32>} : memref<48x128xf32, #tpu.memory_space<vmem>>, vector<1x128xf32>,
    %51 = vector.extract_strided_slice %43 {offsets = [16, 0], sizes = [16, 128], strides = [1, 1]} : vector<32x128xf32> to vector<16x128xf32>
    %c25 = arith.constant 25 : index
    %c0_51 = arith.constant 0 : index
    %52 = vector.load %arg23[%c25, %c0_51] : memref<48x128xf32, #tpu.memory_space<vmem>>, vector<16x128xf32>
    tpu.vector_store %arg23[%c25, %c0_51], %51 {strides = array<i32>} : memref<48x128xf32, #tpu.memory_space<vmem>>, vector<16x128xf32>,
    %c0_52 = arith.constant 0 : index
    %c0_53 = arith.constant 0 : index
    %53 = tpu.strided_load %arg23[%c0_52, %c0_53] {strides = array<i32: 2, 1>} : memref<48x128xf32, #tpu.memory_space<vmem>>, vector<8x128xf32>
    %54 = arith.truncf %53 : vector<8x128xf32> to vector<8x128xbf16>
    %c0_54 = arith.constant 0 : index
    %c0_55 = arith.constant 0 : index
    %55 = vector.load %arg27[%c0_54, %c0_55] : memref<32x512xbf16, #tpu.memory_space<vmem>>, vector<8x128xbf16>
    tpu.vector_store %arg27[%c0_54, %c0_55], %54 {strides = array<i32>} : memref<32x512xbf16, #tpu.memory_space<vmem>>, vector<8x128xbf16>,
    %c1_56 = arith.constant 1 : index
    %c0_57 = arith.constant 0 : index
    %56 = tpu.strided_load %arg23[%c1_56, %c0_57] {strides = array<i32: 2, 1>} : memref<48x128xf32, #tpu.memory_space<vmem>>, vector<8x128xf32>
    %57 = arith.truncf %56 : vector<8x128xf32> to vector<8x128xbf16>
    %c0_58 = arith.constant 0 : index
    %c128_59 = arith.constant 128 : index
    %58 = vector.load %arg27[%c0_58, %c128_59] : memref<32x512xbf16, #tpu.memory_space<vmem>>, vector<8x128xbf16>
    tpu.vector_store %arg27[%c0_58, %c128_59], %57 {strides = array<i32>} : memref<32x512xbf16, #tpu.memory_space<vmem>>, vector<8x128xbf16>,
    %c2_60 = arith.constant 2 : index
    %c0_61 = arith.constant 0 : index
    %59 = tpu.strided_load %arg23[%c2_60, %c0_61] {strides = array<i32: 2, 1>} : memref<48x128xf32, #tpu.memory_space<vmem>>, vector<8x128xf32>
    %60 = arith.truncf %59 : vector<8x128xf32> to vector<8x128xbf16>
    %c0_62 = arith.constant 0 : index
    %c256_63 = arith.constant 256 : index
    %61 = vector.load %arg27[%c0_62, %c256_63] : memref<32x512xbf16, #tpu.memory_space<vmem>>, vector<8x128xbf16>
    tpu.vector_store %arg27[%c0_62, %c256_63], %60 {strides = array<i32>} : memref<32x512xbf16, #tpu.memory_space<vmem>>, vector<8x128xbf16>,
    %c3_64 = arith.constant 3 : index
    %c0_65 = arith.constant 0 : index
    %62 = tpu.strided_load %arg23[%c3_64, %c0_65] {strides = array<i32: 2, 1>} : memref<48x128xf32, #tpu.memory_space<vmem>>, vector<8x128xf32>
    %63 = arith.truncf %62 : vector<8x128xf32> to vector<8x128xbf16>
    %c0_66 = arith.constant 0 : index
    %c384_67 = arith.constant 384 : index
    %64 = vector.load %arg27[%c0_66, %c384_67] : memref<32x512xbf16, #tpu.memory_space<vmem>>, vector<8x128xbf16>
    tpu.vector_store %arg27[%c0_66, %c384_67], %63 {strides = array<i32>} : memref<32x512xbf16, #tpu.memory_space<vmem>>, vector<8x128xbf16>,
    %c24_68 = arith.constant 24 : index
    %c0_69 = arith.constant 0 : index
    %65 = tpu.strided_load %arg23[%c24_68, %c0_69] {strides = array<i32: 2, 1>} : memref<48x128xf32, #tpu.memory_space<vmem>>, vector<8x128xf32>
    %66 = arith.truncf %65 : vector<8x128xf32> to vector<8x128xbf16>
    %c8 = arith.constant 8 : index
    %c0_70 = arith.constant 0 : index
    %67 = vector.load %arg27[%c8, %c0_70] : memref<32x512xbf16, #tpu.memory_space<vmem>>, vector<8x128xbf16>
    tpu.vector_store %arg27[%c8, %c0_70], %66 {strides = array<i32>} : memref<32x512xbf16, #tpu.memory_space<vmem>>, vector<8x128xbf16>,
    %c25_71 = arith.constant 25 : index
    %c0_72 = arith.constant 0 : index
    %68 = tpu.strided_load %arg23[%c25_71, %c0_72] {strides = array<i32: 2, 1>} : memref<48x128xf32, #tpu.memory_space<vmem>>, vector<8x128xf32>
    %69 = arith.truncf %68 : vector<8x128xf32> to vector<8x128xbf16>
    %c8_73 = arith.constant 8 : index
    %c128_74 = arith.constant 128 : index
    %70 = vector.load %arg27[%c8_73, %c128_74] : memref<32x512xbf16, #tpu.memory_space<vmem>>, vector<8x128xbf16>
    tpu.vector_store %arg27[%c8_73, %c128_74], %69 {strides = array<i32>} : memref<32x512xbf16, #tpu.memory_space<vmem>>, vector<8x128xbf16>,
    %c26 = arith.constant 26 : index
    %c0_75 = arith.constant 0 : index
    %71 = tpu.strided_load %arg23[%c26, %c0_75] {strides = array<i32: 2, 1>} : memref<48x128xf32, #tpu.memory_space<vmem>>, vector<8x128xf32>
    %72 = arith.truncf %71 : vector<8x128xf32> to vector<8x128xbf16>
    %c8_76 = arith.constant 8 : index
    %c256_77 = arith.constant 256 : index
    %73 = vector.load %arg27[%c8_76, %c256_77] : memref<32x512xbf16, #tpu.memory_space<vmem>>, vector<8x128xbf16>
    tpu.vector_store %arg27[%c8_76, %c256_77], %72 {strides = array<i32>} : memref<32x512xbf16, #tpu.memory_space<vmem>>, vector<8x128xbf16>,
    %c27 = arith.constant 27 : index
    %c0_78 = arith.constant 0 : index
    %74 = tpu.strided_load %arg23[%c27, %c0_78] {strides = array<i32: 2, 1>} : memref<48x128xf32, #tpu.memory_space<vmem>>, vector<8x128xf32>
    %75 = arith.truncf %74 : vector<8x128xf32> to vector<8x128xbf16>
    %c8_79 = arith.constant 8 : index
    %c384_80 = arith.constant 384 : index
    %76 = vector.load %arg27[%c8_79, %c384_80] : memref<32x512xbf16, #tpu.memory_space<vmem>>, vector<8x128xbf16>
    tpu.vector_store %arg27[%c8_79, %c384_80], %75 {strides = array<i32>} : memref<32x512xbf16, #tpu.memory_space<vmem>>, vector<8x128xbf16>,
    %c0_81 = arith.constant 0 : index
    %c0_82 = arith.constant 0 : index
    %77 = vector.load %arg27[%c0_81, %c0_82] : memref<32x512xbf16, #tpu.memory_space<vmem>>, vector<16x512xbf16>
    %c0_83 = arith.constant 0 : index
    %c0_84 = arith.constant 0 : index
    %78 = vector.load %arg4[%c0_83, %c0_84] : memref<512x128xbf16, #tpu.memory_space<vmem>>, vector<512x128xbf16>
    %cst_85 = arith.constant dense<0.000000e+00> : vector<16x128xf32>
    %79 = tpu.matmul %77, %78, %cst_85 {dimension_numbers = #tpu.dot_dimension_numbers<[1], [0], [0], [1], [0, 0, 1, 1], [], []>} : vector<16x512xbf16>, vector<512x128xbf16>, vector<16x128xf32> -> vector<16x128xf32>
    %cst_86 = arith.constant dense<0.000000e+00> : vector<128xf32>
    %80 = vector.multi_reduction <add>, %79, %cst_86 [0] : vector<16x128xf32> to vector<128xf32>
    %81 = vector.shape_cast %80 : vector<128xf32> to vector<1x128xf32>
    %82 = arith.mulf %79, %79 : vector<16x128xf32>
    %cst_87 = arith.constant dense<0.000000e+00> : vector<128xf32>
    %83 = vector.multi_reduction <add>, %82, %cst_87 [0] : vector<16x128xf32> to vector<128xf32>
    %84 = vector.shape_cast %83 : vector<128xf32> to vector<1x128xf32>
    %85 = tpu.concatenate %81, %84 in 0 : vector<1x128xf32>, vector<1x128xf32> -> vector<2x128xf32>
    %c0_88 = arith.constant 0 : index
    %c0_89 = arith.constant 0 : index
    %86 = vector.load %arg5[%c0_88, %c0_89] : memref<128x16xf32, #tpu.memory_space<vmem>>, vector<128x16xf32>
    %cst_90 = arith.constant dense<0.000000e+00> : vector<2x16xf32>
    %87 = tpu.matmul %85, %86, %cst_90 {dimension_numbers = #tpu.dot_dimension_numbers<[1], [0], [0], [1], [0, 0, 1, 1], [], []>} : vector<2x128xf32>, vector<128x16xf32>, vector<2x16xf32> -> vector<2x16xf32>
    %cst_91 = arith.constant 7.812500e-03 : f32
    %88 = vector.broadcast %cst_91 : f32 to vector<2x16xf32>
    %89 = arith.mulf %87, %88 : vector<2x16xf32>
    %90 = vector.extract_strided_slice %89 {offsets = [0, 0], sizes = [1, 16], strides = [1, 1]} : vector<2x16xf32> to vector<1x16xf32>
    %91 = vector.extract_strided_slice %89 {offsets = [1, 0], sizes = [1, 16], strides = [1, 1]} : vector<2x16xf32> to vector<1x16xf32>
    %92 = arith.mulf %90, %90 : vector<1x16xf32>
    %93 = arith.subf %91, %92 : vector<1x16xf32>
    %cst_92 = arith.constant 0.000000e+00 : f32
    %94 = vector.broadcast %cst_92 : f32 to vector<1x16xf32>
    %95 = arith.maximumf %93, %94 : vector<1x16xf32>
    %cst_93 = arith.constant 9.99999974E-6 : f32
    %96 = vector.broadcast %cst_93 : f32 to vector<1x16xf32>
    %97 = arith.addf %95, %96 : vector<1x16xf32>
    %98 = math.rsqrt %97 : vector<1x16xf32>
    %c0_94 = arith.constant 0 : index
    %c0_95 = arith.constant 0 : index
    %99 = vector.load %arg7[%c0_94, %c0_95] : memref<1x16xf32, #tpu.memory_space<vmem>>, vector<1x16xf32>
    %100 = arith.mulf %99, %98 : vector<1x16xf32>
    %c0_96 = arith.constant 0 : index
    %c0_97 = arith.constant 0 : index
    %101 = vector.load %arg8[%c0_96, %c0_97] : memref<1x16xf32, #tpu.memory_space<vmem>>, vector<1x16xf32>
    %102 = arith.mulf %90, %100 : vector<1x16xf32>
    %103 = arith.subf %101, %102 : vector<1x16xf32>
    %104 = tpu.concatenate %100, %103 in 0 : vector<1x16xf32>, vector<1x16xf32> -> vector<2x16xf32>
    %c0_98 = arith.constant 0 : index
    %c0_99 = arith.constant 0 : index
    %105 = vector.load %arg6[%c0_98, %c0_99] : memref<16x128xf32, #tpu.memory_space<vmem>>, vector<16x128xf32>
    %cst_100 = arith.constant dense<0.000000e+00> : vector<2x128xf32>
    %106 = tpu.matmul %104, %105, %cst_100 {dimension_numbers = #tpu.dot_dimension_numbers<[1], [0], [0], [1], [0, 0, 1, 1], [], []>} : vector<2x16xf32>, vector<16x128xf32>, vector<2x128xf32> -> vector<2x128xf32>
    %107 = vector.extract_strided_slice %106 {offsets = [0, 0], sizes = [1, 128], strides = [1, 1]} : vector<2x128xf32> to vector<1x128xf32>
    %108 = vector.broadcast %107 : vector<1x128xf32> to vector<16x128xf32>
    %109 = arith.mulf %79, %108 : vector<16x128xf32>
    %110 = vector.extract_strided_slice %106 {offsets = [1, 0], sizes = [1, 128], strides = [1, 1]} : vector<2x128xf32> to vector<1x128xf32>
    %111 = vector.broadcast %110 : vector<1x128xf32> to vector<16x128xf32>
    %112 = arith.addf %109, %111 : vector<16x128xf32>
    %cst_101 = arith.constant 0.000000e+00 : f32
    %113 = vector.broadcast %cst_101 : f32 to vector<16x128xf32>
    %114 = arith.cmpf oge, %112, %113 : vector<16x128xf32>
    %cst_102 = arith.constant 2.000000e-01 : f32
    %115 = vector.broadcast %cst_102 : f32 to vector<16x128xf32>
    %116 = arith.mulf %115, %112 : vector<16x128xf32>
    %117 = arith.select %114, %112, %116 : vector<16x128xi1>, vector<16x128xf32>
    %cst_103 = arith.constant 0.000000e+00 : f32
    %118 = vector.broadcast %cst_103 : f32 to vector<1x128xf32>
    %c0_104 = arith.constant 0 : index
    %c0_105 = arith.constant 0 : index
    %119 = vector.load %arg24[%c0_104, %c0_105] : memref<32x128xf32, #tpu.memory_space<vmem>>, vector<1x128xf32>
    tpu.vector_store %arg24[%c0_104, %c0_105], %118 {strides = array<i32>} : memref<32x128xf32, #tpu.memory_space<vmem>>, vector<1x128xf32>,
    %c9 = arith.constant 9 : index
    %c0_106 = arith.constant 0 : index
    %120 = vector.load %arg24[%c9, %c0_106] : memref<32x128xf32, #tpu.memory_space<vmem>>, vector<1x128xf32>
    tpu.vector_store %arg24[%c9, %c0_106], %118 {strides = array<i32>} : memref<32x128xf32, #tpu.memory_space<vmem>>, vector<1x128xf32>,
    %121 = vector.extract_strided_slice %117 {offsets = [0, 0], sizes = [8, 128], strides = [1, 1]} : vector<16x128xf32> to vector<8x128xf32>
    %c1_107 = arith.constant 1 : index
    %c0_108 = arith.constant 0 : index
    %122 = vector.load %arg24[%c1_107, %c0_108] : memref<32x128xf32, #tpu.memory_space<vmem>>, vector<8x128xf32>
    tpu.vector_store %arg24[%c1_107, %c0_108], %121 {strides = array<i32>} : memref<32x128xf32, #tpu.memory_space<vmem>>, vector<8x128xf32>,
    %c16_109 = arith.constant 16 : index
    %c0_110 = arith.constant 0 : index
    %123 = vector.load %arg24[%c16_109, %c0_110] : memref<32x128xf32, #tpu.memory_space<vmem>>, vector<1x128xf32>
    tpu.vector_store %arg24[%c16_109, %c0_110], %118 {strides = array<i32>} : memref<32x128xf32, #tpu.memory_space<vmem>>, vector<1x128xf32>,
    %c25_111 = arith.constant 25 : index
    %c0_112 = arith.constant 0 : index
    %124 = vector.load %arg24[%c25_111, %c0_112] : memref<32x128xf32, #tpu.memory_space<vmem>>, vector<1x128xf32>
    tpu.vector_store %arg24[%c25_111, %c0_112], %118 {strides = array<i32>} : memref<32x128xf32, #tpu.memory_space<vmem>>, vector<1x128xf32>,
    %125 = vector.extract_strided_slice %117 {offsets = [8, 0], sizes = [8, 128], strides = [1, 1]} : vector<16x128xf32> to vector<8x128xf32>
    %c17_113 = arith.constant 17 : index
    %c0_114 = arith.constant 0 : index
    %126 = vector.load %arg24[%c17_113, %c0_114] : memref<32x128xf32, #tpu.memory_space<vmem>>, vector<8x128xf32>
    tpu.vector_store %arg24[%c17_113, %c0_114], %125 {strides = array<i32>} : memref<32x128xf32, #tpu.memory_space<vmem>>, vector<8x128xf32>,
    %c0_115 = arith.constant 0 : index
    %c0_116 = arith.constant 0 : index
    %127 = tpu.strided_load %arg24[%c0_115, %c0_116] {strides = array<i32: 2, 1>} : memref<32x128xf32, #tpu.memory_space<vmem>>, vector<4x128xf32>
    %128 = arith.truncf %127 : vector<4x128xf32> to vector<4x128xbf16>
    %c0_117 = arith.constant 0 : index
    %c0_118 = arith.constant 0 : index
    %129 = vector.load %arg27[%c0_117, %c0_118] : memref<32x512xbf16, #tpu.memory_space<vmem>>, vector<4x128xbf16>
    tpu.vector_store %arg27[%c0_117, %c0_118], %128 {strides = array<i32>} : memref<32x512xbf16, #tpu.memory_space<vmem>>, vector<4x128xbf16>,
    %c1_119 = arith.constant 1 : index
    %c0_120 = arith.constant 0 : index
    %130 = tpu.strided_load %arg24[%c1_119, %c0_120] {strides = array<i32: 2, 1>} : memref<32x128xf32, #tpu.memory_space<vmem>>, vector<4x128xf32>
    %131 = arith.truncf %130 : vector<4x128xf32> to vector<4x128xbf16>
    %c0_121 = arith.constant 0 : index
    %c128_122 = arith.constant 128 : index
    %132 = vector.load %arg27[%c0_121, %c128_122] : memref<32x512xbf16, #tpu.memory_space<vmem>>, vector<4x128xbf16>
    tpu.vector_store %arg27[%c0_121, %c128_122], %131 {strides = array<i32>} : memref<32x512xbf16, #tpu.memory_space<vmem>>, vector<4x128xbf16>,
    %c2_123 = arith.constant 2 : index
    %c0_124 = arith.constant 0 : index
    %133 = tpu.strided_load %arg24[%c2_123, %c0_124] {strides = array<i32: 2, 1>} : memref<32x128xf32, #tpu.memory_space<vmem>>, vector<4x128xf32>
    %134 = arith.truncf %133 : vector<4x128xf32> to vector<4x128xbf16>
    %c0_125 = arith.constant 0 : index
    %c256_126 = arith.constant 256 : index
    %135 = vector.load %arg27[%c0_125, %c256_126] : memref<32x512xbf16, #tpu.memory_space<vmem>>, vector<4x128xbf16>
    tpu.vector_store %arg27[%c0_125, %c256_126], %134 {strides = array<i32>} : memref<32x512xbf16, #tpu.memory_space<vmem>>, vector<4x128xbf16>,
    %c3_127 = arith.constant 3 : index
    %c0_128 = arith.constant 0 : index
    %136 = tpu.strided_load %arg24[%c3_127, %c0_128] {strides = array<i32: 2, 1>} : memref<32x128xf32, #tpu.memory_space<vmem>>, vector<4x128xf32>
    %137 = arith.truncf %136 : vector<4x128xf32> to vector<4x128xbf16>
    %c0_129 = arith.constant 0 : index
    %c384_130 = arith.constant 384 : index
    %138 = vector.load %arg27[%c0_129, %c384_130] : memref<32x512xbf16, #tpu.memory_space<vmem>>, vector<4x128xbf16>
    tpu.vector_store %arg27[%c0_129, %c384_130], %137 {strides = array<i32>} : memref<32x512xbf16, #tpu.memory_space<vmem>>, vector<4x128xbf16>,
    %c16_131 = arith.constant 16 : index
    %c0_132 = arith.constant 0 : index
    %139 = tpu.strided_load %arg24[%c16_131, %c0_132] {strides = array<i32: 2, 1>} : memref<32x128xf32, #tpu.memory_space<vmem>>, vector<4x128xf32>
    %140 = arith.truncf %139 : vector<4x128xf32> to vector<4x128xbf16>
    %c4 = arith.constant 4 : index
    %c0_133 = arith.constant 0 : index
    %141 = vector.load %arg27[%c4, %c0_133] : memref<32x512xbf16, #tpu.memory_space<vmem>>, vector<4x128xbf16>
    tpu.vector_store %arg27[%c4, %c0_133], %140 {strides = array<i32>} : memref<32x512xbf16, #tpu.memory_space<vmem>>, vector<4x128xbf16>,
    %c17_134 = arith.constant 17 : index
    %c0_135 = arith.constant 0 : index
    %142 = tpu.strided_load %arg24[%c17_134, %c0_135] {strides = array<i32: 2, 1>} : memref<32x128xf32, #tpu.memory_space<vmem>>, vector<4x128xf32>
    %143 = arith.truncf %142 : vector<4x128xf32> to vector<4x128xbf16>
    %c4_136 = arith.constant 4 : index
    %c128_137 = arith.constant 128 : index
    %144 = vector.load %arg27[%c4_136, %c128_137] : memref<32x512xbf16, #tpu.memory_space<vmem>>, vector<4x128xbf16>
    tpu.vector_store %arg27[%c4_136, %c128_137], %143 {strides = array<i32>} : memref<32x512xbf16, #tpu.memory_space<vmem>>, vector<4x128xbf16>,
    %c18 = arith.constant 18 : index
    %c0_138 = arith.constant 0 : index
    %145 = tpu.strided_load %arg24[%c18, %c0_138] {strides = array<i32: 2, 1>} : memref<32x128xf32, #tpu.memory_space<vmem>>, vector<4x128xf32>
    %146 = arith.truncf %145 : vector<4x128xf32> to vector<4x128xbf16>
    %c4_139 = arith.constant 4 : index
    %c256_140 = arith.constant 256 : index
    %147 = vector.load %arg27[%c4_139, %c256_140] : memref<32x512xbf16, #tpu.memory_space<vmem>>, vector<4x128xbf16>
    tpu.vector_store %arg27[%c4_139, %c256_140], %146 {strides = array<i32>} : memref<32x512xbf16, #tpu.memory_space<vmem>>, vector<4x128xbf16>,
    %c19 = arith.constant 19 : index
    %c0_141 = arith.constant 0 : index
    %148 = tpu.strided_load %arg24[%c19, %c0_141] {strides = array<i32: 2, 1>} : memref<32x128xf32, #tpu.memory_space<vmem>>, vector<4x128xf32>
    %149 = arith.truncf %148 : vector<4x128xf32> to vector<4x128xbf16>
    %c4_142 = arith.constant 4 : index
    %c384_143 = arith.constant 384 : index
    %150 = vector.load %arg27[%c4_142, %c384_143] : memref<32x512xbf16, #tpu.memory_space<vmem>>, vector<4x128xbf16>
    tpu.vector_store %arg27[%c4_142, %c384_143], %149 {strides = array<i32>} : memref<32x512xbf16, #tpu.memory_space<vmem>>, vector<4x128xbf16>,
    %c0_144 = arith.constant 0 : index
    %c0_145 = arith.constant 0 : index
    %151 = vector.load %arg27[%c0_144, %c0_145] : memref<32x512xbf16, #tpu.memory_space<vmem>>, vector<8x512xbf16>
    %c0_146 = arith.constant 0 : index
    %c0_147 = arith.constant 0 : index
    %152 = vector.load %arg9[%c0_146, %c0_147] : memref<512x128xbf16, #tpu.memory_space<vmem>>, vector<512x128xbf16>
    %cst_148 = arith.constant dense<0.000000e+00> : vector<8x128xf32>
    %153 = tpu.matmul %151, %152, %cst_148 {dimension_numbers = #tpu.dot_dimension_numbers<[1], [0], [0], [1], [0, 0, 1, 1], [], []>} : vector<8x512xbf16>, vector<512x128xbf16>, vector<8x128xf32> -> vector<8x128xf32>
    %cst_149 = arith.constant dense<0.000000e+00> : vector<128xf32>
    %154 = vector.multi_reduction <add>, %153, %cst_149 [0] : vector<8x128xf32> to vector<128xf32>
    %155 = vector.shape_cast %154 : vector<128xf32> to vector<1x128xf32>
    %156 = arith.mulf %153, %153 : vector<8x128xf32>
    %cst_150 = arith.constant dense<0.000000e+00> : vector<128xf32>
    %157 = vector.multi_reduction <add>, %156, %cst_150 [0] : vector<8x128xf32> to vector<128xf32>
    %158 = vector.shape_cast %157 : vector<128xf32> to vector<1x128xf32>
    %159 = tpu.concatenate %155, %158 in 0 : vector<1x128xf32>, vector<1x128xf32> -> vector<2x128xf32>
    %c0_151 = arith.constant 0 : index
    %c0_152 = arith.constant 0 : index
    %160 = vector.load %arg10[%c0_151, %c0_152] : memref<128x32xf32, #tpu.memory_space<vmem>>, vector<128x32xf32>
    %cst_153 = arith.constant dense<0.000000e+00> : vector<2x32xf32>
    %161 = tpu.matmul %159, %160, %cst_153 {dimension_numbers = #tpu.dot_dimension_numbers<[1], [0], [0], [1], [0, 0, 1, 1], [], []>} : vector<2x128xf32>, vector<128x32xf32>, vector<2x32xf32> -> vector<2x32xf32>
    %cst_154 = arith.constant 3.125000e-02 : f32
    %162 = vector.broadcast %cst_154 : f32 to vector<2x32xf32>
    %163 = arith.mulf %161, %162 : vector<2x32xf32>
    %164 = vector.extract_strided_slice %163 {offsets = [0, 0], sizes = [1, 32], strides = [1, 1]} : vector<2x32xf32> to vector<1x32xf32>
    %165 = vector.extract_strided_slice %163 {offsets = [1, 0], sizes = [1, 32], strides = [1, 1]} : vector<2x32xf32> to vector<1x32xf32>
    %166 = arith.mulf %164, %164 : vector<1x32xf32>
    %167 = arith.subf %165, %166 : vector<1x32xf32>
    %cst_155 = arith.constant 0.000000e+00 : f32
    %168 = vector.broadcast %cst_155 : f32 to vector<1x32xf32>
    %169 = arith.maximumf %167, %168 : vector<1x32xf32>
    %cst_156 = arith.constant 9.99999974E-6 : f32
    %170 = vector.broadcast %cst_156 : f32 to vector<1x32xf32>
    %171 = arith.addf %169, %170 : vector<1x32xf32>
    %172 = math.rsqrt %171 : vector<1x32xf32>
    %c0_157 = arith.constant 0 : index
    %c0_158 = arith.constant 0 : index
    %173 = vector.load %arg12[%c0_157, %c0_158] : memref<1x32xf32, #tpu.memory_space<vmem>>, vector<1x32xf32>
    %174 = arith.mulf %173, %172 : vector<1x32xf32>
    %c0_159 = arith.constant 0 : index
    %c0_160 = arith.constant 0 : index
    %175 = vector.load %arg13[%c0_159, %c0_160] : memref<1x32xf32, #tpu.memory_space<vmem>>, vector<1x32xf32>
    %176 = arith.mulf %164, %174 : vector<1x32xf32>
    %177 = arith.subf %175, %176 : vector<1x32xf32>
    %178 = tpu.concatenate %174, %177 in 0 : vector<1x32xf32>, vector<1x32xf32> -> vector<2x32xf32>
    %c0_161 = arith.constant 0 : index
    %c0_162 = arith.constant 0 : index
    %179 = vector.load %arg11[%c0_161, %c0_162] : memref<32x128xf32, #tpu.memory_space<vmem>>, vector<32x128xf32>
    %cst_163 = arith.constant dense<0.000000e+00> : vector<2x128xf32>
    %180 = tpu.matmul %178, %179, %cst_163 {dimension_numbers = #tpu.dot_dimension_numbers<[1], [0], [0], [1], [0, 0, 1, 1], [], []>} : vector<2x32xf32>, vector<32x128xf32>, vector<2x128xf32> -> vector<2x128xf32>
    %181 = vector.extract_strided_slice %180 {offsets = [0, 0], sizes = [1, 128], strides = [1, 1]} : vector<2x128xf32> to vector<1x128xf32>
    %182 = vector.broadcast %181 : vector<1x128xf32> to vector<8x128xf32>
    %183 = arith.mulf %153, %182 : vector<8x128xf32>
    %184 = vector.extract_strided_slice %180 {offsets = [1, 0], sizes = [1, 128], strides = [1, 1]} : vector<2x128xf32> to vector<1x128xf32>
    %185 = vector.broadcast %184 : vector<1x128xf32> to vector<8x128xf32>
    %186 = arith.addf %183, %185 : vector<8x128xf32>
    %cst_164 = arith.constant 0.000000e+00 : f32
    %187 = vector.broadcast %cst_164 : f32 to vector<8x128xf32>
    %188 = arith.cmpf oge, %186, %187 : vector<8x128xf32>
    %cst_165 = arith.constant 2.000000e-01 : f32
    %189 = vector.broadcast %cst_165 : f32 to vector<8x128xf32>
    %190 = arith.mulf %189, %186 : vector<8x128xf32>
    %191 = arith.select %188, %186, %190 : vector<8x128xi1>, vector<8x128xf32>
    %cst_166 = arith.constant 0.000000e+00 : f32
    %192 = vector.broadcast %cst_166 : f32 to vector<1x128xf32>
    %c0_167 = arith.constant 0 : index
    %c0_168 = arith.constant 0 : index
    %193 = vector.load %arg25[%c0_167, %c0_168] : memref<16x128xf32, #tpu.memory_space<vmem>>, vector<1x128xf32>
    tpu.vector_store %arg25[%c0_167, %c0_168], %192 {strides = array<i32>} : memref<16x128xf32, #tpu.memory_space<vmem>>, vector<1x128xf32>,
    %c5 = arith.constant 5 : index
    %c0_169 = arith.constant 0 : index
    %194 = vector.load %arg25[%c5, %c0_169] : memref<16x128xf32, #tpu.memory_space<vmem>>, vector<1x128xf32>
    tpu.vector_store %arg25[%c5, %c0_169], %192 {strides = array<i32>} : memref<16x128xf32, #tpu.memory_space<vmem>>, vector<1x128xf32>,
    %195 = vector.extract_strided_slice %191 {offsets = [0, 0], sizes = [4, 128], strides = [1, 1]} : vector<8x128xf32> to vector<4x128xf32>
    %c1_170 = arith.constant 1 : index
    %c0_171 = arith.constant 0 : index
    %196 = vector.load %arg25[%c1_170, %c0_171] : memref<16x128xf32, #tpu.memory_space<vmem>>, vector<4x128xf32>
    tpu.vector_store %arg25[%c1_170, %c0_171], %195 {strides = array<i32>} : memref<16x128xf32, #tpu.memory_space<vmem>>, vector<4x128xf32>,
    %c8_172 = arith.constant 8 : index
    %c0_173 = arith.constant 0 : index
    %197 = vector.load %arg25[%c8_172, %c0_173] : memref<16x128xf32, #tpu.memory_space<vmem>>, vector<1x128xf32>
    tpu.vector_store %arg25[%c8_172, %c0_173], %192 {strides = array<i32>} : memref<16x128xf32, #tpu.memory_space<vmem>>, vector<1x128xf32>,
    %c13 = arith.constant 13 : index
    %c0_174 = arith.constant 0 : index
    %198 = vector.load %arg25[%c13, %c0_174] : memref<16x128xf32, #tpu.memory_space<vmem>>, vector<1x128xf32>
    tpu.vector_store %arg25[%c13, %c0_174], %192 {strides = array<i32>} : memref<16x128xf32, #tpu.memory_space<vmem>>, vector<1x128xf32>,
    %199 = vector.extract_strided_slice %191 {offsets = [4, 0], sizes = [4, 128], strides = [1, 1]} : vector<8x128xf32> to vector<4x128xf32>
    %c9_175 = arith.constant 9 : index
    %c0_176 = arith.constant 0 : index
    %200 = vector.load %arg25[%c9_175, %c0_176] : memref<16x128xf32, #tpu.memory_space<vmem>>, vector<4x128xf32>
    tpu.vector_store %arg25[%c9_175, %c0_176], %199 {strides = array<i32>} : memref<16x128xf32, #tpu.memory_space<vmem>>, vector<4x128xf32>,
    %c0_177 = arith.constant 0 : index
    %c0_178 = arith.constant 0 : index
    %201 = tpu.strided_load %arg25[%c0_177, %c0_178] {strides = array<i32: 2, 1>} : memref<16x128xf32, #tpu.memory_space<vmem>>, vector<2x128xf32>
    %202 = arith.truncf %201 : vector<2x128xf32> to vector<2x128xbf16>
    %c0_179 = arith.constant 0 : index
    %c0_180 = arith.constant 0 : index
    %203 = vector.load %arg27[%c0_179, %c0_180] : memref<32x512xbf16, #tpu.memory_space<vmem>>, vector<2x128xbf16>
    tpu.vector_store %arg27[%c0_179, %c0_180], %202 {strides = array<i32>} : memref<32x512xbf16, #tpu.memory_space<vmem>>, vector<2x128xbf16>,
    %c1_181 = arith.constant 1 : index
    %c0_182 = arith.constant 0 : index
    %204 = tpu.strided_load %arg25[%c1_181, %c0_182] {strides = array<i32: 2, 1>} : memref<16x128xf32, #tpu.memory_space<vmem>>, vector<2x128xf32>
    %205 = arith.truncf %204 : vector<2x128xf32> to vector<2x128xbf16>
    %c0_183 = arith.constant 0 : index
    %c128_184 = arith.constant 128 : index
    %206 = vector.load %arg27[%c0_183, %c128_184] : memref<32x512xbf16, #tpu.memory_space<vmem>>, vector<2x128xbf16>
    tpu.vector_store %arg27[%c0_183, %c128_184], %205 {strides = array<i32>} : memref<32x512xbf16, #tpu.memory_space<vmem>>, vector<2x128xbf16>,
    %c2_185 = arith.constant 2 : index
    %c0_186 = arith.constant 0 : index
    %207 = tpu.strided_load %arg25[%c2_185, %c0_186] {strides = array<i32: 2, 1>} : memref<16x128xf32, #tpu.memory_space<vmem>>, vector<2x128xf32>
    %208 = arith.truncf %207 : vector<2x128xf32> to vector<2x128xbf16>
    %c0_187 = arith.constant 0 : index
    %c256_188 = arith.constant 256 : index
    %209 = vector.load %arg27[%c0_187, %c256_188] : memref<32x512xbf16, #tpu.memory_space<vmem>>, vector<2x128xbf16>
    tpu.vector_store %arg27[%c0_187, %c256_188], %208 {strides = array<i32>} : memref<32x512xbf16, #tpu.memory_space<vmem>>, vector<2x128xbf16>,
    %c3_189 = arith.constant 3 : index
    %c0_190 = arith.constant 0 : index
    %210 = tpu.strided_load %arg25[%c3_189, %c0_190] {strides = array<i32: 2, 1>} : memref<16x128xf32, #tpu.memory_space<vmem>>, vector<2x128xf32>
    %211 = arith.truncf %210 : vector<2x128xf32> to vector<2x128xbf16>
    %c0_191 = arith.constant 0 : index
    %c384_192 = arith.constant 384 : index
    %212 = vector.load %arg27[%c0_191, %c384_192] : memref<32x512xbf16, #tpu.memory_space<vmem>>, vector<2x128xbf16>
    tpu.vector_store %arg27[%c0_191, %c384_192], %211 {strides = array<i32>} : memref<32x512xbf16, #tpu.memory_space<vmem>>, vector<2x128xbf16>,
    %c8_193 = arith.constant 8 : index
    %c0_194 = arith.constant 0 : index
    %213 = tpu.strided_load %arg25[%c8_193, %c0_194] {strides = array<i32: 2, 1>} : memref<16x128xf32, #tpu.memory_space<vmem>>, vector<2x128xf32>
    %214 = arith.truncf %213 : vector<2x128xf32> to vector<2x128xbf16>
    %c2_195 = arith.constant 2 : index
    %c0_196 = arith.constant 0 : index
    %215 = vector.load %arg27[%c2_195, %c0_196] : memref<32x512xbf16, #tpu.memory_space<vmem>>, vector<2x128xbf16>
    tpu.vector_store %arg27[%c2_195, %c0_196], %214 {strides = array<i32>} : memref<32x512xbf16, #tpu.memory_space<vmem>>, vector<2x128xbf16>,
    %c9_197 = arith.constant 9 : index
    %c0_198 = arith.constant 0 : index
    %216 = tpu.strided_load %arg25[%c9_197, %c0_198] {strides = array<i32: 2, 1>} : memref<16x128xf32, #tpu.memory_space<vmem>>, vector<2x128xf32>
    %217 = arith.truncf %216 : vector<2x128xf32> to vector<2x128xbf16>
    %c2_199 = arith.constant 2 : index
    %c128_200 = arith.constant 128 : index
    %218 = vector.load %arg27[%c2_199, %c128_200] : memref<32x512xbf16, #tpu.memory_space<vmem>>, vector<2x128xbf16>
    tpu.vector_store %arg27[%c2_199, %c128_200], %217 {strides = array<i32>} : memref<32x512xbf16, #tpu.memory_space<vmem>>, vector<2x128xbf16>,
    %c10 = arith.constant 10 : index
    %c0_201 = arith.constant 0 : index
    %219 = tpu.strided_load %arg25[%c10, %c0_201] {strides = array<i32: 2, 1>} : memref<16x128xf32, #tpu.memory_space<vmem>>, vector<2x128xf32>
    %220 = arith.truncf %219 : vector<2x128xf32> to vector<2x128xbf16>
    %c2_202 = arith.constant 2 : index
    %c256_203 = arith.constant 256 : index
    %221 = vector.load %arg27[%c2_202, %c256_203] : memref<32x512xbf16, #tpu.memory_space<vmem>>, vector<2x128xbf16>
    tpu.vector_store %arg27[%c2_202, %c256_203], %220 {strides = array<i32>} : memref<32x512xbf16, #tpu.memory_space<vmem>>, vector<2x128xbf16>,
    %c11 = arith.constant 11 : index
    %c0_204 = arith.constant 0 : index
    %222 = tpu.strided_load %arg25[%c11, %c0_204] {strides = array<i32: 2, 1>} : memref<16x128xf32, #tpu.memory_space<vmem>>, vector<2x128xf32>
    %223 = arith.truncf %222 : vector<2x128xf32> to vector<2x128xbf16>
    %c2_205 = arith.constant 2 : index
    %c384_206 = arith.constant 384 : index
    %224 = vector.load %arg27[%c2_205, %c384_206] : memref<32x512xbf16, #tpu.memory_space<vmem>>, vector<2x128xbf16>
    tpu.vector_store %arg27[%c2_205, %c384_206], %223 {strides = array<i32>} : memref<32x512xbf16, #tpu.memory_space<vmem>>, vector<2x128xbf16>,
    %c0_207 = arith.constant 0 : index
    %c0_208 = arith.constant 0 : index
    %225 = vector.load %arg27[%c0_207, %c0_208] : memref<32x512xbf16, #tpu.memory_space<vmem>>, vector<4x512xbf16>
    %c0_209 = arith.constant 0 : index
    %c0_210 = arith.constant 0 : index
    %226 = vector.load %arg14[%c0_209, %c0_210] : memref<512x128xbf16, #tpu.memory_space<vmem>>, vector<512x128xbf16>
    %cst_211 = arith.constant dense<0.000000e+00> : vector<4x128xf32>
    %227 = tpu.matmul %225, %226, %cst_211 {dimension_numbers = #tpu.dot_dimension_numbers<[1], [0], [0], [1], [0, 0, 1, 1], [], []>} : vector<4x512xbf16>, vector<512x128xbf16>, vector<4x128xf32> -> vector<4x128xf32>
    %cst_212 = arith.constant dense<0.000000e+00> : vector<128xf32>
    %228 = vector.multi_reduction <add>, %227, %cst_212 [0] : vector<4x128xf32> to vector<128xf32>
    %229 = vector.shape_cast %228 : vector<128xf32> to vector<1x128xf32>
    %230 = arith.mulf %227, %227 : vector<4x128xf32>
    %cst_213 = arith.constant dense<0.000000e+00> : vector<128xf32>
    %231 = vector.multi_reduction <add>, %230, %cst_213 [0] : vector<4x128xf32> to vector<128xf32>
    %232 = vector.shape_cast %231 : vector<128xf32> to vector<1x128xf32>
    %233 = tpu.concatenate %229, %232 in 0 : vector<1x128xf32>, vector<1x128xf32> -> vector<2x128xf32>
    %c0_214 = arith.constant 0 : index
    %c0_215 = arith.constant 0 : index
    %234 = vector.load %arg15[%c0_214, %c0_215] : memref<128x64xf32, #tpu.memory_space<vmem>>, vector<128x64xf32>
    %cst_216 = arith.constant dense<0.000000e+00> : vector<2x64xf32>
    %235 = tpu.matmul %233, %234, %cst_216 {dimension_numbers = #tpu.dot_dimension_numbers<[1], [0], [0], [1], [0, 0, 1, 1], [], []>} : vector<2x128xf32>, vector<128x64xf32>, vector<2x64xf32> -> vector<2x64xf32>
    %cst_217 = arith.constant 1.250000e-01 : f32
    %236 = vector.broadcast %cst_217 : f32 to vector<2x64xf32>
    %237 = arith.mulf %235, %236 : vector<2x64xf32>
    %238 = vector.extract_strided_slice %237 {offsets = [0, 0], sizes = [1, 64], strides = [1, 1]} : vector<2x64xf32> to vector<1x64xf32>
    %239 = vector.extract_strided_slice %237 {offsets = [1, 0], sizes = [1, 64], strides = [1, 1]} : vector<2x64xf32> to vector<1x64xf32>
    %240 = arith.mulf %238, %238 : vector<1x64xf32>
    %241 = arith.subf %239, %240 : vector<1x64xf32>
    %cst_218 = arith.constant 0.000000e+00 : f32
    %242 = vector.broadcast %cst_218 : f32 to vector<1x64xf32>
    %243 = arith.maximumf %241, %242 : vector<1x64xf32>
    %cst_219 = arith.constant 9.99999974E-6 : f32
    %244 = vector.broadcast %cst_219 : f32 to vector<1x64xf32>
    %245 = arith.addf %243, %244 : vector<1x64xf32>
    %246 = math.rsqrt %245 : vector<1x64xf32>
    %c0_220 = arith.constant 0 : index
    %c0_221 = arith.constant 0 : index
    %247 = vector.load %arg17[%c0_220, %c0_221] : memref<1x64xf32, #tpu.memory_space<vmem>>, vector<1x64xf32>
    %248 = arith.mulf %247, %246 : vector<1x64xf32>
    %c0_222 = arith.constant 0 : index
    %c0_223 = arith.constant 0 : index
    %249 = vector.load %arg18[%c0_222, %c0_223] : memref<1x64xf32, #tpu.memory_space<vmem>>, vector<1x64xf32>
    %250 = arith.mulf %238, %248 : vector<1x64xf32>
    %251 = arith.subf %249, %250 : vector<1x64xf32>
    %252 = tpu.concatenate %248, %251 in 0 : vector<1x64xf32>, vector<1x64xf32> -> vector<2x64xf32>
    %c0_224 = arith.constant 0 : index
    %c0_225 = arith.constant 0 : index
    %253 = vector.load %arg16[%c0_224, %c0_225] : memref<64x128xf32, #tpu.memory_space<vmem>>, vector<64x128xf32>
    %cst_226 = arith.constant dense<0.000000e+00> : vector<2x128xf32>
    %254 = tpu.matmul %252, %253, %cst_226 {dimension_numbers = #tpu.dot_dimension_numbers<[1], [0], [0], [1], [0, 0, 1, 1], [], []>} : vector<2x64xf32>, vector<64x128xf32>, vector<2x128xf32> -> vector<2x128xf32>
    %255 = vector.extract_strided_slice %254 {offsets = [0, 0], sizes = [1, 128], strides = [1, 1]} : vector<2x128xf32> to vector<1x128xf32>
    %256 = vector.broadcast %255 : vector<1x128xf32> to vector<4x128xf32>
    %257 = arith.mulf %227, %256 : vector<4x128xf32>
    %258 = vector.extract_strided_slice %254 {offsets = [1, 0], sizes = [1, 128], strides = [1, 1]} : vector<2x128xf32> to vector<1x128xf32>
    %259 = vector.broadcast %258 : vector<1x128xf32> to vector<4x128xf32>
    %260 = arith.addf %257, %259 : vector<4x128xf32>
    %cst_227 = arith.constant 0.000000e+00 : f32
    %261 = vector.broadcast %cst_227 : f32 to vector<4x128xf32>
    %262 = arith.cmpf oge, %260, %261 : vector<4x128xf32>
    %cst_228 = arith.constant 2.000000e-01 : f32
    %263 = vector.broadcast %cst_228 : f32 to vector<4x128xf32>
    %264 = arith.mulf %263, %260 : vector<4x128xf32>
    %265 = arith.select %262, %260, %264 : vector<4x128xi1>, vector<4x128xf32>
    %cst_229 = arith.constant 0.000000e+00 : f32
    %266 = vector.broadcast %cst_229 : f32 to vector<1x128xf32>
    %c0_230 = arith.constant 0 : index
    %c0_231 = arith.constant 0 : index
    %267 = vector.load %arg26[%c0_230, %c0_231] : memref<16x128xf32, #tpu.memory_space<vmem>>, vector<1x128xf32>
    tpu.vector_store %arg26[%c0_230, %c0_231], %266 {strides = array<i32>} : memref<16x128xf32, #tpu.memory_space<vmem>>, vector<1x128xf32>,
    %c3_232 = arith.constant 3 : index
    %c0_233 = arith.constant 0 : index
    %268 = vector.load %arg26[%c3_232, %c0_233] : memref<16x128xf32, #tpu.memory_space<vmem>>, vector<1x128xf32>
    tpu.vector_store %arg26[%c3_232, %c0_233], %266 {strides = array<i32>} : memref<16x128xf32, #tpu.memory_space<vmem>>, vector<1x128xf32>,
    %269 = vector.extract_strided_slice %265 {offsets = [0, 0], sizes = [2, 128], strides = [1, 1]} : vector<4x128xf32> to vector<2x128xf32>
    %c1_234 = arith.constant 1 : index
    %c0_235 = arith.constant 0 : index
    %270 = vector.load %arg26[%c1_234, %c0_235] : memref<16x128xf32, #tpu.memory_space<vmem>>, vector<2x128xf32>
    tpu.vector_store %arg26[%c1_234, %c0_235], %269 {strides = array<i32>} : memref<16x128xf32, #tpu.memory_space<vmem>>, vector<2x128xf32>,
    %c8_236 = arith.constant 8 : index
    %c0_237 = arith.constant 0 : index
    %271 = vector.load %arg26[%c8_236, %c0_237] : memref<16x128xf32, #tpu.memory_space<vmem>>, vector<1x128xf32>
    tpu.vector_store %arg26[%c8_236, %c0_237], %266 {strides = array<i32>} : memref<16x128xf32, #tpu.memory_space<vmem>>, vector<1x128xf32>,
    %c11_238 = arith.constant 11 : index
    %c0_239 = arith.constant 0 : index
    %272 = vector.load %arg26[%c11_238, %c0_239] : memref<16x128xf32, #tpu.memory_space<vmem>>, vector<1x128xf32>
    tpu.vector_store %arg26[%c11_238, %c0_239], %266 {strides = array<i32>} : memref<16x128xf32, #tpu.memory_space<vmem>>, vector<1x128xf32>,
    %273 = vector.extract_strided_slice %265 {offsets = [2, 0], sizes = [2, 128], strides = [1, 1]} : vector<4x128xf32> to vector<2x128xf32>
    %c9_240 = arith.constant 9 : index
    %c0_241 = arith.constant 0 : index
    %274 = vector.load %arg26[%c9_240, %c0_241] : memref<16x128xf32, #tpu.memory_space<vmem>>, vector<2x128xf32>
    tpu.vector_store %arg26[%c9_240, %c0_241], %273 {strides = array<i32>} : memref<16x128xf32, #tpu.memory_space<vmem>>, vector<2x128xf32>,
    %c0_242 = arith.constant 0 : index
    %c0_243 = arith.constant 0 : index
    %275 = tpu.strided_load %arg26[%c0_242, %c0_243] {strides = array<i32: 2, 1>} : memref<16x128xf32, #tpu.memory_space<vmem>>, vector<1x128xf32>
    %276 = arith.truncf %275 : vector<1x128xf32> to vector<1x128xbf16>
    %c0_244 = arith.constant 0 : index
    %c0_245 = arith.constant 0 : index
    %277 = vector.load %arg27[%c0_244, %c0_245] : memref<32x512xbf16, #tpu.memory_space<vmem>>, vector<1x128xbf16>
    tpu.vector_store %arg27[%c0_244, %c0_245], %276 {strides = array<i32>} : memref<32x512xbf16, #tpu.memory_space<vmem>>, vector<1x128xbf16>,
    %c1_246 = arith.constant 1 : index
    %c0_247 = arith.constant 0 : index
    %278 = tpu.strided_load %arg26[%c1_246, %c0_247] {strides = array<i32: 2, 1>} : memref<16x128xf32, #tpu.memory_space<vmem>>, vector<1x128xf32>
    %279 = arith.truncf %278 : vector<1x128xf32> to vector<1x128xbf16>
    %c0_248 = arith.constant 0 : index
    %c128_249 = arith.constant 128 : index
    %280 = vector.load %arg27[%c0_248, %c128_249] : memref<32x512xbf16, #tpu.memory_space<vmem>>, vector<1x128xbf16>
    tpu.vector_store %arg27[%c0_248, %c128_249], %279 {strides = array<i32>} : memref<32x512xbf16, #tpu.memory_space<vmem>>, vector<1x128xbf16>,
    %c2_250 = arith.constant 2 : index
    %c0_251 = arith.constant 0 : index
    %281 = tpu.strided_load %arg26[%c2_250, %c0_251] {strides = array<i32: 2, 1>} : memref<16x128xf32, #tpu.memory_space<vmem>>, vector<1x128xf32>
    %282 = arith.truncf %281 : vector<1x128xf32> to vector<1x128xbf16>
    %c0_252 = arith.constant 0 : index
    %c256_253 = arith.constant 256 : index
    %283 = vector.load %arg27[%c0_252, %c256_253] : memref<32x512xbf16, #tpu.memory_space<vmem>>, vector<1x128xbf16>
    tpu.vector_store %arg27[%c0_252, %c256_253], %282 {strides = array<i32>} : memref<32x512xbf16, #tpu.memory_space<vmem>>, vector<1x128xbf16>,
    %c3_254 = arith.constant 3 : index
    %c0_255 = arith.constant 0 : index
    %284 = tpu.strided_load %arg26[%c3_254, %c0_255] {strides = array<i32: 2, 1>} : memref<16x128xf32, #tpu.memory_space<vmem>>, vector<1x128xf32>
    %285 = arith.truncf %284 : vector<1x128xf32> to vector<1x128xbf16>
    %c0_256 = arith.constant 0 : index
    %c384_257 = arith.constant 384 : index
    %286 = vector.load %arg27[%c0_256, %c384_257] : memref<32x512xbf16, #tpu.memory_space<vmem>>, vector<1x128xbf16>
    tpu.vector_store %arg27[%c0_256, %c384_257], %285 {strides = array<i32>} : memref<32x512xbf16, #tpu.memory_space<vmem>>, vector<1x128xbf16>,
    %c8_258 = arith.constant 8 : index
    %c0_259 = arith.constant 0 : index
    %287 = tpu.strided_load %arg26[%c8_258, %c0_259] {strides = array<i32: 2, 1>} : memref<16x128xf32, #tpu.memory_space<vmem>>, vector<1x128xf32>
    %288 = arith.truncf %287 : vector<1x128xf32> to vector<1x128xbf16>
    %c1_260 = arith.constant 1 : index
    %c0_261 = arith.constant 0 : index
    %289 = vector.load %arg27[%c1_260, %c0_261] : memref<32x512xbf16, #tpu.memory_space<vmem>>, vector<1x128xbf16>
    tpu.vector_store %arg27[%c1_260, %c0_261], %288 {strides = array<i32>} : memref<32x512xbf16, #tpu.memory_space<vmem>>, vector<1x128xbf16>,
    %c9_262 = arith.constant 9 : index
    %c0_263 = arith.constant 0 : index
    %290 = tpu.strided_load %arg26[%c9_262, %c0_263] {strides = array<i32: 2, 1>} : memref<16x128xf32, #tpu.memory_space<vmem>>, vector<1x128xf32>
    %291 = arith.truncf %290 : vector<1x128xf32> to vector<1x128xbf16>
    %c1_264 = arith.constant 1 : index
    %c128_265 = arith.constant 128 : index
    %292 = vector.load %arg27[%c1_264, %c128_265] : memref<32x512xbf16, #tpu.memory_space<vmem>>, vector<1x128xbf16>
    tpu.vector_store %arg27[%c1_264, %c128_265], %291 {strides = array<i32>} : memref<32x512xbf16, #tpu.memory_space<vmem>>, vector<1x128xbf16>,
    %c10_266 = arith.constant 10 : index
    %c0_267 = arith.constant 0 : index
    %293 = tpu.strided_load %arg26[%c10_266, %c0_267] {strides = array<i32: 2, 1>} : memref<16x128xf32, #tpu.memory_space<vmem>>, vector<1x128xf32>
    %294 = arith.truncf %293 : vector<1x128xf32> to vector<1x128xbf16>
    %c1_268 = arith.constant 1 : index
    %c256_269 = arith.constant 256 : index
    %295 = vector.load %arg27[%c1_268, %c256_269] : memref<32x512xbf16, #tpu.memory_space<vmem>>, vector<1x128xbf16>
    tpu.vector_store %arg27[%c1_268, %c256_269], %294 {strides = array<i32>} : memref<32x512xbf16, #tpu.memory_space<vmem>>, vector<1x128xbf16>,
    %c11_270 = arith.constant 11 : index
    %c0_271 = arith.constant 0 : index
    %296 = tpu.strided_load %arg26[%c11_270, %c0_271] {strides = array<i32: 2, 1>} : memref<16x128xf32, #tpu.memory_space<vmem>>, vector<1x128xf32>
    %297 = arith.truncf %296 : vector<1x128xf32> to vector<1x128xbf16>
    %c1_272 = arith.constant 1 : index
    %c384_273 = arith.constant 384 : index
    %298 = vector.load %arg27[%c1_272, %c384_273] : memref<32x512xbf16, #tpu.memory_space<vmem>>, vector<1x128xbf16>
    tpu.vector_store %arg27[%c1_272, %c384_273], %297 {strides = array<i32>} : memref<32x512xbf16, #tpu.memory_space<vmem>>, vector<1x128xbf16>,
    %c0_274 = arith.constant 0 : index
    %c0_275 = arith.constant 0 : index
    %299 = vector.load %arg27[%c0_274, %c0_275] : memref<32x512xbf16, #tpu.memory_space<vmem>>, vector<2x512xbf16>
    %c0_276 = arith.constant 0 : index
    %c0_277 = arith.constant 0 : index
    %300 = vector.load %arg19[%c0_276, %c0_277] : memref<512x1xbf16, #tpu.memory_space<vmem>>, vector<512x1xbf16>
    %cst_278 = arith.constant dense<0.000000e+00> : vector<2x1xf32>
    %301 = tpu.matmul %299, %300, %cst_278 {dimension_numbers = #tpu.dot_dimension_numbers<[1], [0], [0], [1], [0, 0, 1, 1], [], []>} : vector<2x512xbf16>, vector<512x1xbf16>, vector<2x1xf32> -> vector<2x1xf32>
    %c0_279 = arith.constant 0 : index
    %c0_280 = arith.constant 0 : index
    %302 = vector.load %arg20[%c0_279, %c0_280] : memref<1x1xf32, #tpu.memory_space<vmem>>, vector<1x1xf32>
    %303 = vector.broadcast %302 : vector<1x1xf32> to vector<2x1xf32>
    %304 = arith.addf %301, %303 : vector<2x1xf32>
    %cst_281 = arith.constant 0.000000e+00 : f32
    %305 = vector.broadcast %cst_281 : f32 to vector<2x1xf32>
    %306 = arith.subf %305, %304 : vector<2x1xf32>
    %307 = math.exp %306 : vector<2x1xf32>
    %cst_282 = arith.constant 1.000000e+00 : f32
    %308 = vector.broadcast %cst_282 : f32 to vector<2x1xf32>
    %309 = arith.addf %308, %307 : vector<2x1xf32>
    %cst_283 = arith.constant 1.000000e+00 : f32
    %310 = vector.broadcast %cst_283 : f32 to vector<2x1xf32>
    %311 = arith.divf %310, %309 : vector<2x1xf32>
    %c0_284 = arith.constant 0 : index
    %c0_285 = arith.constant 0 : index
    %312 = vector.load %arg21[%c0_284, %c0_285] : memref<2x1xf32, #tpu.memory_space<vmem>>, vector<2x1xf32>
    tpu.vector_store %arg21[%c0_284, %c0_285], %311 {strides = array<i32>} : memref<2x1xf32, #tpu.memory_space<vmem>>, vector<2x1xf32>,
    return
  }
  func.func @transform_0(%arg0: i32) -> (i32, i32) {
    %c0_i32 = arith.constant 0 : i32
    %c0_i32_0 = arith.constant 0 : i32
    %c0_i32_1 = arith.constant 0 : i32
    return %c0_i32, %c0_i32_0 : i32, i32
  }
  func.func @transform_1(%arg0: i32) -> (i32, i32) {
    %c0_i32 = arith.constant 0 : i32
    %c0_i32_0 = arith.constant 0 : i32
    %c0_i32_1 = arith.constant 0 : i32
    return %c0_i32, %c0_i32_0 : i32, i32
  }
  func.func @transform_2(%arg0: i32) -> (i32, i32) {
    %c0_i32 = arith.constant 0 : i32
    %c0_i32_0 = arith.constant 0 : i32
    %c0_i32_1 = arith.constant 0 : i32
    return %c0_i32, %c0_i32_0 : i32, i32
  }
  func.func @transform_3(%arg0: i32) -> (i32, i32) {
    %c0_i32 = arith.constant 0 : i32
    %c0_i32_0 = arith.constant 0 : i32
    %c0_i32_1 = arith.constant 0 : i32
    return %c0_i32, %c0_i32_0 : i32, i32
  }
  func.func @transform_4(%arg0: i32) -> (i32, i32) {
    %c0_i32 = arith.constant 0 : i32
    %c0_i32_0 = arith.constant 0 : i32
    %c0_i32_1 = arith.constant 0 : i32
    return %c0_i32, %c0_i32_0 : i32, i32
  }
  func.func @transform_5(%arg0: i32) -> (i32, i32) {
    %c0_i32 = arith.constant 0 : i32
    %c0_i32_0 = arith.constant 0 : i32
    %c0_i32_1 = arith.constant 0 : i32
    return %c0_i32, %c0_i32_0 : i32, i32
  }
  func.func @transform_6(%arg0: i32) -> (i32, i32) {
    %c0_i32 = arith.constant 0 : i32
    %c0_i32_0 = arith.constant 0 : i32
    %c0_i32_1 = arith.constant 0 : i32
    return %c0_i32, %c0_i32_0 : i32, i32
  }
  func.func @transform_7(%arg0: i32) -> (i32, i32) {
    %c0_i32 = arith.constant 0 : i32
    %c0_i32_0 = arith.constant 0 : i32
    %c0_i32_1 = arith.constant 0 : i32
    return %c0_i32, %c0_i32_0 : i32, i32
  }
  func.func @transform_8(%arg0: i32) -> (i32, i32) {
    %c0_i32 = arith.constant 0 : i32
    %c0_i32_0 = arith.constant 0 : i32
    %c0_i32_1 = arith.constant 0 : i32
    return %c0_i32, %c0_i32_0 : i32, i32
  }
  func.func @transform_9(%arg0: i32) -> (i32, i32) {
    %c0_i32 = arith.constant 0 : i32
    %c0_i32_0 = arith.constant 0 : i32
    %c0_i32_1 = arith.constant 0 : i32
    return %c0_i32, %c0_i32_0 : i32, i32
  }
  func.func @transform_10(%arg0: i32) -> (i32, i32) {
    %c0_i32 = arith.constant 0 : i32
    %c0_i32_0 = arith.constant 0 : i32
    %c0_i32_1 = arith.constant 0 : i32
    return %c0_i32, %c0_i32_0 : i32, i32
  }
  func.func @transform_11(%arg0: i32) -> (i32, i32) {
    %c0_i32 = arith.constant 0 : i32
    %c0_i32_0 = arith.constant 0 : i32
    %c0_i32_1 = arith.constant 0 : i32
    return %c0_i32, %c0_i32_0 : i32, i32
  }
  func.func @transform_12(%arg0: i32) -> (i32, i32) {
    %c0_i32 = arith.constant 0 : i32
    %c0_i32_0 = arith.constant 0 : i32
    %c0_i32_1 = arith.constant 0 : i32
    return %c0_i32, %c0_i32_0 : i32, i32
  }
  func.func @transform_13(%arg0: i32) -> (i32, i32) {
    %c0_i32 = arith.constant 0 : i32
    %c0_i32_0 = arith.constant 0 : i32
    %c0_i32_1 = arith.constant 0 : i32
    return %c0_i32, %c0_i32_0 : i32, i32
  }
  func.func @transform_14(%arg0: i32) -> (i32, i32) {
    %c0_i32 = arith.constant 0 : i32
    %c0_i32_0 = arith.constant 0 : i32
    %c0_i32_1 = arith.constant 0 : i32
    return %c0_i32, %c0_i32_0 : i32, i32
  }
  func.func @transform_15(%arg0: i32) -> (i32, i32) {
    %c0_i32 = arith.constant 0 : i32
    %c0_i32_0 = arith.constant 0 : i32
    %c0_i32_1 = arith.constant 0 : i32
    return %c0_i32, %c0_i32_0 : i32, i32
  }
  func.func @transform_16(%arg0: i32) -> (i32, i32) {
    %c0_i32 = arith.constant 0 : i32
    %c0_i32_0 = arith.constant 0 : i32
    %c0_i32_1 = arith.constant 0 : i32
    return %c0_i32, %c0_i32_0 : i32, i32
  }
  func.func @transform_17(%arg0: i32) -> (i32, i32) {
    %c0_i32 = arith.constant 0 : i32
    %c0_i32_0 = arith.constant 0 : i32
    %c0_i32_1 = arith.constant 0 : i32
    return %c0_i32, %c0_i32_0 : i32, i32
  }
  func.func @transform_18(%arg0: i32) -> (i32, i32) {
    %c0_i32 = arith.constant 0 : i32
    %c0_i32_0 = arith.constant 0 : i32
    %c0_i32_1 = arith.constant 0 : i32
    return %c0_i32, %c0_i32_0 : i32, i32
  }
  func.func @transform_19(%arg0: i32) -> (i32, i32) {
    %c0_i32 = arith.constant 0 : i32
    %c0_i32_0 = arith.constant 0 : i32
    %c0_i32_1 = arith.constant 0 : i32
    return %c0_i32, %c0_i32_0 : i32, i32
  }
  func.func @transform_20(%arg0: i32) -> (i32, i32) {
    %c0_i32 = arith.constant 0 : i32
    %c0_i32_0 = arith.constant 0 : i32
    %c0_i32_1 = arith.constant 0 : i32
    return %c0_i32, %c0_i32_0 : i32, i32
  }
}

</mosaic_0001>

<llo_original>
// kernel: tile.8
$region0: #{tile.8}
  #allocation0 [shape = 's32[1]{0}', space=sflag, size = 0x4, scoped, tag = 'scoped memory for tile.8']
  %s0 = inlined_call_operand.vmem [shape: f32[8], index: 0, kind: input, shape index: {}]
  %s1 = inlined_call_operand.vmem [shape: f32[16,8], index: 1, kind: output, shape index: {}]
  // Predicated region
  $region2: #{tile.8} parent=0 // pred_check
    _
  $region3: #{tile.8} parent=0 // pred_check_branch
    %3 = sbr.rel (0) target = $region5
  $region4: #{tile.8} parent=0 // pred_region
    _
  $region5: #{tile.8} parent=0 // pred_fallthru
    _
  %v4 = vld [vmem:[%s0] ss:$0 sm:$0xff]
  %5 = vst [vmem:[%s1] sm:$0xff] %v4
  %s6 = scalar_lea.vmem %s1, 8
  %7 = vst [vmem:[%s6] sm:$0xff] %v4

// kernel: tile.9
$region0: #{tile.9}
  %s0 = inlined_call_operand.vmem [shape: f32[16,8], index: 0, kind: input, shape index: {}]
  %s1 = inlined_call_operand.vmem [shape: f32[1,128], index: 1, kind: output, shape index: {}]
  $region1: #{tile.9} parent=0
    #allocation0 [shape = 'u8[4096]{0}', space=vmem, size = 0x1000, scoped, tag = 'scoped mem for output reshape']
    %v2 = vld [vmem:[%s0] sm:$0x1]
    %vm3 = vcmask 64512
    %4 = vst.msk [vmem:[#allocation0] sm:$0x1] %vm3, %v2
    %s5 = scalar_lea.vmem %s0, 15
    %v6 = vld [vmem:[%s5] sm:$0x1]
    %7 = vrot.lane.b32.xlu0 %v6, 120
    %v8 = vpop.permute.xlu0 %7
    %vm9 = vcmask 1048512
    %10 = vst.msk [vmem:[#allocation0] sm:$0x1] %vm9, %v8
    %s11 = scalar_lea.vmem %s0, 14
    %v12 = vld [vmem:[%s11] sm:$0x1]
    %13 = vrot.lane.b32.xlu0 %v12, 112
    %v14 = vpop.permute.xlu0 %13
    %vm15 = vcmask 982912
    %16 = vst.msk [vmem:[#allocation0] sm:$0x1] %vm15, %v14
    %s17 = scalar_lea.vmem %s0, 13
    %v18 = vld [vmem:[%s17] sm:$0x1]
    %19 = vrot.lane.b32.xlu0 %v18, 104
    %v20 = vpop.permute.xlu0 %19
    %vm21 = vcmask 917312
    %22 = vst.msk [vmem:[#allocation0] sm:$0x1] %vm21, %v20
    %s23 = scalar_lea.vmem %s0, 12
    %v24 = vld [vmem:[%s23] sm:$0x1]
    %25 = vrot.lane.b32.xlu0 %v24, 96
    %v26 = vpop.permute.xlu0 %25
    %vm27 = vcmask 851712
    %28 = vst.msk [vmem:[#allocation0] sm:$0x1] %vm27, %v26
    %s29 = scalar_lea.vmem %s0, 11
    %v30 = vld [vmem:[%s29] sm:$0x1]
    %31 = vrot.lane.b32.xlu0 %v30, 88
    %v32 = vpop.permute.xlu0 %31
    %vm33 = vcmask 786112
    %34 = vst.msk [vmem:[#allocation0] sm:$0x1] %vm33, %v32
    %s35 = scalar_lea.vmem %s0, 10
    %v36 = vld [vmem:[%s35] sm:$0x1]
    %37 = vrot.lane.b32.xlu0 %v36, 80
    %v38 = vpop.permute.xlu0 %37
    %vm39 = vcmask 720512
    %40 = vst.msk [vmem:[#allocation0] sm:$0x1] %vm39, %v38
    %s41 = scalar_lea.vmem %s0, 9
    %v42 = vld [vmem:[%s41] sm:$0x1]
    %43 = vrot.lane.b32.xlu0 %v42, 72
    %v44 = vpop.permute.xlu0 %43
    %vm45 = vcmask 654912
    %46 = vst.msk [vmem:[#allocation0] sm:$0x1] %vm45, %v44
    %s47 = scalar_lea.vmem %s0, 8
    %v48 = vld [vmem:[%s47] sm:$0x1]
    %49 = vrot.lane.b32.xlu0 %v48, 64
    %v50 = vpop.permute.xlu0 %49
    %vm51 = vcmask 589312
    %52 = vst.msk [vmem:[#allocation0] sm:$0x1] %vm51, %v50
    %s53 = scalar_lea.vmem %s0, 7
    %v54 = vld [vmem:[%s53] sm:$0x1]
    %55 = vrot.lane.b32.xlu0 %v54, 56
    %v56 = vpop.permute.xlu0 %55
    %vm57 = vcmask 523712
    %58 = vst.msk [vmem:[#allocation0] sm:$0x1] %vm57, %v56
    %s59 = scalar_lea.vmem %s0, 6
    %v60 = vld [vmem:[%s59] sm:$0x1]
    %61 = vrot.lane.b32.xlu0 %v60, 48
    %v62 = vpop.permute.xlu0 %61
    %vm63 = vcmask 458112
    %64 = vst.msk [vmem:[#allocation0] sm:$0x1] %vm63, %v62
    %s65 = scalar_lea.vmem %s0, 5
    %v66 = vld [vmem:[%s65] sm:$0x1]
    %67 = vrot.lane.b32.xlu0 %v66, 40
    %v68 = vpop.permute.xlu0 %67
    %vm69 = vcmask 392512
    %70 = vst.msk [vmem:[#allocation0] sm:$0x1] %vm69, %v68
    %s71 = scalar_lea.vmem %s0, 4
    %v72 = vld [vmem:[%s71] sm:$0x1]
    %73 = vrot.lane.b32.xlu0 %v72, 32
    %v74 = vpop.permute.xlu0 %73
    %vm75 = vcmask 326912
    %76 = vst.msk [vmem:[#allocation0] sm:$0x1] %vm75, %v74
    %s77 = scalar_lea.vmem %s0, 3
    %v78 = vld [vmem:[%s77] sm:$0x1]
    %79 = vrot.lane.b32.xlu0 %v78, 24
    %v80 = vpop.permute.xlu0 %79
    %vm81 = vcmask 261312
    %82 = vst.msk [vmem:[#allocation0] sm:$0x1] %vm81, %v80
    %s83 = scalar_lea.vmem %s0, 2
    %v84 = vld [vmem:[%s83] sm:$0x1]
    %85 = vrot.lane.b32.xlu0 %v84, 16
    %v86 = vpop.permute.xlu0 %85
    %vm87 = vcmask 195712
    %88 = vst.msk [vmem:[#allocation0] sm:$0x1] %vm87, %v86
    %s89 = scalar_lea.vmem %s0, 1
    %v90 = vld [vmem:[%s89] sm:$0x1]
    %91 = vrot.lane.b32.xlu0 %v90, 8
    %v92 = vpop.permute.xlu0 %91
    %vm93 = vcmask 130112
    %94 = vst.msk [vmem:[#allocation0] sm:$0x1] %vm93, %v92
    %s96 = sshllo.u32 0, 1
    %v98 = vld [vmem:[#allocation0] sm:%s96]
    %s99 = sshllo.u32 0, 1
    %100 = vst [vmem:[%s1] sm:%s99] %v98

// kernel: discriminator_forward.1
$region0: #{discriminator_forward.1}
  #allocation0 [shape = 'u32[]', space=smem, size = 0x4, offset = 0x4, fixed_abs, tag = 'smem constant byte address 0x4 - core index']
  #allocation1 [shape = 'u32[144,128]{1,0:T(1,128)}', space=vmem, size = 0x12000, scoped, tag = 'internal scratch']
  #allocation2 [shape = 'f32[80,128]{1,0:T(8,128)}', space=vmem, size = 0xa000, scoped, tag = 'scratch operand']
  #allocation3 [shape = 'f32[48,128]{1,0:T(8,128)}', space=vmem, size = 0x6000, scoped, tag = 'scratch operand']
  #allocation4 [shape = 'f32[32,128]{1,0:T(8,128)}', space=vmem, size = 0x4000, scoped, tag = 'scratch operand']
  #allocation5 [shape = 'f32[16,128]{1,0:T(8,128)}', space=vmem, size = 0x2000, scoped, tag = 'scratch operand']
  #allocation6 [shape = 'f32[16,128]{1,0:T(8,128)}', space=vmem, size = 0x2000, scoped, tag = 'scratch operand']
  #allocation7 [shape = 'bf16[32,512]{1,0:T(16,128)(2,1)}', space=vmem, size = 0x8000, scoped, tag = 'scratch operand']
  #allocation8 [shape = 'f32[1,1]{1,0:T(1,128)S(1)}', space=vmem, size = 0x200, scoped, tag = 'scoped memory for discriminator_forward.1']
  %s0 = inlined_call_operand.vmem [shape: f32[64,128], index: 0, kind: input, shape index: {}]
  %s1 = inlined_call_operand.vmem [shape: bf16[512,128], index: 1, kind: input, shape index: {}]
  %s2 = inlined_call_operand.vmem [shape: f32[1,128], index: 2, kind: input, shape index: {}]
  %s3 = inlined_call_operand.vmem [shape: bf16[512,128], index: 3, kind: input, shape index: {}]
  %s4 = inlined_call_operand.vmem [shape: f32[128,16], index: 4, kind: input, shape index: {}]
  %s5 = inlined_call_operand.vmem [shape: f32[16,128], index: 5, kind: input, shape index: {}]
  %s6 = inlined_call_operand.vmem [shape: f32[1,16], index: 6, kind: input, shape index: {}]
  %s7 = inlined_call_operand.vmem [shape: f32[1,16], index: 7, kind: input, shape index: {}]
  %s8 = inlined_call_operand.vmem [shape: bf16[512,128], index: 8, kind: input, shape index: {}]
  %s9 = inlined_call_operand.vmem [shape: f32[128,32], index: 9, kind: input, shape index: {}]
  %s10 = inlined_call_operand.vmem [shape: f32[32,128], index: 10, kind: input, shape index: {}]
  %s11 = inlined_call_operand.vmem [shape: f32[1,32], index: 11, kind: input, shape index: {}]
  %s12 = inlined_call_operand.vmem [shape: f32[1,32], index: 12, kind: input, shape index: {}]
  %s13 = inlined_call_operand.vmem [shape: bf16[512,128], index: 13, kind: input, shape index: {}]
  %s14 = inlined_call_operand.vmem [shape: f32[128,64], index: 14, kind: input, shape index: {}]
  %s15 = inlined_call_operand.vmem [shape: f32[64,128], index: 15, kind: input, shape index: {}]
  %s16 = inlined_call_operand.vmem [shape: f32[1,64], index: 16, kind: input, shape index: {}]
  %s17 = inlined_call_operand.vmem [shape: f32[1,64], index: 17, kind: input, shape index: {}]
  %s18 = inlined_call_operand.vmem [shape: bf16[512,1], index: 18, kind: input, shape index: {}]
  %s19 = inlined_call_operand.<no memory space> [shape: f32[1,1], index: 19, kind: input, shape index: {}]
  %s20 = inlined_call_operand.vmem [shape: f32[2,1], index: 20, kind: output, shape index: {}]
  %s21 = sld [smem:[#allocation0]]
  $region90: #{discriminator_forward.1} parent=0
    _
  %s23 = ssub.s32 1, %s21
  %s24 = scalar_select 0, %s23, %s21
  %v25 = vstv %s19
  %26 = vst [vmem:[#allocation8] sm:$0x1] %v25
  // Predicated region
  $region2: #{discriminator_forward.1} parent=0 // pred_check
    _
  $region3: #{discriminator_forward.1} parent=0 // pred_check_branch
    %28 = sbr.rel (0) target = $region5
  $region4: #{discriminator_forward.1} parent=0 // pred_region
    _
  $region5: #{discriminator_forward.1} parent=0 // pred_fallthru
    _
  // Predicated region
  $region6: #{discriminator_forward.1} parent=0 // pred_check
    _
  $region7: #{discriminator_forward.1} parent=0 // pred_check_branch
    %30 = sbr.rel (0) target = $region9
  $region8: #{discriminator_forward.1} parent=0 // pred_region
    _
  $region9: #{discriminator_forward.1} parent=0 // pred_fallthru
    _
  // Predicated region
  $region10: #{discriminator_forward.1} parent=0 // pred_check
    _
  $region11: #{discriminator_forward.1} parent=0 // pred_check_branch
    %32 = sbr.rel (0) target = $region13
  $region12: #{discriminator_forward.1} parent=0 // pred_region
    _
  $region13: #{discriminator_forward.1} parent=0 // pred_fallthru
    _
  // Predicated region
  $region14: #{discriminator_forward.1} parent=0 // pred_check
    _
  $region15: #{discriminator_forward.1} parent=0 // pred_check_branch
    %34 = sbr.rel (0) target = $region17
  $region16: #{discriminator_forward.1} parent=0 // pred_region
    _
  $region17: #{discriminator_forward.1} parent=0 // pred_fallthru
    _
  // Predicated region
  $region18: #{discriminator_forward.1} parent=0 // pred_check
    _
  $region19: #{discriminator_forward.1} parent=0 // pred_check_branch
    %36 = sbr.rel (0) target = $region21
  $region20: #{discriminator_forward.1} parent=0 // pred_region
    _
  $region21: #{discriminator_forward.1} parent=0 // pred_fallthru
    _
  // Predicated region
  $region22: #{discriminator_forward.1} parent=0 // pred_check
    _
  $region23: #{discriminator_forward.1} parent=0 // pred_check_branch
    %38 = sbr.rel (0) target = $region25
  $region24: #{discriminator_forward.1} parent=0 // pred_region
    _
  $region25: #{discriminator_forward.1} parent=0 // pred_fallthru
    _
  // Predicated region
  $region26: #{discriminator_forward.1} parent=0 // pred_check
    _
  $region27: #{discriminator_forward.1} parent=0 // pred_check_branch
    %40 = sbr.rel (0) target = $region29
  $region28: #{discriminator_forward.1} parent=0 // pred_region
    _
  $region29: #{discriminator_forward.1} parent=0 // pred_fallthru
    _
  // Predicated region
  $region30: #{discriminator_forward.1} parent=0 // pred_check
    _
  $region31: #{discriminator_forward.1} parent=0 // pred_check_branch
    %42 = sbr.rel (0) target = $region33
  $region32: #{discriminator_forward.1} parent=0 // pred_region
    _
  $region33: #{discriminator_forward.1} parent=0 // pred_fallthru
    _
  // Predicated region
  $region34: #{discriminator_forward.1} parent=0 // pred_check
    _
  $region35: #{discriminator_forward.1} parent=0 // pred_check_branch
    %44 = sbr.rel (0) target = $region37
  $region36: #{discriminator_forward.1} parent=0 // pred_region
    _
  $region37: #{discriminator_forward.1} parent=0 // pred_fallthru
    _
  // Predicated region
  $region38: #{discriminator_forward.1} parent=0 // pred_check
    _
  $region39: #{discriminator_forward.1} parent=0 // pred_check_branch
    %46 = sbr.rel (0) target = $region41
  $region40: #{discriminator_forward.1} parent=0 // pred_region
    _
  $region41: #{discriminator_forward.1} parent=0 // pred_fallthru
    _
  // Predicated region
  $region42: #{discriminator_forward.1} parent=0 // pred_check
    _
  $region43: #{discriminator_forward.1} parent=0 // pred_check_branch
    %48 = sbr.rel (0) target = $region45
  $region44: #{discriminator_forward.1} parent=0 // pred_region
    _
  $region45: #{discriminator_forward.1} parent=0 // pred_fallthru
    _
  // Predicated region
  $region46: #{discriminator_forward.1} parent=0 // pred_check
    _
  $region47: #{discriminator_forward.1} parent=0 // pred_check_branch
    %50 = sbr.rel (0) target = $region49
  $region48: #{discriminator_forward.1} parent=0 // pred_region
    _
  $region49: #{discriminator_forward.1} parent=0 // pred_fallthru
    _
  // Predicated region
  $region50: #{discriminator_forward.1} parent=0 // pred_check
    _
  $region51: #{discriminator_forward.1} parent=0 // pred_check_branch
    %52 = sbr.rel (0) target = $region53
  $region52: #{discriminator_forward.1} parent=0 // pred_region
    _
  $region53: #{discriminator_forward.1} parent=0 // pred_fallthru
    _
  // Predicated region
  $region54: #{discriminator_forward.1} parent=0 // pred_check
    _
  $region55: #{discriminator_forward.1} parent=0 // pred_check_branch
    %54 = sbr.rel (0) target = $region57
  $region56: #{discriminator_forward.1} parent=0 // pred_region
    _
  $region57: #{discriminator_forward.1} parent=0 // pred_fallthru
    _
  // Predicated region
  $region58: #{discriminator_forward.1} parent=0 // pred_check
    _
  $region59: #{discriminator_forward.1} parent=0 // pred_check_branch
    %56 = sbr.rel (0) target = $region61
  $region60: #{discriminator_forward.1} parent=0 // pred_region
    _
  $region61: #{discriminator_forward.1} parent=0 // pred_fallthru
    _
  // Predicated region
  $region62: #{discriminator_forward.1} parent=0 // pred_check
    _
  $region63: #{discriminator_forward.1} parent=0 // pred_check_branch
    %58 = sbr.rel (0) target = $region65
  $region64: #{discriminator_forward.1} parent=0 // pred_region
    _
  $region65: #{discriminator_forward.1} parent=0 // pred_fallthru
    _
  // Predicated region
  $region66: #{discriminator_forward.1} parent=0 // pred_check
    _
  $region67: #{discriminator_forward.1} parent=0 // pred_check_branch
    %60 = sbr.rel (0) target = $region69
  $region68: #{discriminator_forward.1} parent=0 // pred_region
    _
  $region69: #{discriminator_forward.1} parent=0 // pred_fallthru
    _
  // Predicated region
  $region70: #{discriminator_forward.1} parent=0 // pred_check
    _
  $region71: #{discriminator_forward.1} parent=0 // pred_check_branch
    %62 = sbr.rel (0) target = $region73
  $region72: #{discriminator_forward.1} parent=0 // pred_region
    _
  $region73: #{discriminator_forward.1} parent=0 // pred_fallthru
    _
  // Predicated region
  $region74: #{discriminator_forward.1} parent=0 // pred_check
    _
  $region75: #{discriminator_forward.1} parent=0 // pred_check_branch
    %64 = sbr.rel (0) target = $region77
  $region76: #{discriminator_forward.1} parent=0 // pred_region
    _
  $region77: #{discriminator_forward.1} parent=0 // pred_fallthru
    _
  // Predicated region
  $region78: #{discriminator_forward.1} parent=0 // pred_check
    _
  $region79: #{discriminator_forward.1} parent=0 // pred_check_branch
    %66 = sbr.rel (0) target = $region81
  $region80: #{discriminator_forward.1} parent=0 // pred_region
    _
  $region81: #{discriminator_forward.1} parent=0 // pred_fallthru
    _
  %68 = vst [vmem:[#allocation2] sm:$0x1] 0.0
  %69 = vst [vmem:[#allocation2 + $0x21] sm:$0x1] 0.0
  %v70 = vld [vmem:[%s0] sm:$0xff]
  %v71 = vld [vmem:[%s0 + $0x8] sm:$0xff]
  %v72 = vld [vmem:[%s0 + $0x10] sm:$0xff]
  %v73 = vld [vmem:[%s0 + $0x18] sm:$0xff]
  %74 = vst [vmem:[#allocation2 + $0x1] sm:$0xff] %v70
  %75 = vst [vmem:[#allocation2 + $0x9] sm:$0xff] %v71
  %76 = vst [vmem:[#allocation2 + $0x11] sm:$0xff] %v72
  %77 = vst [vmem:[#allocation2 + $0x19] sm:$0xff] %v73
  %78 = vst [vmem:[#allocation2 + $0x28] sm:$0x1] 0.0
  %79 = vst [vmem:[#allocation2 + $0x49] sm:$0x1] 0.0
  %v80 = vld [vmem:[%s0 + $0x20] sm:$0xff]
  %v81 = vld [vmem:[%s0 + $0x28] sm:$0xff]
  %v82 = vld [vmem:[%s0 + $0x30] sm:$0xff]
  %v83 = vld [vmem:[%s0 + $0x38] sm:$0xff]
  %84 = vst [vmem:[#allocation2 + $0x29] sm:$0xff] %v80
  %85 = vst [vmem:[#allocation2 + $0x31] sm:$0xff] %v81
  %86 = vst [vmem:[#allocation2 + $0x39] sm:$0xff] %v82
  %87 = vst [vmem:[#allocation2 + $0x41] sm:$0xff] %v83
  %v88 = vld [vmem:[#allocation2] ss:$2 sm:$0xff]
  %s89 = scalar_lea.vmem [#allocation2], 16
  %v90 = vld [vmem:[%s89] ss:$2 sm:$0xff]
  %v91 = vpack.c.bf16 %v90, %v88
  %92 = vst [vmem:[#allocation7] sm:$0xff] %v91
  %s93 = scalar_lea.vmem [#allocation2], 1
  %v94 = vld [vmem:[%s93] ss:$2 sm:$0xff]
  %s95 = scalar_lea.vmem [#allocation2], 17
  %v96 = vld [vmem:[%s95] ss:$2 sm:$0xff]
  %v97 = vpack.c.bf16 %v96, %v94
  %98 = vst [vmem:[#allocation7 + $0x8] sm:$0xff] %v97
  %s99 = scalar_lea.vmem [#allocation2], 2
  %v100 = vld [vmem:[%s99] ss:$2 sm:$0xff]
  %s101 = scalar_lea.vmem [#allocation2], 18
  %v102 = vld [vmem:[%s101] ss:$2 sm:$0xff]
  %v103 = vpack.c.bf16 %v102, %v100
  %104 = vst [vmem:[#allocation7 + $0x10] sm:$0xff] %v103
  %s105 = scalar_lea.vmem [#allocation2], 3
  %v106 = vld [vmem:[%s105] ss:$2 sm:$0xff]
  %s107 = scalar_lea.vmem [#allocation2], 19
  %v108 = vld [vmem:[%s107] ss:$2 sm:$0xff]
  %v109 = vpack.c.bf16 %v108, %v106
  %110 = vst [vmem:[#allocation7 + $0x18] sm:$0xff] %v109
  %s111 = scalar_lea.vmem [#allocation2], 40
  %v112 = vld [vmem:[%s111] ss:$2 sm:$0xff]
  %s113 = scalar_lea.vmem [#allocation2], 56
  %v114 = vld [vmem:[%s113] ss:$2 sm:$0xff]
  %v115 = vpack.c.bf16 %v114, %v112
  %116 = vst [vmem:[#allocation7 + $0x20] sm:$0xff] %v115
  %s117 = scalar_lea.vmem [#allocation2], 41
  %v118 = vld [vmem:[%s117] ss:$2 sm:$0xff]
  %s119 = scalar_lea.vmem [#allocation2], 57
  %v120 = vld [vmem:[%s119] ss:$2 sm:$0xff]
  %v121 = vpack.c.bf16 %v120, %v118
  %122 = vst [vmem:[#allocation7 + $0x28] sm:$0xff] %v121
  %s123 = scalar_lea.vmem [#allocation2], 42
  %v124 = vld [vmem:[%s123] ss:$2 sm:$0xff]
  %s125 = scalar_lea.vmem [#allocation2], 58
  %v126 = vld [vmem:[%s125] ss:$2 sm:$0xff]
  %v127 = vpack.c.bf16 %v126, %v124
  %128 = vst [vmem:[#allocation7 + $0x30] sm:$0xff] %v127
  %s129 = scalar_lea.vmem [#allocation2], 43
  %v130 = vld [vmem:[%s129] ss:$2 sm:$0xff]
  %s131 = scalar_lea.vmem [#allocation2], 59
  %v132 = vld [vmem:[%s131] ss:$2 sm:$0xff]
  %v133 = vpack.c.bf16 %v132, %v130
  %134 = vst [vmem:[#allocation7 + $0x38] sm:$0xff] %v133
  %v135 = vld [vmem:[#allocation7] sm:$0xff]
  %v136 = vld [vmem:[#allocation7 + $0x8] sm:$0xff]
  %v137 = vld [vmem:[#allocation7 + $0x10] sm:$0xff]
  %v138 = vld [vmem:[#allocation7 + $0x18] sm:$0xff]
  %v139 = vld [vmem:[#allocation7 + $0x20] sm:$0xff]
  %v140 = vld [vmem:[#allocation7 + $0x28] sm:$0xff]
  %v141 = vld [vmem:[#allocation7 + $0x30] sm:$0xff]
  %v142 = vld [vmem:[#allocation7 + $0x38] sm:$0xff]
  %v143 = vld [vmem:[%s1] sm:$0xf]
  %v144 = vld [vmem:[%s1 + $0x4] sm:$0xf]
  %v145 = vld [vmem:[%s1 + $0x8] sm:$0xf]
  %v146 = vld [vmem:[%s1 + $0xc] sm:$0xf]
  %v147 = vld [vmem:[%s1 + $0x10] sm:$0xf]
  %v148 = vld [vmem:[%s1 + $0x14] sm:$0xf]
  %v149 = vld [vmem:[%s1 + $0x18] sm:$0xf]
  %v150 = vld [vmem:[%s1 + $0x1c] sm:$0xf]
  %v151 = vld [vmem:[%s1 + $0x20] sm:$0xf]
  %v152 = vld [vmem:[%s1 + $0x24] sm:$0xf]
  %v153 = vld [vmem:[%s1 + $0x28] sm:$0xf]
  %v154 = vld [vmem:[%s1 + $0x2c] sm:$0xf]
  %v155 = vld [vmem:[%s1 + $0x30] sm:$0xf]
  %v156 = vld [vmem:[%s1 + $0x34] sm:$0xf]
  %v157 = vld [vmem:[%s1 + $0x38] sm:$0xf]
  %v158 = vld [vmem:[%s1 + $0x3c] sm:$0xf]
  %v159 = vld [vmem:[%s1 + $0x40] sm:$0xf]
  %v160 = vld [vmem:[%s1 + $0x44] sm:$0xf]
  %v161 = vld [vmem:[%s1 + $0x48] sm:$0xf]
  %v162 = vld [vmem:[%s1 + $0x4c] sm:$0xf]
  %v163 = vld [vmem:[%s1 + $0x50] sm:$0xf]
  %v164 = vld [vmem:[%s1 + $0x54] sm:$0xf]
  %v165 = vld [vmem:[%s1 + $0x58] sm:$0xf]
  %v166 = vld [vmem:[%s1 + $0x5c] sm:$0xf]
  %v167 = vld [vmem:[%s1 + $0x60] sm:$0xf]
  %v168 = vld [vmem:[%s1 + $0x64] sm:$0xf]
  %v169 = vld [vmem:[%s1 + $0x68] sm:$0xf]
  %v170 = vld [vmem:[%s1 + $0x6c] sm:$0xf]
  %v171 = vld [vmem:[%s1 + $0x70] sm:$0xf]
  %v172 = vld [vmem:[%s1 + $0x74] sm:$0xf]
  %v173 = vld [vmem:[%s1 + $0x78] sm:$0xf]
  %v174 = vld [vmem:[%s1 + $0x7c] sm:$0xf]
  %v175 = vld [vmem:[%s1 + $0x80] sm:$0xf]
  %v176 = vld [vmem:[%s1 + $0x84] sm:$0xf]
  %v177 = vld [vmem:[%s1 + $0x88] sm:$0xf]
  %v178 = vld [vmem:[%s1 + $0x8c] sm:$0xf]
  %v179 = vld [vmem:[%s1 + $0x90] sm:$0xf]
  %v180 = vld [vmem:[%s1 + $0x94] sm:$0xf]
  %v181 = vld [vmem:[%s1 + $0x98] sm:$0xf]
  %v182 = vld [vmem:[%s1 + $0x9c] sm:$0xf]
  %v183 = vld [vmem:[%s1 + $0xa0] sm:$0xf]
  %v184 = vld [vmem:[%s1 + $0xa4] sm:$0xf]
  %v185 = vld [vmem:[%s1 + $0xa8] sm:$0xf]
  %v186 = vld [vmem:[%s1 + $0xac] sm:$0xf]
  %v187 = vld [vmem:[%s1 + $0xb0] sm:$0xf]
  %v188 = vld [vmem:[%s1 + $0xb4] sm:$0xf]
  %v189 = vld [vmem:[%s1 + $0xb8] sm:$0xf]
  %v190 = vld [vmem:[%s1 + $0xbc] sm:$0xf]
  %v191 = vld [vmem:[%s1 + $0xc0] sm:$0xf]
  %v192 = vld [vmem:[%s1 + $0xc4] sm:$0xf]
  %v193 = vld [vmem:[%s1 + $0xc8] sm:$0xf]
  %v194 = vld [vmem:[%s1 + $0xcc] sm:$0xf]
  %v195 = vld [vmem:[%s1 + $0xd0] sm:$0xf]
  %v196 = vld [vmem:[%s1 + $0xd4] sm:$0xf]
  %v197 = vld [vmem:[%s1 + $0xd8] sm:$0xf]
  %v198 = vld [vmem:[%s1 + $0xdc] sm:$0xf]
  %v199 = vld [vmem:[%s1 + $0xe0] sm:$0xf]
  %v200 = vld [vmem:[%s1 + $0xe4] sm:$0xf]
  %v201 = vld [vmem:[%s1 + $0xe8] sm:$0xf]
  %v202 = vld [vmem:[%s1 + $0xec] sm:$0xf]
  %v203 = vld [vmem:[%s1 + $0xf0] sm:$0xf]
  %v204 = vld [vmem:[%s1 + $0xf4] sm:$0xf]
  %v205 = vld [vmem:[%s1 + $0xf8] sm:$0xf]
  %v206 = vld [vmem:[%s1 + $0xfc] sm:$0xf]
  %v207 = vld [vmem:[%s2] sm:$0x1]
  %v209 = vlaneseq
  %v210 = vshrl.u32 %v209, 7
  %v211 = vsub.s32 0, %v210
  %v212 = vrot.slane %v207, %v211
  %v278 = vunpack.c.l.b16 %v143
  %v279 = vunpack.c.l.b16 %v144
  %v280 = vunpack.c.l.b16 %v145
  %v281 = vunpack.c.l.b16 %v146
  %v282 = vunpack.c.l.b16 %v147
  %v283 = vunpack.c.l.b16 %v148
  %v284 = vunpack.c.l.b16 %v149
  %v285 = vunpack.c.l.b16 %v150
  %v286 = vunpack.c.l.b16 %v151
  %v287 = vunpack.c.l.b16 %v152
  %v288 = vunpack.c.l.b16 %v153
  %v289 = vunpack.c.l.b16 %v154
  %v290 = vunpack.c.l.b16 %v155
  %v291 = vunpack.c.l.b16 %v156
  %v292 = vunpack.c.l.b16 %v157
  %v293 = vunpack.c.l.b16 %v158
  %v294 = vunpack.c.l.b16 %v159
  %v295 = vunpack.c.l.b16 %v160
  %v296 = vunpack.c.l.b16 %v161
  %v297 = vunpack.c.l.b16 %v162
  %v298 = vunpack.c.l.b16 %v163
  %v299 = vunpack.c.l.b16 %v164
  %v300 = vunpack.c.l.b16 %v165
  %v301 = vunpack.c.l.b16 %v166
  %v302 = vunpack.c.l.b16 %v167
  %v303 = vunpack.c.l.b16 %v168
  %v304 = vunpack.c.l.b16 %v169
  %v305 = vunpack.c.l.b16 %v170
  %v306 = vunpack.c.l.b16 %v171
  %v307 = vunpack.c.l.b16 %v172
  %v308 = vunpack.c.l.b16 %v173
  %v309 = vunpack.c.l.b16 %v174
  %v310 = vunpack.c.l.b16 %v175
  %v311 = vunpack.c.l.b16 %v176
  %v312 = vunpack.c.l.b16 %v177
  %v313 = vunpack.c.l.b16 %v178
  %v314 = vunpack.c.l.b16 %v179
  %v315 = vunpack.c.l.b16 %v180
  %v316 = vunpack.c.l.b16 %v181
  %v317 = vunpack.c.l.b16 %v182
  %v318 = vunpack.c.l.b16 %v183
  %v319 = vunpack.c.l.b16 %v184
  %v320 = vunpack.c.l.b16 %v185
  %v321 = vunpack.c.l.b16 %v186
  %v322 = vunpack.c.l.b16 %v187
  %v323 = vunpack.c.l.b16 %v188
  %v324 = vunpack.c.l.b16 %v189
  %v325 = vunpack.c.l.b16 %v190
  %v326 = vunpack.c.l.b16 %v191
  %v327 = vunpack.c.l.b16 %v192
  %v328 = vunpack.c.l.b16 %v193
  %v329 = vunpack.c.l.b16 %v194
  %v330 = vunpack.c.l.b16 %v195
  %v331 = vunpack.c.l.b16 %v196
  %v332 = vunpack.c.l.b16 %v197
  %v333 = vunpack.c.l.b16 %v198
  %v334 = vunpack.c.l.b16 %v199
  %v335 = vunpack.c.l.b16 %v200
  %v336 = vunpack.c.l.b16 %v201
  %v337 = vunpack.c.l.b16 %v202
  %v338 = vunpack.c.l.b16 %v203
  %v339 = vunpack.c.l.b16 %v204
  %v340 = vunpack.c.l.b16 %v205
  %v341 = vunpack.c.l.b16 %v206
  %v342 = vpack.c.b16 %v279, %v278
  %v343 = vpack.c.b16 %v281, %v280
  %v344 = vpack.c.b16 %v283, %v282
  %v345 = vpack.c.b16 %v285, %v284
  %v346 = vpack.c.b16 %v287, %v286
  %v347 = vpack.c.b16 %v289, %v288
  %v348 = vpack.c.b16 %v291, %v290
  %v349 = vpack.c.b16 %v293, %v292
  %v350 = vpack.c.b16 %v295, %v294
  %v351 = vpack.c.b16 %v297, %v296
  %v352 = vpack.c.b16 %v299, %v298
  %v353 = vpack.c.b16 %v301, %v300
  %v354 = vpack.c.b16 %v303, %v302
  %v355 = vpack.c.b16 %v305, %v304
  %v356 = vpack.c.b16 %v307, %v306
  %v357 = vpack.c.b16 %v309, %v308
  %v358 = vpack.c.b16 %v311, %v310
  %v359 = vpack.c.b16 %v313, %v312
  %v360 = vpack.c.b16 %v315, %v314
  %v361 = vpack.c.b16 %v317, %v316
  %v362 = vpack.c.b16 %v319, %v318
  %v363 = vpack.c.b16 %v321, %v320
  %v364 = vpack.c.b16 %v323, %v322
  %v365 = vpack.c.b16 %v325, %v324
  %v366 = vpack.c.b16 %v327, %v326
  %v367 = vpack.c.b16 %v329, %v328
  %v368 = vpack.c.b16 %v331, %v330
  %v369 = vpack.c.b16 %v333, %v332
  %v370 = vpack.c.b16 %v335, %v334
  %v371 = vpack.c.b16 %v337, %v336
  %v372 = vpack.c.b16 %v339, %v338
  %v373 = vpack.c.b16 %v341, %v340
  %406 = vmatprep.subr.bf16.mxu0 0
  %407 = vmatpush1.bf16.msra.mxu0 %v342
  %408 = vmatprep.subr.bf16.mxu0 0
  %409 = vmatpush1.bf16.msra.mxu0 %v343
  %410 = vmatprep.subr.bf16.mxu0 0
  %411 = vmatpush1.bf16.msra.mxu0 %v344
  %412 = vmatprep.subr.bf16.mxu0 0
  %413 = vmatpush1.bf16.msra.mxu0 %v345
  %414 = vmatprep.subr.bf16.mxu0 0
  %415 = vmatpush1.bf16.msra.mxu0 %v346
  %416 = vmatprep.subr.bf16.mxu0 0
  %417 = vmatpush1.bf16.msra.mxu0 %v347
  %418 = vmatprep.subr.bf16.mxu0 0
  %419 = vmatpush1.bf16.msra.mxu0 %v348
  %420 = vmatprep.subr.bf16.mxu0 0
  %421 = vmatpush1.bf16.msra.mxu0 %v349
  %422 = vmatprep.subr.bf16.mxu0 0
  %423 = vmatpush1.bf16.msra.mxu0 %v350
  %424 = vmatprep.subr.bf16.mxu0 0
  %425 = vmatpush1.bf16.msra.mxu0 %v351
  %426 = vmatprep.subr.bf16.mxu0 0
  %427 = vmatpush1.bf16.msra.mxu0 %v352
  %428 = vmatprep.subr.bf16.mxu0 0
  %429 = vmatpush1.bf16.msra.mxu0 %v353
  %430 = vmatprep.subr.bf16.mxu0 0
  %431 = vmatpush1.bf16.msra.mxu0 %v354
  %432 = vmatprep.subr.bf16.mxu0 0
  %433 = vmatpush1.bf16.msra.mxu0 %v355
  %434 = vmatprep.subr.bf16.mxu0 0
  %435 = vmatpush1.bf16.msra.mxu0 %v356
  %436 = vmatprep.subr.bf16.mxu0 0
  %437 = vmatpush1.bf16.msra.mxu0 %v357
  %438 = vmatprep.mubr.bf16.mxu0 %v136
  %439 = vmatmul.mubr.bf16.gmra.mrb[0].mxu0 %v135
  %v440 = vpop.f32.mrb[0].mxu0
  %v441 = vadd.f32 %v212, %v440
  %v442 = vpop.f32.mrb[0].mxu0
  %v443 = vpop.f32.mrb[0].mxu0
  %v444 = vadd.f32 %v212, %v443
  %v445 = vpop.f32.mrb[0].mxu0
  %446 = vmatprep.mubr.bf16.mxu0 %v140
  %447 = vmatmul.mubr.bf16.gmra.mrb[0].mxu0 %v139
  %v448 = vpop.f32.mrb[0].mxu0
  %v449 = vadd.f32 %v212, %v448
  %v450 = vpop.f32.mrb[0].mxu0
  %v451 = vpop.f32.mrb[0].mxu0
  %v452 = vadd.f32 %v212, %v451
  %v453 = vpop.f32.mrb[0].mxu0
  %454 = vdwg.mxu0
  %455 = vmatprep.subr.bf16.mxu0 0
  %456 = vmatpush1.bf16.msra.mxu0 %v358
  %457 = vmatprep.subr.bf16.mxu0 0
  %458 = vmatpush1.bf16.msra.mxu0 %v359
  %459 = vmatprep.subr.bf16.mxu0 0
  %460 = vmatpush1.bf16.msra.mxu0 %v360
  %461 = vmatprep.subr.bf16.mxu0 0
  %462 = vmatpush1.bf16.msra.mxu0 %v361
  %463 = vmatprep.subr.bf16.mxu0 0
  %464 = vmatpush1.bf16.msra.mxu0 %v362
  %465 = vmatprep.subr.bf16.mxu0 0
  %466 = vmatpush1.bf16.msra.mxu0 %v363
  %467 = vmatprep.subr.bf16.mxu0 0
  %468 = vmatpush1.bf16.msra.mxu0 %v364
  %469 = vmatprep.subr.bf16.mxu0 0
  %470 = vmatpush1.bf16.msra.mxu0 %v365
  %471 = vmatprep.subr.bf16.mxu0 0
  %472 = vmatpush1.bf16.msra.mxu0 %v366
  %473 = vmatprep.subr.bf16.mxu0 0
  %474 = vmatpush1.bf16.msra.mxu0 %v367
  %475 = vmatprep.subr.bf16.mxu0 0
  %476 = vmatpush1.bf16.msra.mxu0 %v368
  %477 = vmatprep.subr.bf16.mxu0 0
  %478 = vmatpush1.bf16.msra.mxu0 %v369
  %479 = vmatprep.subr.bf16.mxu0 0
  %480 = vmatpush1.bf16.msra.mxu0 %v370
  %481 = vmatprep.subr.bf16.mxu0 0
  %482 = vmatpush1.bf16.msra.mxu0 %v371
  %483 = vmatprep.subr.bf16.mxu0 0
  %484 = vmatpush1.bf16.msra.mxu0 %v372
  %485 = vmatprep.subr.bf16.mxu0 0
  %486 = vmatpush1.bf16.msra.mxu0 %v373
  %487 = vmatprep.mubr.bf16.mxu0 %v138
  %488 = vmatmul.mubr.bf16.gmra.mrb[0].mxu0 %v137
  %v489 = vpop.f32.mrb[0].mxu0
  %v490 = vadd.f32 %v441, %v489
  %v491 = vpop.f32.mrb[0].mxu0
  %v492 = vpop.f32.mrb[0].mxu0
  %v493 = vadd.f32 %v444, %v492
  %v494 = vpop.f32.mrb[0].mxu0
  %495 = vmatprep.mubr.bf16.mxu0 %v142
  %496 = vmatmul.mubr.bf16.gmra.mrb[0].mxu0 %v141
  %v497 = vpop.f32.mrb[0].mxu0
  %v498 = vadd.f32 %v449, %v497
  %v499 = vpop.f32.mrb[0].mxu0
  %v500 = vpop.f32.mrb[0].mxu0
  %v501 = vadd.f32 %v452, %v500
  %v502 = vpop.f32.mrb[0].mxu0
  %503 = vdwg.mxu0
  %vm504 = vcmp.ge.f32.partialorder %v490, 0.0
  %vm505 = vcmp.ge.f32.partialorder %v493, 0.0
  %vm506 = vcmp.ge.f32.partialorder %v498, 0.0
  %vm507 = vcmp.ge.f32.partialorder %v501, 0.0
  %v508 = vmul.f32 %v490, 0.2
  %v509 = vmul.f32 %v493, 0.2
  %v510 = vmul.f32 %v498, 0.2
  %v511 = vmul.f32 %v501, 0.2
  %v512 = vsel %vm504, %v490, %v508
  %v513 = vsel %vm505, %v493, %v509
  %v514 = vsel %vm506, %v498, %v510
  %v515 = vsel %vm507, %v501, %v511
  %516 = vst [vmem:[#allocation3] sm:$0x1] 0.0
  %517 = vst [vmem:[#allocation3 + $0x11] sm:$0x1] 0.0
  %518 = vst [vmem:[#allocation3 + $0x1] sm:$0xff] %v512
  %519 = vst [vmem:[#allocation3 + $0x9] sm:$0xff] %v513
  %520 = vst [vmem:[#allocation3 + $0x18] sm:$0x1] 0.0
  %521 = vst [vmem:[#allocation3 + $0x29] sm:$0x1] 0.0
  %522 = vst [vmem:[#allocation3 + $0x19] sm:$0xff] %v514
  %523 = vst [vmem:[#allocation3 + $0x21] sm:$0xff] %v515
  %v524 = vld [vmem:[#allocation3] ss:$2 sm:$0xff]
  %v525 = vpack.c.bf16 %v524, %v524
  %526 = vst [vmem:[#allocation7] sm:$0xf] %v525
  %s527 = scalar_lea.vmem [#allocation3], 1
  %v528 = vld [vmem:[%s527] ss:$2 sm:$0xff]
  %v529 = vpack.c.bf16 %v528, %v528
  %530 = vst [vmem:[#allocation7 + $0x8] sm:$0xf] %v529
  %s531 = scalar_lea.vmem [#allocation3], 2
  %v532 = vld [vmem:[%s531] ss:$2 sm:$0xff]
  %v533 = vpack.c.bf16 %v532, %v532
  %534 = vst [vmem:[#allocation7 + $0x10] sm:$0xf] %v533
  %s535 = scalar_lea.vmem [#allocation3], 3
  %v536 = vld [vmem:[%s535] ss:$2 sm:$0xff]
  %v537 = vpack.c.bf16 %v536, %v536
  %538 = vst [vmem:[#allocation7 + $0x18] sm:$0xf] %v537
  %s539 = scalar_lea.vmem [#allocation3], 24
  %v540 = vld [vmem:[%s539] ss:$2 sm:$0xff]
  %v541 = vpack.c.bf16 %v540, %v540
  %v543 = vrot.slane %v541, 4
  %545 = vst [vmem:[#allocation7] sm:$0xf0] %v543
  %s546 = scalar_lea.vmem [#allocation3], 25
  %v547 = vld [vmem:[%s546] ss:$2 sm:$0xff]
  %v548 = vpack.c.bf16 %v547, %v547
  %v550 = vrot.slane %v548, 4
  %552 = vst [vmem:[#allocation7 + $0x8] sm:$0xf0] %v550
  %s553 = scalar_lea.vmem [#allocation3], 26
  %v554 = vld [vmem:[%s553] ss:$2 sm:$0xff]
  %v555 = vpack.c.bf16 %v554, %v554
  %v557 = vrot.slane %v555, 4
  %559 = vst [vmem:[#allocation7 + $0x10] sm:$0xf0] %v557
  %s560 = scalar_lea.vmem [#allocation3], 27
  %v561 = vld [vmem:[%s560] ss:$2 sm:$0xff]
  %v562 = vpack.c.bf16 %v561, %v561
  %v564 = vrot.slane %v562, 4
  %566 = vst [vmem:[#allocation7 + $0x18] sm:$0xf0] %v564
  %v567 = vld [vmem:[#allocation7] sm:$0xff]
  %v568 = vld [vmem:[#allocation7 + $0x8] sm:$0xff]
  %v569 = vld [vmem:[#allocation7 + $0x10] sm:$0xff]
  %v570 = vld [vmem:[#allocation7 + $0x18] sm:$0xff]
  %v571 = vld [vmem:[%s3] sm:$0xf]
  %v572 = vld [vmem:[%s3 + $0x4] sm:$0xf]
  %v573 = vld [vmem:[%s3 + $0x8] sm:$0xf]
  %v574 = vld [vmem:[%s3 + $0xc] sm:$0xf]
  %v575 = vld [vmem:[%s3 + $0x10] sm:$0xf]
  %v576 = vld [vmem:[%s3 + $0x14] sm:$0xf]
  %v577 = vld [vmem:[%s3 + $0x18] sm:$0xf]
  %v578 = vld [vmem:[%s3 + $0x1c] sm:$0xf]
  %v579 = vld [vmem:[%s3 + $0x20] sm:$0xf]
  %v580 = vld [vmem:[%s3 + $0x24] sm:$0xf]
  %v581 = vld [vmem:[%s3 + $0x28] sm:$0xf]
  %v582 = vld [vmem:[%s3 + $0x2c] sm:$0xf]
  %v583 = vld [vmem:[%s3 + $0x30] sm:$0xf]
  %v584 = vld [vmem:[%s3 + $0x34] sm:$0xf]
  %v585 = vld [vmem:[%s3 + $0x38] sm:$0xf]
  %v586 = vld [vmem:[%s3 + $0x3c] sm:$0xf]
  %v587 = vld [vmem:[%s3 + $0x40] sm:$0xf]
  %v588 = vld [vmem:[%s3 + $0x44] sm:$0xf]
  %v589 = vld [vmem:[%s3 + $0x48] sm:$0xf]
  %v590 = vld [vmem:[%s3 + $0x4c] sm:$0xf]
  %v591 = vld [vmem:[%s3 + $0x50] sm:$0xf]
  %v592 = vld [vmem:[%s3 + $0x54] sm:$0xf]
  %v593 = vld [vmem:[%s3 + $0x58] sm:$0xf]
  %v594 = vld [vmem:[%s3 + $0x5c] sm:$0xf]
  %v595 = vld [vmem:[%s3 + $0x60] sm:$0xf]
  %v596 = vld [vmem:[%s3 + $0x64] sm:$0xf]
  %v597 = vld [vmem:[%s3 + $0x68] sm:$0xf]
  %v598 = vld [vmem:[%s3 + $0x6c] sm:$0xf]
  %v599 = vld [vmem:[%s3 + $0x70] sm:$0xf]
  %v600 = vld [vmem:[%s3 + $0x74] sm:$0xf]
  %v601 = vld [vmem:[%s3 + $0x78] sm:$0xf]
  %v602 = vld [vmem:[%s3 + $0x7c] sm:$0xf]
  %v603 = vld [vmem:[%s3 + $0x80] sm:$0xf]
  %v604 = vld [vmem:[%s3 + $0x84] sm:$0xf]
  %v605 = vld [vmem:[%s3 + $0x88] sm:$0xf]
  %v606 = vld [vmem:[%s3 + $0x8c] sm:$0xf]
  %v607 = vld [vmem:[%s3 + $0x90] sm:$0xf]
  %v608 = vld [vmem:[%s3 + $0x94] sm:$0xf]
  %v609 = vld [vmem:[%s3 + $0x98] sm:$0xf]
  %v610 = vld [vmem:[%s3 + $0x9c] sm:$0xf]
  %v611 = vld [vmem:[%s3 + $0xa0] sm:$0xf]
  %v612 = vld [vmem:[%s3 + $0xa4] sm:$0xf]
  %v613 = vld [vmem:[%s3 + $0xa8] sm:$0xf]
  %v614 = vld [vmem:[%s3 + $0xac] sm:$0xf]
  %v615 = vld [vmem:[%s3 + $0xb0] sm:$0xf]
  %v616 = vld [vmem:[%s3 + $0xb4] sm:$0xf]
  %v617 = vld [vmem:[%s3 + $0xb8] sm:$0xf]
  %v618 = vld [vmem:[%s3 + $0xbc] sm:$0xf]
  %v619 = vld [vmem:[%s3 + $0xc0] sm:$0xf]
  %v620 = vld [vmem:[%s3 + $0xc4] sm:$0xf]
  %v621 = vld [vmem:[%s3 + $0xc8] sm:$0xf]
  %v622 = vld [vmem:[%s3 + $0xcc] sm:$0xf]
  %v623 = vld [vmem:[%s3 + $0xd0] sm:$0xf]
  %v624 = vld [vmem:[%s3 + $0xd4] sm:$0xf]
  %v625 = vld [vmem:[%s3 + $0xd8] sm:$0xf]
  %v626 = vld [vmem:[%s3 + $0xdc] sm:$0xf]
  %v627 = vld [vmem:[%s3 + $0xe0] sm:$0xf]
  %v628 = vld [vmem:[%s3 + $0xe4] sm:$0xf]
  %v629 = vld [vmem:[%s3 + $0xe8] sm:$0xf]
  %v630 = vld [vmem:[%s3 + $0xec] sm:$0xf]
  %v631 = vld [vmem:[%s3 + $0xf0] sm:$0xf]
  %v632 = vld [vmem:[%s3 + $0xf4] sm:$0xf]
  %v633 = vld [vmem:[%s3 + $0xf8] sm:$0xf]
  %v634 = vld [vmem:[%s3 + $0xfc] sm:$0xf]
  %v699 = vunpack.c.l.b16 %v571
  %v700 = vunpack.c.l.b16 %v572
  %v701 = vunpack.c.l.b16 %v573
  %v702 = vunpack.c.l.b16 %v574
  %v703 = vunpack.c.l.b16 %v575
  %v704 = vunpack.c.l.b16 %v576
  %v705 = vunpack.c.l.b16 %v577
  %v706 = vunpack.c.l.b16 %v578
  %v707 = vunpack.c.l.b16 %v579
  %v708 = vunpack.c.l.b16 %v580
  %v709 = vunpack.c.l.b16 %v581
  %v710 = vunpack.c.l.b16 %v582
  %v711 = vunpack.c.l.b16 %v583
  %v712 = vunpack.c.l.b16 %v584
  %v713 = vunpack.c.l.b16 %v585
  %v714 = vunpack.c.l.b16 %v586
  %v715 = vunpack.c.l.b16 %v587
  %v716 = vunpack.c.l.b16 %v588
  %v717 = vunpack.c.l.b16 %v589
  %v718 = vunpack.c.l.b16 %v590
  %v719 = vunpack.c.l.b16 %v591
  %v720 = vunpack.c.l.b16 %v592
  %v721 = vunpack.c.l.b16 %v593
  %v722 = vunpack.c.l.b16 %v594
  %v723 = vunpack.c.l.b16 %v595
  %v724 = vunpack.c.l.b16 %v596
  %v725 = vunpack.c.l.b16 %v597
  %v726 = vunpack.c.l.b16 %v598
  %v727 = vunpack.c.l.b16 %v599
  %v728 = vunpack.c.l.b16 %v600
  %v729 = vunpack.c.l.b16 %v601
  %v730 = vunpack.c.l.b16 %v602
  %v731 = vunpack.c.l.b16 %v603
  %v732 = vunpack.c.l.b16 %v604
  %v733 = vunpack.c.l.b16 %v605
  %v734 = vunpack.c.l.b16 %v606
  %v735 = vunpack.c.l.b16 %v607
  %v736 = vunpack.c.l.b16 %v608
  %v737 = vunpack.c.l.b16 %v609
  %v738 = vunpack.c.l.b16 %v610
  %v739 = vunpack.c.l.b16 %v611
  %v740 = vunpack.c.l.b16 %v612
  %v741 = vunpack.c.l.b16 %v613
  %v742 = vunpack.c.l.b16 %v614
  %v743 = vunpack.c.l.b16 %v615
  %v744 = vunpack.c.l.b16 %v616
  %v745 = vunpack.c.l.b16 %v617
  %v746 = vunpack.c.l.b16 %v618
  %v747 = vunpack.c.l.b16 %v619
  %v748 = vunpack.c.l.b16 %v620
  %v749 = vunpack.c.l.b16 %v621
  %v750 = vunpack.c.l.b16 %v622
  %v751 = vunpack.c.l.b16 %v623
  %v752 = vunpack.c.l.b16 %v624
  %v753 = vunpack.c.l.b16 %v625
  %v754 = vunpack.c.l.b16 %v626
  %v755 = vunpack.c.l.b16 %v627
  %v756 = vunpack.c.l.b16 %v628
  %v757 = vunpack.c.l.b16 %v629
  %v758 = vunpack.c.l.b16 %v630
  %v759 = vunpack.c.l.b16 %v631
  %v760 = vunpack.c.l.b16 %v632
  %v761 = vunpack.c.l.b16 %v633
  %v762 = vunpack.c.l.b16 %v634
  %v763 = vpack.c.b16 %v700, %v699
  %v764 = vpack.c.b16 %v702, %v701
  %v765 = vpack.c.b16 %v704, %v703
  %v766 = vpack.c.b16 %v706, %v705
  %v767 = vpack.c.b16 %v708, %v707
  %v768 = vpack.c.b16 %v710, %v709
  %v769 = vpack.c.b16 %v712, %v711
  %v770 = vpack.c.b16 %v714, %v713
  %v771 = vpack.c.b16 %v716, %v715
  %v772 = vpack.c.b16 %v718, %v717
  %v773 = vpack.c.b16 %v720, %v719
  %v774 = vpack.c.b16 %v722, %v721
  %v775 = vpack.c.b16 %v724, %v723
  %v776 = vpack.c.b16 %v726, %v725
  %v777 = vpack.c.b16 %v728, %v727
  %v778 = vpack.c.b16 %v730, %v729
  %v779 = vpack.c.b16 %v732, %v731
  %v780 = vpack.c.b16 %v734, %v733
  %v781 = vpack.c.b16 %v736, %v735
  %v782 = vpack.c.b16 %v738, %v737
  %v783 = vpack.c.b16 %v740, %v739
  %v784 = vpack.c.b16 %v742, %v741
  %v785 = vpack.c.b16 %v744, %v743
  %v786 = vpack.c.b16 %v746, %v745
  %v787 = vpack.c.b16 %v748, %v747
  %v788 = vpack.c.b16 %v750, %v749
  %v789 = vpack.c.b16 %v752, %v751
  %v790 = vpack.c.b16 %v754, %v753
  %v791 = vpack.c.b16 %v756, %v755
  %v792 = vpack.c.b16 %v758, %v757
  %v793 = vpack.c.b16 %v760, %v759
  %v794 = vpack.c.b16 %v762, %v761
  %827 = vmatprep.subr.bf16.mxu0 0
  %828 = vmatpush1.bf16.msra.mxu0 %v763
  %829 = vmatprep.subr.bf16.mxu0 0
  %830 = vmatpush1.bf16.msra.mxu0 %v764
  %831 = vmatprep.subr.bf16.mxu0 0
  %832 = vmatpush1.bf16.msra.mxu0 %v765
  %833 = vmatprep.subr.bf16.mxu0 0
  %834 = vmatpush1.bf16.msra.mxu0 %v766
  %835 = vmatprep.subr.bf16.mxu0 0
  %836 = vmatpush1.bf16.msra.mxu0 %v767
  %837 = vmatprep.subr.bf16.mxu0 0
  %838 = vmatpush1.bf16.msra.mxu0 %v768
  %839 = vmatprep.subr.bf16.mxu0 0
  %840 = vmatpush1.bf16.msra.mxu0 %v769
  %841 = vmatprep.subr.bf16.mxu0 0
  %842 = vmatpush1.bf16.msra.mxu0 %v770
  %843 = vmatprep.subr.bf16.mxu0 0
  %844 = vmatpush1.bf16.msra.mxu0 %v771
  %845 = vmatprep.subr.bf16.mxu0 0
  %846 = vmatpush1.bf16.msra.mxu0 %v772
  %847 = vmatprep.subr.bf16.mxu0 0
  %848 = vmatpush1.bf16.msra.mxu0 %v773
  %849 = vmatprep.subr.bf16.mxu0 0
  %850 = vmatpush1.bf16.msra.mxu0 %v774
  %851 = vmatprep.subr.bf16.mxu0 0
  %852 = vmatpush1.bf16.msra.mxu0 %v775
  %853 = vmatprep.subr.bf16.mxu0 0
  %854 = vmatpush1.bf16.msra.mxu0 %v776
  %855 = vmatprep.subr.bf16.mxu0 0
  %856 = vmatpush1.bf16.msra.mxu0 %v777
  %857 = vmatprep.subr.bf16.mxu0 0
  %858 = vmatpush1.bf16.msra.mxu0 %v778
  %859 = vmatprep.mubr.bf16.mxu0 %v568
  %860 = vmatmul.mubr.bf16.gmra.mrb[0].mxu0 %v567
  %v861 = vpop.f32.mrb[0].mxu0
  %v862 = vadd.f32 0.0, %v861
  %v863 = vpop.f32.mrb[0].mxu0
  %v864 = vpop.f32.mrb[0].mxu0
  %v865 = vadd.f32 0.0, %v864
  %v866 = vpop.f32.mrb[0].mxu0
  %867 = vdwg.mxu0
  %868 = vmatprep.subr.bf16.mxu0 0
  %869 = vmatpush1.bf16.msra.mxu0 %v779
  %870 = vmatprep.subr.bf16.mxu0 0
  %871 = vmatpush1.bf16.msra.mxu0 %v780
  %872 = vmatprep.subr.bf16.mxu0 0
  %873 = vmatpush1.bf16.msra.mxu0 %v781
  %874 = vmatprep.subr.bf16.mxu0 0
  %875 = vmatpush1.bf16.msra.mxu0 %v782
  %876 = vmatprep.subr.bf16.mxu0 0
  %877 = vmatpush1.bf16.msra.mxu0 %v783
  %878 = vmatprep.subr.bf16.mxu0 0
  %879 = vmatpush1.bf16.msra.mxu0 %v784
  %880 = vmatprep.subr.bf16.mxu0 0
  %881 = vmatpush1.bf16.msra.mxu0 %v785
  %882 = vmatprep.subr.bf16.mxu0 0
  %883 = vmatpush1.bf16.msra.mxu0 %v786
  %884 = vmatprep.subr.bf16.mxu0 0
  %885 = vmatpush1.bf16.msra.mxu0 %v787
  %886 = vmatprep.subr.bf16.mxu0 0
  %887 = vmatpush1.bf16.msra.mxu0 %v788
  %888 = vmatprep.subr.bf16.mxu0 0
  %889 = vmatpush1.bf16.msra.mxu0 %v789
  %890 = vmatprep.subr.bf16.mxu0 0
  %891 = vmatpush1.bf16.msra.mxu0 %v790
  %892 = vmatprep.subr.bf16.mxu0 0
  %893 = vmatpush1.bf16.msra.mxu0 %v791
  %894 = vmatprep.subr.bf16.mxu0 0
  %895 = vmatpush1.bf16.msra.mxu0 %v792
  %896 = vmatprep.subr.bf16.mxu0 0
  %897 = vmatpush1.bf16.msra.mxu0 %v793
  %898 = vmatprep.subr.bf16.mxu0 0
  %899 = vmatpush1.bf16.msra.mxu0 %v794
  %900 = vmatprep.mubr.bf16.mxu0 %v570
  %901 = vmatmul.mubr.bf16.gmra.mrb[0].mxu0 %v569
  %v902 = vpop.f32.mrb[0].mxu0
  %v903 = vadd.f32 %v862, %v902
  %v904 = vpop.f32.mrb[0].mxu0
  %v905 = vpop.f32.mrb[0].mxu0
  %v906 = vadd.f32 %v865, %v905
  %v907 = vpop.f32.mrb[0].mxu0
  %908 = vdwg.mxu0
  %v909 = vadd.f32 %v903, %v906
  %v910 = vrot.slane %v909, 4
  %v911 = vadd.f32 %v909, %v910
  %v912 = vrot.slane %v911, 2
  %v913 = vadd.f32 %v911, %v912
  %v914 = vrot.slane %v913, 1
  %v915 = vadd.f32 %v913, %v914
  %v916 = vmul.f32 %v903, %v903
  %v917 = vmul.f32 %v906, %v906
  %v918 = vadd.f32 %v916, %v917
  %v919 = vrot.slane %v918, 4
  %v920 = vadd.f32 %v918, %v919
  %v921 = vrot.slane %v920, 2
  %v922 = vadd.f32 %v920, %v921
  %v923 = vrot.slane %v922, 1
  %v924 = vadd.f32 %v922, %v923
  %vm925 = vcmask 1040384
  %v926 = vsel %vm925, %v915, %v924
  %v927 = vld [vmem:[%s4] sm:$0xff]
  %v928 = vld [vmem:[%s4 + $0x8] sm:$0xff]
  %v929 = vld [vmem:[%s4 + $0x10] sm:$0xff]
  %v930 = vld [vmem:[%s4 + $0x18] sm:$0xff]
  %v931 = vld [vmem:[%s4 + $0x20] sm:$0xff]
  %v932 = vld [vmem:[%s4 + $0x28] sm:$0xff]
  %v933 = vld [vmem:[%s4 + $0x30] sm:$0xff]
  %v934 = vld [vmem:[%s4 + $0x38] sm:$0xff]
  %v935 = vld [vmem:[%s4 + $0x40] sm:$0xff]
  %v936 = vld [vmem:[%s4 + $0x48] sm:$0xff]
  %v937 = vld [vmem:[%s4 + $0x50] sm:$0xff]
  %v938 = vld [vmem:[%s4 + $0x58] sm:$0xff]
  %v939 = vld [vmem:[%s4 + $0x60] sm:$0xff]
  %v940 = vld [vmem:[%s4 + $0x68] sm:$0xff]
  %v941 = vld [vmem:[%s4 + $0x70] sm:$0xff]
  %v942 = vld [vmem:[%s4 + $0x78] sm:$0xff]
  %943 = vmatprep.subr.mxu0 0.0
  %944 = vmatpush1.msra.mxu0 %v927
  %945 = vmatprep.subr.mxu0 0.0
  %946 = vmatpush1.msra.mxu0 %v928
  %947 = vmatprep.subr.mxu0 0.0
  %948 = vmatpush1.msra.mxu0 %v929
  %949 = vmatprep.subr.mxu0 0.0
  %950 = vmatpush1.msra.mxu0 %v930
  %951 = vmatprep.subr.mxu0 0.0
  %952 = vmatpush1.msra.mxu0 %v931
  %953 = vmatprep.subr.mxu0 0.0
  %954 = vmatpush1.msra.mxu0 %v932
  %955 = vmatprep.subr.mxu0 0.0
  %956 = vmatpush1.msra.mxu0 %v933
  %957 = vmatprep.subr.mxu0 0.0
  %958 = vmatpush1.msra.mxu0 %v934
  %959 = vmatprep.subr.mxu0 0.0
  %960 = vmatpush1.msra.mxu0 %v935
  %961 = vmatprep.subr.mxu0 0.0
  %962 = vmatpush1.msra.mxu0 %v936
  %963 = vmatprep.subr.mxu0 0.0
  %964 = vmatpush1.msra.mxu0 %v937
  %965 = vmatprep.subr.mxu0 0.0
  %966 = vmatpush1.msra.mxu0 %v938
  %967 = vmatprep.subr.mxu0 0.0
  %968 = vmatpush1.msra.mxu0 %v939
  %969 = vmatprep.subr.mxu0 0.0
  %970 = vmatpush1.msra.mxu0 %v940
  %971 = vmatprep.subr.mxu0 0.0
  %972 = vmatpush1.msra.mxu0 %v941
  %973 = vmatprep.subr.mxu0 0.0
  %974 = vmatpush1.msra.mxu0 %v942
  %975 = vmatprep.subr.mxu0 0.0
  %976 = vmatpush1.msra.mxu0 0.0
  %977 = vmatprep.subr.mxu0 0.0
  %978 = vmatpush1.msra.mxu0 0.0
  %979 = vmatprep.subr.mxu0 0.0
  %980 = vmatpush1.msra.mxu0 0.0
  %981 = vmatprep.subr.mxu0 0.0
  %982 = vmatpush1.msra.mxu0 0.0
  %983 = vmatprep.subr.mxu0 0.0
  %984 = vmatpush1.msra.mxu0 0.0
  %985 = vmatprep.subr.mxu0 0.0
  %986 = vmatpush1.msra.mxu0 0.0
  %987 = vmatprep.subr.mxu0 0.0
  %988 = vmatpush1.msra.mxu0 0.0
  %989 = vmatprep.subr.mxu0 0.0
  %990 = vmatpush1.msra.mxu0 0.0
  %991 = vmatprep.subr.mxu0 0.0
  %992 = vmatpush1.msra.mxu0 0.0
  %993 = vmatprep.subr.mxu0 0.0
  %994 = vmatpush1.msra.mxu0 0.0
  %995 = vmatprep.subr.mxu0 0.0
  %996 = vmatpush1.msra.mxu0 0.0
  %997 = vmatprep.subr.mxu0 0.0
  %998 = vmatpush1.msra.mxu0 0.0
  %999 = vmatprep.subr.mxu0 0.0
  %1000 = vmatpush1.msra.mxu0 0.0
  %1001 = vmatprep.subr.mxu0 0.0
  %1002 = vmatpush1.msra.mxu0 0.0
  %1003 = vmatprep.subr.mxu0 0.0
  %1004 = vmatpush1.msra.mxu0 0.0
  %1005 = vmatprep.subr.mxu0 0.0
  %1006 = vmatpush1.msra.mxu0 0.0
  %1007 = vmatprep.mubr.f32.mxu0 0.0
  %1008 = vmatmul.mubr.f32.gmra.mrb[0].mxu0 %v926
  %v1009 = vpop.f32.mrb[0].mxu0
  %v1010 = vadd.f32 0.0, %v1009
  %v1011 = vpop.f32.mrb[0].mxu0
  %1012 = vdwg.mxu0
  %v1013 = vmul.f32 %v1010, 0.0078125
  %v1014 = vmul.f32 %v1013, %v1013
  %v1016 = vrot.slane %v1014, 7
  %v1018 = vsub.f32 %v1013, %v1016
  %v1019 = vmax.f32 %v1018, 0.0
  %v1020 = vadd.f32 %v1019, 1e-05
  %v1021 = vrsqrt.pop %v1020
  %v1022 = vld [vmem:[%s6] sm:$0x1]
  %v1025 = vunpack.c.l.s4 1966171168
  %v1026 = vunpack.c.0.s8 %v1025
  %v1027 = vlaneseq
  %v1028 = vshrl.u32 %v1027, 7
  %v1029 = vsub.s32 %v1026, %v1028
  %v1030 = vrot.slane %v1021, %v1029
  %v1031 = vcombine.high %v1030, %v1030
  %v1033 = vunpack.c.l.s4 1966171168
  %v1034 = vunpack.c.0.s8 %v1033
  %v1035 = vlaneseq
  %v1036 = vshrl.u32 %v1035, 7
  %v1037 = vsub.s32 %v1034, %v1036
  %v1038 = vrot.slane %v1031, %v1037
  %v1040 = vmul.f32 %v1022, %v1038
  %v1041 = vld [vmem:[%s7] sm:$0x1]
  %v1042 = vmul.f32 %v1013, %v1040
  %v1043 = vsub.f32 %v1041, %v1042
  %v1045 = vlaneseq
  %v1046 = vshrl.u32 %v1045, 7
  %v1047 = vsub.s32 0, %v1046
  %v1048 = vrot.slane %v1043, %v1047
  %v1050 = vsel %vm925, %v1040, %v1048
  %v1051 = vld [vmem:[%s5] sm:$0xff]
  %v1052 = vld [vmem:[%s5 + $0x8] sm:$0xff]
  %vm1053 = vcmask 130048
  %v1055 = vsel %vm1053, %v1050, 0
  %1057 = vmatprep.subr.mxu0 0.0
  %1058 = vmatpush1.msra.mxu0 %v1051
  %1059 = vmatprep.subr.mxu0 0.0
  %1060 = vmatpush1.msra.mxu0 %v1052
  %1061 = vmatprep.subr.mxu0 0.0
  %1062 = vmatpush1.msra.mxu0 0.0
  %1063 = vmatprep.subr.mxu0 0.0
  %1064 = vmatpush1.msra.mxu0 0.0
  %1065 = vmatprep.subr.mxu0 0.0
  %1066 = vmatpush1.msra.mxu0 0.0
  %1067 = vmatprep.subr.mxu0 0.0
  %1068 = vmatpush1.msra.mxu0 0.0
  %1069 = vmatprep.subr.mxu0 0.0
  %1070 = vmatpush1.msra.mxu0 0.0
  %1071 = vmatprep.subr.mxu0 0.0
  %1072 = vmatpush1.msra.mxu0 0.0
  %1073 = vmatprep.subr.mxu0 0.0
  %1074 = vmatpush1.msra.mxu0 0.0
  %1075 = vmatprep.subr.mxu0 0.0
  %1076 = vmatpush1.msra.mxu0 0.0
  %1077 = vmatprep.subr.mxu0 0.0
  %1078 = vmatpush1.msra.mxu0 0.0
  %1079 = vmatprep.subr.mxu0 0.0
  %1080 = vmatpush1.msra.mxu0 0.0
  %1081 = vmatprep.subr.mxu0 0.0
  %1082 = vmatpush1.msra.mxu0 0.0
  %1083 = vmatprep.subr.mxu0 0.0
  %1084 = vmatpush1.msra.mxu0 0.0
  %1085 = vmatprep.subr.mxu0 0.0
  %1086 = vmatpush1.msra.mxu0 0.0
  %1087 = vmatprep.subr.mxu0 0.0
  %1088 = vmatpush1.msra.mxu0 0.0
  %1089 = vmatprep.subr.mxu0 0.0
  %1090 = vmatpush1.msra.mxu0 0.0
  %1091 = vmatprep.subr.mxu0 0.0
  %1092 = vmatpush1.msra.mxu0 0.0
  %1093 = vmatprep.subr.mxu0 0.0
  %1094 = vmatpush1.msra.mxu0 0.0
  %1095 = vmatprep.subr.mxu0 0.0
  %1096 = vmatpush1.msra.mxu0 0.0
  %1097 = vmatprep.subr.mxu0 0.0
  %1098 = vmatpush1.msra.mxu0 0.0
  %1099 = vmatprep.subr.mxu0 0.0
  %1100 = vmatpush1.msra.mxu0 0.0
  %1101 = vmatprep.subr.mxu0 0.0
  %1102 = vmatpush1.msra.mxu0 0.0
  %1103 = vmatprep.subr.mxu0 0.0
  %1104 = vmatpush1.msra.mxu0 0.0
  %1105 = vmatprep.subr.mxu0 0.0
  %1106 = vmatpush1.msra.mxu0 0.0
  %1107 = vmatprep.subr.mxu0 0.0
  %1108 = vmatpush1.msra.mxu0 0.0
  %1109 = vmatprep.subr.mxu0 0.0
  %1110 = vmatpush1.msra.mxu0 0.0
  %1111 = vmatprep.subr.mxu0 0.0
  %1112 = vmatpush1.msra.mxu0 0.0
  %1113 = vmatprep.subr.mxu0 0.0
  %1114 = vmatpush1.msra.mxu0 0.0
  %1115 = vmatprep.subr.mxu0 0.0
  %1116 = vmatpush1.msra.mxu0 0.0
  %1117 = vmatprep.subr.mxu0 0.0
  %1118 = vmatpush1.msra.mxu0 0.0
  %1119 = vmatprep.subr.mxu0 0.0
  %1120 = vmatpush1.msra.mxu0 0.0
  %1121 = vmatprep.mubr.f32.mxu0 0.0
  %1122 = vmatmul.mubr.f32.gmra.mrb[0].mxu0 %v1055
  %v1123 = vpop.f32.mrb[0].mxu0
  %v1124 = vadd.f32 0.0, %v1123
  %v1125 = vpop.f32.mrb[0].mxu0
  %1126 = vdwg.mxu0
  %v1127 = vlaneseq
  %v1128 = vshrl.u32 %v1127, 7
  %v1129 = vsub.s32 0, %v1128
  %v1130 = vrot.slane %v1124, %v1129
  %v1131 = vmul.f32 %v903, %v1130
  %v1132 = vmul.f32 %v906, %v1130
  %v1133 = vlaneseq
  %v1134 = vshrl.u32 %v1133, 7
  %v1135 = vsub.s32 1, %v1134
  %v1136 = vrot.slane %v1124, %v1135
  %v1137 = vadd.f32 %v1131, %v1136
  %v1138 = vadd.f32 %v1132, %v1136
  %vm1139 = vcmp.ge.f32.partialorder %v1137, 0.0
  %vm1140 = vcmp.ge.f32.partialorder %v1138, 0.0
  %v1141 = vmul.f32 %v1137, 0.2
  %v1142 = vmul.f32 %v1138, 0.2
  %v1143 = vsel %vm1139, %v1137, %v1141
  %v1144 = vsel %vm1140, %v1138, %v1142
  %1145 = vst [vmem:[#allocation4] sm:$0x1] 0.0
  %1146 = vst [vmem:[#allocation4 + $0x9] sm:$0x1] 0.0
  %1147 = vst [vmem:[#allocation4 + $0x1] sm:$0xff] %v1143
  %1148 = vst [vmem:[#allocation4 + $0x10] sm:$0x1] 0.0
  %1149 = vst [vmem:[#allocation4 + $0x19] sm:$0x1] 0.0
  %1150 = vst [vmem:[#allocation4 + $0x11] sm:$0xff] %v1144
  %v1151 = vld [vmem:[#allocation4] ss:$2 sm:$0xf]
  %v1152 = vpack.c.bf16 %v1151, %v1151
  %1153 = vst [vmem:[#allocation7] sm:$0x3] %v1152
  %s1154 = scalar_lea.vmem [#allocation4], 1
  %v1155 = vld [vmem:[%s1154] ss:$2 sm:$0xf]
  %v1156 = vpack.c.bf16 %v1155, %v1155
  %1157 = vst [vmem:[#allocation7 + $0x8] sm:$0x3] %v1156
  %s1158 = scalar_lea.vmem [#allocation4], 2
  %v1159 = vld [vmem:[%s1158] ss:$2 sm:$0xf]
  %v1160 = vpack.c.bf16 %v1159, %v1159
  %1161 = vst [vmem:[#allocation7 + $0x10] sm:$0x3] %v1160
  %s1162 = scalar_lea.vmem [#allocation4], 3
  %v1163 = vld [vmem:[%s1162] ss:$2 sm:$0xf]
  %v1164 = vpack.c.bf16 %v1163, %v1163
  %1165 = vst [vmem:[#allocation7 + $0x18] sm:$0x3] %v1164
  %s1166 = scalar_lea.vmem [#allocation4], 16
  %v1167 = vld [vmem:[%s1166] ss:$2 sm:$0xf]
  %v1168 = vpack.c.bf16 %v1167, %v1167
  %v1170 = vrot.slane %v1168, 6
  %1172 = vst [vmem:[#allocation7] sm:$0xc] %v1170
  %s1173 = scalar_lea.vmem [#allocation4], 17
  %v1174 = vld [vmem:[%s1173] ss:$2 sm:$0xf]
  %v1175 = vpack.c.bf16 %v1174, %v1174
  %v1177 = vrot.slane %v1175, 6
  %1179 = vst [vmem:[#allocation7 + $0x8] sm:$0xc] %v1177
  %s1180 = scalar_lea.vmem [#allocation4], 18
  %v1181 = vld [vmem:[%s1180] ss:$2 sm:$0xf]
  %v1182 = vpack.c.bf16 %v1181, %v1181
  %v1184 = vrot.slane %v1182, 6
  %1186 = vst [vmem:[#allocation7 + $0x10] sm:$0xc] %v1184
  %s1187 = scalar_lea.vmem [#allocation4], 19
  %v1188 = vld [vmem:[%s1187] ss:$2 sm:$0xf]
  %v1189 = vpack.c.bf16 %v1188, %v1188
  %v1191 = vrot.slane %v1189, 6
  %1193 = vst [vmem:[#allocation7 + $0x18] sm:$0xc] %v1191
  %v1194 = vld [vmem:[#allocation7] sm:$0xf]
  %v1195 = vld [vmem:[#allocation7 + $0x8] sm:$0xf]
  %v1196 = vld [vmem:[#allocation7 + $0x10] sm:$0xf]
  %v1197 = vld [vmem:[#allocation7 + $0x18] sm:$0xf]
  %v1198 = vld [vmem:[%s8] sm:$0xf]
  %v1199 = vld [vmem:[%s8 + $0x4] sm:$0xf]
  %v1200 = vld [vmem:[%s8 + $0x8] sm:$0xf]
  %v1201 = vld [vmem:[%s8 + $0xc] sm:$0xf]
  %v1202 = vld [vmem:[%s8 + $0x10] sm:$0xf]
  %v1203 = vld [vmem:[%s8 + $0x14] sm:$0xf]
  %v1204 = vld [vmem:[%s8 + $0x18] sm:$0xf]
  %v1205 = vld [vmem:[%s8 + $0x1c] sm:$0xf]
  %v1206 = vld [vmem:[%s8 + $0x20] sm:$0xf]
  %v1207 = vld [vmem:[%s8 + $0x24] sm:$0xf]
  %v1208 = vld [vmem:[%s8 + $0x28] sm:$0xf]
  %v1209 = vld [vmem:[%s8 + $0x2c] sm:$0xf]
  %v1210 = vld [vmem:[%s8 + $0x30] sm:$0xf]
  %v1211 = vld [vmem:[%s8 + $0x34] sm:$0xf]
  %v1212 = vld [vmem:[%s8 + $0x38] sm:$0xf]
  %v1213 = vld [vmem:[%s8 + $0x3c] sm:$0xf]
  %v1214 = vld [vmem:[%s8 + $0x40] sm:$0xf]
  %v1215 = vld [vmem:[%s8 + $0x44] sm:$0xf]
  %v1216 = vld [vmem:[%s8 + $0x48] sm:$0xf]
  %v1217 = vld [vmem:[%s8 + $0x4c] sm:$0xf]
  %v1218 = vld [vmem:[%s8 + $0x50] sm:$0xf]
  %v1219 = vld [vmem:[%s8 + $0x54] sm:$0xf]
  %v1220 = vld [vmem:[%s8 + $0x58] sm:$0xf]
  %v1221 = vld [vmem:[%s8 + $0x5c] sm:$0xf]
  %v1222 = vld [vmem:[%s8 + $0x60] sm:$0xf]
  %v1223 = vld [vmem:[%s8 + $0x64] sm:$0xf]
  %v1224 = vld [vmem:[%s8 + $0x68] sm:$0xf]
  %v1225 = vld [vmem:[%s8 + $0x6c] sm:$0xf]
  %v1226 = vld [vmem:[%s8 + $0x70] sm:$0xf]
  %v1227 = vld [vmem:[%s8 + $0x74] sm:$0xf]
  %v1228 = vld [vmem:[%s8 + $0x78] sm:$0xf]
  %v1229 = vld [vmem:[%s8 + $0x7c] sm:$0xf]
  %v1230 = vld [vmem:[%s8 + $0x80] sm:$0xf]
  %v1231 = vld [vmem:[%s8 + $0x84] sm:$0xf]
  %v1232 = vld [vmem:[%s8 + $0x88] sm:$0xf]
  %v1233 = vld [vmem:[%s8 + $0x8c] sm:$0xf]
  %v1234 = vld [vmem:[%s8 + $0x90] sm:$0xf]
  %v1235 = vld [vmem:[%s8 + $0x94] sm:$0xf]
  %v1236 = vld [vmem:[%s8 + $0x98] sm:$0xf]
  %v1237 = vld [vmem:[%s8 + $0x9c] sm:$0xf]
  %v1238 = vld [vmem:[%s8 + $0xa0] sm:$0xf]
  %v1239 = vld [vmem:[%s8 + $0xa4] sm:$0xf]
  %v1240 = vld [vmem:[%s8 + $0xa8] sm:$0xf]
  %v1241 = vld [vmem:[%s8 + $0xac] sm:$0xf]
  %v1242 = vld [vmem:[%s8 + $0xb0] sm:$0xf]
  %v1243 = vld [vmem:[%s8 + $0xb4] sm:$0xf]
  %v1244 = vld [vmem:[%s8 + $0xb8] sm:$0xf]
  %v1245 = vld [vmem:[%s8 + $0xbc] sm:$0xf]
  %v1246 = vld [vmem:[%s8 + $0xc0] sm:$0xf]
  %v1247 = vld [vmem:[%s8 + $0xc4] sm:$0xf]
  %v1248 = vld [vmem:[%s8 + $0xc8] sm:$0xf]
  %v1249 = vld [vmem:[%s8 + $0xcc] sm:$0xf]
  %v1250 = vld [vmem:[%s8 + $0xd0] sm:$0xf]
  %v1251 = vld [vmem:[%s8 + $0xd4] sm:$0xf]
  %v1252 = vld [vmem:[%s8 + $0xd8] sm:$0xf]
  %v1253 = vld [vmem:[%s8 + $0xdc] sm:$0xf]
  %v1254 = vld [vmem:[%s8 + $0xe0] sm:$0xf]
  %v1255 = vld [vmem:[%s8 + $0xe4] sm:$0xf]
  %v1256 = vld [vmem:[%s8 + $0xe8] sm:$0xf]
  %v1257 = vld [vmem:[%s8 + $0xec] sm:$0xf]
  %v1258 = vld [vmem:[%s8 + $0xf0] sm:$0xf]
  %v1259 = vld [vmem:[%s8 + $0xf4] sm:$0xf]
  %v1260 = vld [vmem:[%s8 + $0xf8] sm:$0xf]
  %v1261 = vld [vmem:[%s8 + $0xfc] sm:$0xf]
  %v1326 = vunpack.c.l.b16 %v1198
  %v1327 = vunpack.c.l.b16 %v1199
  %v1328 = vunpack.c.l.b16 %v1200
  %v1329 = vunpack.c.l.b16 %v1201
  %v1330 = vunpack.c.l.b16 %v1202
  %v1331 = vunpack.c.l.b16 %v1203
  %v1332 = vunpack.c.l.b16 %v1204
  %v1333 = vunpack.c.l.b16 %v1205
  %v1334 = vunpack.c.l.b16 %v1206
  %v1335 = vunpack.c.l.b16 %v1207
  %v1336 = vunpack.c.l.b16 %v1208
  %v1337 = vunpack.c.l.b16 %v1209
  %v1338 = vunpack.c.l.b16 %v1210
  %v1339 = vunpack.c.l.b16 %v1211
  %v1340 = vunpack.c.l.b16 %v1212
  %v1341 = vunpack.c.l.b16 %v1213
  %v1342 = vunpack.c.l.b16 %v1214
  %v1343 = vunpack.c.l.b16 %v1215
  %v1344 = vunpack.c.l.b16 %v1216
  %v1345 = vunpack.c.l.b16 %v1217
  %v1346 = vunpack.c.l.b16 %v1218
  %v1347 = vunpack.c.l.b16 %v1219
  %v1348 = vunpack.c.l.b16 %v1220
  %v1349 = vunpack.c.l.b16 %v1221
  %v1350 = vunpack.c.l.b16 %v1222
  %v1351 = vunpack.c.l.b16 %v1223
  %v1352 = vunpack.c.l.b16 %v1224
  %v1353 = vunpack.c.l.b16 %v1225
  %v1354 = vunpack.c.l.b16 %v1226
  %v1355 = vunpack.c.l.b16 %v1227
  %v1356 = vunpack.c.l.b16 %v1228
  %v1357 = vunpack.c.l.b16 %v1229
  %v1358 = vunpack.c.l.b16 %v1230
  %v1359 = vunpack.c.l.b16 %v1231
  %v1360 = vunpack.c.l.b16 %v1232
  %v1361 = vunpack.c.l.b16 %v1233
  %v1362 = vunpack.c.l.b16 %v1234
  %v1363 = vunpack.c.l.b16 %v1235
  %v1364 = vunpack.c.l.b16 %v1236
  %v1365 = vunpack.c.l.b16 %v1237
  %v1366 = vunpack.c.l.b16 %v1238
  %v1367 = vunpack.c.l.b16 %v1239
  %v1368 = vunpack.c.l.b16 %v1240
  %v1369 = vunpack.c.l.b16 %v1241
  %v1370 = vunpack.c.l.b16 %v1242
  %v1371 = vunpack.c.l.b16 %v1243
  %v1372 = vunpack.c.l.b16 %v1244
  %v1373 = vunpack.c.l.b16 %v1245
  %v1374 = vunpack.c.l.b16 %v1246
  %v1375 = vunpack.c.l.b16 %v1247
  %v1376 = vunpack.c.l.b16 %v1248
  %v1377 = vunpack.c.l.b16 %v1249
  %v1378 = vunpack.c.l.b16 %v1250
  %v1379 = vunpack.c.l.b16 %v1251
  %v1380 = vunpack.c.l.b16 %v1252
  %v1381 = vunpack.c.l.b16 %v1253
  %v1382 = vunpack.c.l.b16 %v1254
  %v1383 = vunpack.c.l.b16 %v1255
  %v1384 = vunpack.c.l.b16 %v1256
  %v1385 = vunpack.c.l.b16 %v1257
  %v1386 = vunpack.c.l.b16 %v1258
  %v1387 = vunpack.c.l.b16 %v1259
  %v1388 = vunpack.c.l.b16 %v1260
  %v1389 = vunpack.c.l.b16 %v1261
  %v1390 = vpack.c.b16 %v1327, %v1326
  %v1391 = vpack.c.b16 %v1329, %v1328
  %v1392 = vpack.c.b16 %v1331, %v1330
  %v1393 = vpack.c.b16 %v1333, %v1332
  %v1394 = vpack.c.b16 %v1335, %v1334
  %v1395 = vpack.c.b16 %v1337, %v1336
  %v1396 = vpack.c.b16 %v1339, %v1338
  %v1397 = vpack.c.b16 %v1341, %v1340
  %v1398 = vpack.c.b16 %v1343, %v1342
  %v1399 = vpack.c.b16 %v1345, %v1344
  %v1400 = vpack.c.b16 %v1347, %v1346
  %v1401 = vpack.c.b16 %v1349, %v1348
  %v1402 = vpack.c.b16 %v1351, %v1350
  %v1403 = vpack.c.b16 %v1353, %v1352
  %v1404 = vpack.c.b16 %v1355, %v1354
  %v1405 = vpack.c.b16 %v1357, %v1356
  %v1406 = vpack.c.b16 %v1359, %v1358
  %v1407 = vpack.c.b16 %v1361, %v1360
  %v1408 = vpack.c.b16 %v1363, %v1362
  %v1409 = vpack.c.b16 %v1365, %v1364
  %v1410 = vpack.c.b16 %v1367, %v1366
  %v1411 = vpack.c.b16 %v1369, %v1368
  %v1412 = vpack.c.b16 %v1371, %v1370
  %v1413 = vpack.c.b16 %v1373, %v1372
  %v1414 = vpack.c.b16 %v1375, %v1374
  %v1415 = vpack.c.b16 %v1377, %v1376
  %v1416 = vpack.c.b16 %v1379, %v1378
  %v1417 = vpack.c.b16 %v1381, %v1380
  %v1418 = vpack.c.b16 %v1383, %v1382
  %v1419 = vpack.c.b16 %v1385, %v1384
  %v1420 = vpack.c.b16 %v1387, %v1386
  %v1421 = vpack.c.b16 %v1389, %v1388
  %1454 = vmatprep.subr.bf16.mxu0 0
  %1455 = vmatpush1.bf16.msra.mxu0 %v1390
  %1456 = vmatprep.subr.bf16.mxu0 0
  %1457 = vmatpush1.bf16.msra.mxu0 %v1391
  %1458 = vmatprep.subr.bf16.mxu0 0
  %1459 = vmatpush1.bf16.msra.mxu0 %v1392
  %1460 = vmatprep.subr.bf16.mxu0 0
  %1461 = vmatpush1.bf16.msra.mxu0 %v1393
  %1462 = vmatprep.subr.bf16.mxu0 0
  %1463 = vmatpush1.bf16.msra.mxu0 %v1394
  %1464 = vmatprep.subr.bf16.mxu0 0
  %1465 = vmatpush1.bf16.msra.mxu0 %v1395
  %1466 = vmatprep.subr.bf16.mxu0 0
  %1467 = vmatpush1.bf16.msra.mxu0 %v1396
  %1468 = vmatprep.subr.bf16.mxu0 0
  %1469 = vmatpush1.bf16.msra.mxu0 %v1397
  %1470 = vmatprep.subr.bf16.mxu0 0
  %1471 = vmatpush1.bf16.msra.mxu0 %v1398
  %1472 = vmatprep.subr.bf16.mxu0 0
  %1473 = vmatpush1.bf16.msra.mxu0 %v1399
  %1474 = vmatprep.subr.bf16.mxu0 0
  %1475 = vmatpush1.bf16.msra.mxu0 %v1400
  %1476 = vmatprep.subr.bf16.mxu0 0
  %1477 = vmatpush1.bf16.msra.mxu0 %v1401
  %1478 = vmatprep.subr.bf16.mxu0 0
  %1479 = vmatpush1.bf16.msra.mxu0 %v1402
  %1480 = vmatprep.subr.bf16.mxu0 0
  %1481 = vmatpush1.bf16.msra.mxu0 %v1403
  %1482 = vmatprep.subr.bf16.mxu0 0
  %1483 = vmatpush1.bf16.msra.mxu0 %v1404
  %1484 = vmatprep.subr.bf16.mxu0 0
  %1485 = vmatpush1.bf16.msra.mxu0 %v1405
  %1486 = vmatprep.mubr.bf16.mxu0 %v1195
  %1487 = vmatmul.mubr.bf16.gmra.mrb[0].mxu0 %v1194
  %v1488 = vpop.f32.mrb[0].mxu0
  %v1489 = vadd.f32 0.0, %v1488
  %v1490 = vpop.f32.mrb[0].mxu0
  %v1491 = vpop.f32.mrb[0].mxu0
  %v1492 = vpop.f32.mrb[0].mxu0
  %1493 = vdwg.mxu0
  %1494 = vmatprep.subr.bf16.mxu0 0
  %1495 = vmatpush1.bf16.msra.mxu0 %v1406
  %1496 = vmatprep.subr.bf16.mxu0 0
  %1497 = vmatpush1.bf16.msra.mxu0 %v1407
  %1498 = vmatprep.subr.bf16.mxu0 0
  %1499 = vmatpush1.bf16.msra.mxu0 %v1408
  %1500 = vmatprep.subr.bf16.mxu0 0
  %1501 = vmatpush1.bf16.msra.mxu0 %v1409
  %1502 = vmatprep.subr.bf16.mxu0 0
  %1503 = vmatpush1.bf16.msra.mxu0 %v1410
  %1504 = vmatprep.subr.bf16.mxu0 0
  %1505 = vmatpush1.bf16.msra.mxu0 %v1411
  %1506 = vmatprep.subr.bf16.mxu0 0
  %1507 = vmatpush1.bf16.msra.mxu0 %v1412
  %1508 = vmatprep.subr.bf16.mxu0 0
  %1509 = vmatpush1.bf16.msra.mxu0 %v1413
  %1510 = vmatprep.subr.bf16.mxu0 0
  %1511 = vmatpush1.bf16.msra.mxu0 %v1414
  %1512 = vmatprep.subr.bf16.mxu0 0
  %1513 = vmatpush1.bf16.msra.mxu0 %v1415
  %1514 = vmatprep.subr.bf16.mxu0 0
  %1515 = vmatpush1.bf16.msra.mxu0 %v1416
  %1516 = vmatprep.subr.bf16.mxu0 0
  %1517 = vmatpush1.bf16.msra.mxu0 %v1417
  %1518 = vmatprep.subr.bf16.mxu0 0
  %1519 = vmatpush1.bf16.msra.mxu0 %v1418
  %1520 = vmatprep.subr.bf16.mxu0 0
  %1521 = vmatpush1.bf16.msra.mxu0 %v1419
  %1522 = vmatprep.subr.bf16.mxu0 0
  %1523 = vmatpush1.bf16.msra.mxu0 %v1420
  %1524 = vmatprep.subr.bf16.mxu0 0
  %1525 = vmatpush1.bf16.msra.mxu0 %v1421
  %1526 = vmatprep.mubr.bf16.mxu0 %v1197
  %1527 = vmatmul.mubr.bf16.gmra.mrb[0].mxu0 %v1196
  %v1528 = vpop.f32.mrb[0].mxu0
  %v1529 = vadd.f32 %v1489, %v1528
  %v1530 = vpop.f32.mrb[0].mxu0
  %v1531 = vpop.f32.mrb[0].mxu0
  %v1532 = vpop.f32.mrb[0].mxu0
  %1533 = vdwg.mxu0
  %v1534 = vrot.slane %v1529, 4
  %v1535 = vadd.f32 %v1529, %v1534
  %v1536 = vrot.slane %v1535, 2
  %v1537 = vadd.f32 %v1535, %v1536
  %v1538 = vrot.slane %v1537, 1
  %v1539 = vadd.f32 %v1537, %v1538
  %v1540 = vmul.f32 %v1529, %v1529
  %v1541 = vrot.slane %v1540, 4
  %v1542 = vadd.f32 %v1540, %v1541
  %v1543 = vrot.slane %v1542, 2
  %v1544 = vadd.f32 %v1542, %v1543
  %v1545 = vrot.slane %v1544, 1
  %v1546 = vadd.f32 %v1544, %v1545
  %v1547 = vsel %vm925, %v1539, %v1546
  %v1548 = vld [vmem:[%s9] sm:$0xff]
  %v1549 = vld [vmem:[%s9 + $0x8] sm:$0xff]
  %v1550 = vld [vmem:[%s9 + $0x10] sm:$0xff]
  %v1551 = vld [vmem:[%s9 + $0x18] sm:$0xff]
  %v1552 = vld [vmem:[%s9 + $0x20] sm:$0xff]
  %v1553 = vld [vmem:[%s9 + $0x28] sm:$0xff]
  %v1554 = vld [vmem:[%s9 + $0x30] sm:$0xff]
  %v1555 = vld [vmem:[%s9 + $0x38] sm:$0xff]
  %v1556 = vld [vmem:[%s9 + $0x40] sm:$0xff]
  %v1557 = vld [vmem:[%s9 + $0x48] sm:$0xff]
  %v1558 = vld [vmem:[%s9 + $0x50] sm:$0xff]
  %v1559 = vld [vmem:[%s9 + $0x58] sm:$0xff]
  %v1560 = vld [vmem:[%s9 + $0x60] sm:$0xff]
  %v1561 = vld [vmem:[%s9 + $0x68] sm:$0xff]
  %v1562 = vld [vmem:[%s9 + $0x70] sm:$0xff]
  %v1563 = vld [vmem:[%s9 + $0x78] sm:$0xff]
  %1564 = vmatprep.subr.mxu0 0.0
  %1565 = vmatpush1.msra.mxu0 %v1548
  %1566 = vmatprep.subr.mxu0 0.0
  %1567 = vmatpush1.msra.mxu0 %v1549
  %1568 = vmatprep.subr.mxu0 0.0
  %1569 = vmatpush1.msra.mxu0 %v1550
  %1570 = vmatprep.subr.mxu0 0.0
  %1571 = vmatpush1.msra.mxu0 %v1551
  %1572 = vmatprep.subr.mxu0 0.0
  %1573 = vmatpush1.msra.mxu0 %v1552
  %1574 = vmatprep.subr.mxu0 0.0
  %1575 = vmatpush1.msra.mxu0 %v1553
  %1576 = vmatprep.subr.mxu0 0.0
  %1577 = vmatpush1.msra.mxu0 %v1554
  %1578 = vmatprep.subr.mxu0 0.0
  %1579 = vmatpush1.msra.mxu0 %v1555
  %1580 = vmatprep.subr.mxu0 0.0
  %1581 = vmatpush1.msra.mxu0 %v1556
  %1582 = vmatprep.subr.mxu0 0.0
  %1583 = vmatpush1.msra.mxu0 %v1557
  %1584 = vmatprep.subr.mxu0 0.0
  %1585 = vmatpush1.msra.mxu0 %v1558
  %1586 = vmatprep.subr.mxu0 0.0
  %1587 = vmatpush1.msra.mxu0 %v1559
  %1588 = vmatprep.subr.mxu0 0.0
  %1589 = vmatpush1.msra.mxu0 %v1560
  %1590 = vmatprep.subr.mxu0 0.0
  %1591 = vmatpush1.msra.mxu0 %v1561
  %1592 = vmatprep.subr.mxu0 0.0
  %1593 = vmatpush1.msra.mxu0 %v1562
  %1594 = vmatprep.subr.mxu0 0.0
  %1595 = vmatpush1.msra.mxu0 %v1563
  %1596 = vmatprep.subr.mxu0 0.0
  %1597 = vmatpush1.msra.mxu0 0.0
  %1598 = vmatprep.subr.mxu0 0.0
  %1599 = vmatpush1.msra.mxu0 0.0
  %1600 = vmatprep.subr.mxu0 0.0
  %1601 = vmatpush1.msra.mxu0 0.0
  %1602 = vmatprep.subr.mxu0 0.0
  %1603 = vmatpush1.msra.mxu0 0.0
  %1604 = vmatprep.subr.mxu0 0.0
  %1605 = vmatpush1.msra.mxu0 0.0
  %1606 = vmatprep.subr.mxu0 0.0
  %1607 = vmatpush1.msra.mxu0 0.0
  %1608 = vmatprep.subr.mxu0 0.0
  %1609 = vmatpush1.msra.mxu0 0.0
  %1610 = vmatprep.subr.mxu0 0.0
  %1611 = vmatpush1.msra.mxu0 0.0
  %1612 = vmatprep.subr.mxu0 0.0
  %1613 = vmatpush1.msra.mxu0 0.0
  %1614 = vmatprep.subr.mxu0 0.0
  %1615 = vmatpush1.msra.mxu0 0.0
  %1616 = vmatprep.subr.mxu0 0.0
  %1617 = vmatpush1.msra.mxu0 0.0
  %1618 = vmatprep.subr.mxu0 0.0
  %1619 = vmatpush1.msra.mxu0 0.0
  %1620 = vmatprep.subr.mxu0 0.0
  %1621 = vmatpush1.msra.mxu0 0.0
  %1622 = vmatprep.subr.mxu0 0.0
  %1623 = vmatpush1.msra.mxu0 0.0
  %1624 = vmatprep.subr.mxu0 0.0
  %1625 = vmatpush1.msra.mxu0 0.0
  %1626 = vmatprep.subr.mxu0 0.0
  %1627 = vmatpush1.msra.mxu0 0.0
  %1628 = vmatprep.mubr.f32.mxu0 0.0
  %1629 = vmatmul.mubr.f32.gmra.mrb[0].mxu0 %v1547
  %v1630 = vpop.f32.mrb[0].mxu0
  %v1631 = vadd.f32 0.0, %v1630
  %v1632 = vpop.f32.mrb[0].mxu0
  %1633 = vdwg.mxu0
  %v1634 = vmul.f32 %v1631, 0.03125
  %v1635 = vmul.f32 %v1634, %v1634
  %v1637 = vrot.slane %v1635, 7
  %v1639 = vsub.f32 %v1634, %v1637
  %v1640 = vmax.f32 %v1639, 0.0
  %v1641 = vadd.f32 %v1640, 1e-05
  %v1642 = vrsqrt.pop %v1641
  %v1643 = vld [vmem:[%s11] sm:$0x1]
  %v1646 = vunpack.c.l.s4 1966171168
  %v1647 = vunpack.c.0.s8 %v1646
  %v1648 = vlaneseq
  %v1649 = vshrl.u32 %v1648, 7
  %v1650 = vsub.s32 %v1647, %v1649
  %v1651 = vrot.slane %v1642, %v1650
  %v1652 = vcombine.high %v1651, %v1651
  %v1654 = vunpack.c.l.s4 1966171168
  %v1655 = vunpack.c.0.s8 %v1654
  %v1656 = vlaneseq
  %v1657 = vshrl.u32 %v1656, 7
  %v1658 = vsub.s32 %v1655, %v1657
  %v1659 = vrot.slane %v1652, %v1658
  %v1661 = vmul.f32 %v1643, %v1659
  %v1662 = vld [vmem:[%s12] sm:$0x1]
  %v1663 = vmul.f32 %v1634, %v1661
  %v1664 = vsub.f32 %v1662, %v1663
  %v1666 = vlaneseq
  %v1667 = vshrl.u32 %v1666, 7
  %v1668 = vsub.s32 0, %v1667
  %v1669 = vrot.slane %v1664, %v1668
  %v1671 = vsel %vm925, %v1661, %v1669
  %v1672 = vld [vmem:[%s10] sm:$0xff]
  %v1673 = vld [vmem:[%s10 + $0x8] sm:$0xff]
  %v1674 = vld [vmem:[%s10 + $0x10] sm:$0xff]
  %v1675 = vld [vmem:[%s10 + $0x18] sm:$0xff]
  %vm1676 = vcmask 261120
  %v1678 = vsel %vm1676, %v1671, 0
  %1680 = vmatprep.subr.mxu0 0.0
  %1681 = vmatpush1.msra.mxu0 %v1672
  %1682 = vmatprep.subr.mxu0 0.0
  %1683 = vmatpush1.msra.mxu0 %v1673
  %1684 = vmatprep.subr.mxu0 0.0
  %1685 = vmatpush1.msra.mxu0 %v1674
  %1686 = vmatprep.subr.mxu0 0.0
  %1687 = vmatpush1.msra.mxu0 %v1675
  %1688 = vmatprep.subr.mxu0 0.0
  %1689 = vmatpush1.msra.mxu0 0.0
  %1690 = vmatprep.subr.mxu0 0.0
  %1691 = vmatpush1.msra.mxu0 0.0
  %1692 = vmatprep.subr.mxu0 0.0
  %1693 = vmatpush1.msra.mxu0 0.0
  %1694 = vmatprep.subr.mxu0 0.0
  %1695 = vmatpush1.msra.mxu0 0.0
  %1696 = vmatprep.subr.mxu0 0.0
  %1697 = vmatpush1.msra.mxu0 0.0
  %1698 = vmatprep.subr.mxu0 0.0
  %1699 = vmatpush1.msra.mxu0 0.0
  %1700 = vmatprep.subr.mxu0 0.0
  %1701 = vmatpush1.msra.mxu0 0.0
  %1702 = vmatprep.subr.mxu0 0.0
  %1703 = vmatpush1.msra.mxu0 0.0
  %1704 = vmatprep.subr.mxu0 0.0
  %1705 = vmatpush1.msra.mxu0 0.0
  %1706 = vmatprep.subr.mxu0 0.0
  %1707 = vmatpush1.msra.mxu0 0.0
  %1708 = vmatprep.subr.mxu0 0.0
  %1709 = vmatpush1.msra.mxu0 0.0
  %1710 = vmatprep.subr.mxu0 0.0
  %1711 = vmatpush1.msra.mxu0 0.0
  %1712 = vmatprep.subr.mxu0 0.0
  %1713 = vmatpush1.msra.mxu0 0.0
  %1714 = vmatprep.subr.mxu0 0.0
  %1715 = vmatpush1.msra.mxu0 0.0
  %1716 = vmatprep.subr.mxu0 0.0
  %1717 = vmatpush1.msra.mxu0 0.0
  %1718 = vmatprep.subr.mxu0 0.0
  %1719 = vmatpush1.msra.mxu0 0.0
  %1720 = vmatprep.subr.mxu0 0.0
  %1721 = vmatpush1.msra.mxu0 0.0
  %1722 = vmatprep.subr.mxu0 0.0
  %1723 = vmatpush1.msra.mxu0 0.0
  %1724 = vmatprep.subr.mxu0 0.0
  %1725 = vmatpush1.msra.mxu0 0.0
  %1726 = vmatprep.subr.mxu0 0.0
  %1727 = vmatpush1.msra.mxu0 0.0
  %1728 = vmatprep.subr.mxu0 0.0
  %1729 = vmatpush1.msra.mxu0 0.0
  %1730 = vmatprep.subr.mxu0 0.0
  %1731 = vmatpush1.msra.mxu0 0.0
  %1732 = vmatprep.subr.mxu0 0.0
  %1733 = vmatpush1.msra.mxu0 0.0
  %1734 = vmatprep.subr.mxu0 0.0
  %1735 = vmatpush1.msra.mxu0 0.0
  %1736 = vmatprep.subr.mxu0 0.0
  %1737 = vmatpush1.msra.mxu0 0.0
  %1738 = vmatprep.subr.mxu0 0.0
  %1739 = vmatpush1.msra.mxu0 0.0
  %1740 = vmatprep.subr.mxu0 0.0
  %1741 = vmatpush1.msra.mxu0 0.0
  %1742 = vmatprep.subr.mxu0 0.0
  %1743 = vmatpush1.msra.mxu0 0.0
  %1744 = vmatprep.mubr.f32.mxu0 0.0
  %1745 = vmatmul.mubr.f32.gmra.mrb[0].mxu0 %v1678
  %v1746 = vpop.f32.mrb[0].mxu0
  %v1747 = vadd.f32 0.0, %v1746
  %v1748 = vpop.f32.mrb[0].mxu0
  %1749 = vdwg.mxu0
  %v1750 = vlaneseq
  %v1751 = vshrl.u32 %v1750, 7
  %v1752 = vsub.s32 0, %v1751
  %v1753 = vrot.slane %v1747, %v1752
  %v1754 = vmul.f32 %v1529, %v1753
  %v1755 = vlaneseq
  %v1756 = vshrl.u32 %v1755, 7
  %v1757 = vsub.s32 1, %v1756
  %v1758 = vrot.slane %v1747, %v1757
  %v1759 = vadd.f32 %v1754, %v1758
  %vm1760 = vcmp.ge.f32.partialorder %v1759, 0.0
  %v1761 = vmul.f32 %v1759, 0.2
  %v1762 = vsel %vm1760, %v1759, %v1761
  %1763 = vst [vmem:[#allocation5] sm:$0x1] 0.0
  %1764 = vst [vmem:[#allocation5 + $0x5] sm:$0x1] 0.0
  %1765 = vst [vmem:[#allocation5 + $0x1] sm:$0xf] %v1762
  %1766 = vst [vmem:[#allocation5 + $0x8] sm:$0x1] 0.0
  %1767 = vst [vmem:[#allocation5 + $0xd] sm:$0x1] 0.0
  %1768 = vst [vmem:[#allocation5 + $0x5] sm:$0xf0] %v1762
  %v1769 = vld [vmem:[#allocation5] ss:$2 sm:$0x3]
  %v1770 = vpack.c.bf16 %v1769, %v1769
  %1771 = vst [vmem:[#allocation7] sm:$0x1] %v1770
  %s1772 = scalar_lea.vmem [#allocation5], 1
  %v1773 = vld [vmem:[%s1772] ss:$2 sm:$0x3]
  %v1774 = vpack.c.bf16 %v1773, %v1773
  %1775 = vst [vmem:[#allocation7 + $0x8] sm:$0x1] %v1774
  %s1776 = scalar_lea.vmem [#allocation5], 2
  %v1777 = vld [vmem:[%s1776] ss:$2 sm:$0x3]
  %v1778 = vpack.c.bf16 %v1777, %v1777
  %1779 = vst [vmem:[#allocation7 + $0x10] sm:$0x1] %v1778
  %s1780 = scalar_lea.vmem [#allocation5], 3
  %v1781 = vld [vmem:[%s1780] ss:$2 sm:$0x3]
  %v1782 = vpack.c.bf16 %v1781, %v1781
  %1783 = vst [vmem:[#allocation7 + $0x18] sm:$0x1] %v1782
  %s1784 = scalar_lea.vmem [#allocation5], 8
  %v1785 = vld [vmem:[%s1784] ss:$2 sm:$0x3]
  %v1786 = vpack.c.bf16 %v1785, %v1785
  %v1788 = vrot.slane %v1786, 7
  %1790 = vst [vmem:[#allocation7] sm:$0x2] %v1788
  %s1791 = scalar_lea.vmem [#allocation5], 9
  %v1792 = vld [vmem:[%s1791] ss:$2 sm:$0x3]
  %v1793 = vpack.c.bf16 %v1792, %v1792
  %v1795 = vrot.slane %v1793, 7
  %1797 = vst [vmem:[#allocation7 + $0x8] sm:$0x2] %v1795
  %s1798 = scalar_lea.vmem [#allocation5], 10
  %v1799 = vld [vmem:[%s1798] ss:$2 sm:$0x3]
  %v1800 = vpack.c.bf16 %v1799, %v1799
  %v1802 = vrot.slane %v1800, 7
  %1804 = vst [vmem:[#allocation7 + $0x10] sm:$0x2] %v1802
  %s1805 = scalar_lea.vmem [#allocation5], 11
  %v1806 = vld [vmem:[%s1805] ss:$2 sm:$0x3]
  %v1807 = vpack.c.bf16 %v1806, %v1806
  %v1809 = vrot.slane %v1807, 7
  %1811 = vst [vmem:[#allocation7 + $0x18] sm:$0x2] %v1809
  %v1812 = vld [vmem:[#allocation7] sm:$0x3]
  %v1813 = vld [vmem:[#allocation7 + $0x8] sm:$0x3]
  %v1814 = vld [vmem:[#allocation7 + $0x10] sm:$0x3]
  %v1815 = vld [vmem:[#allocation7 + $0x18] sm:$0x3]
  %v1816 = vld [vmem:[%s13] sm:$0xf]
  %v1817 = vld [vmem:[%s13 + $0x4] sm:$0xf]
  %v1818 = vld [vmem:[%s13 + $0x8] sm:$0xf]
  %v1819 = vld [vmem:[%s13 + $0xc] sm:$0xf]
  %v1820 = vld [vmem:[%s13 + $0x10] sm:$0xf]
  %v1821 = vld [vmem:[%s13 + $0x14] sm:$0xf]
  %v1822 = vld [vmem:[%s13 + $0x18] sm:$0xf]
  %v1823 = vld [vmem:[%s13 + $0x1c] sm:$0xf]
  %v1824 = vld [vmem:[%s13 + $0x20] sm:$0xf]
  %v1825 = vld [vmem:[%s13 + $0x24] sm:$0xf]
  %v1826 = vld [vmem:[%s13 + $0x28] sm:$0xf]
  %v1827 = vld [vmem:[%s13 + $0x2c] sm:$0xf]
  %v1828 = vld [vmem:[%s13 + $0x30] sm:$0xf]
  %v1829 = vld [vmem:[%s13 + $0x34] sm:$0xf]
  %v1830 = vld [vmem:[%s13 + $0x38] sm:$0xf]
  %v1831 = vld [vmem:[%s13 + $0x3c] sm:$0xf]
  %v1832 = vld [vmem:[%s13 + $0x40] sm:$0xf]
  %v1833 = vld [vmem:[%s13 + $0x44] sm:$0xf]
  %v1834 = vld [vmem:[%s13 + $0x48] sm:$0xf]
  %v1835 = vld [vmem:[%s13 + $0x4c] sm:$0xf]
  %v1836 = vld [vmem:[%s13 + $0x50] sm:$0xf]
  %v1837 = vld [vmem:[%s13 + $0x54] sm:$0xf]
  %v1838 = vld [vmem:[%s13 + $0x58] sm:$0xf]
  %v1839 = vld [vmem:[%s13 + $0x5c] sm:$0xf]
  %v1840 = vld [vmem:[%s13 + $0x60] sm:$0xf]
  %v1841 = vld [vmem:[%s13 + $0x64] sm:$0xf]
  %v1842 = vld [vmem:[%s13 + $0x68] sm:$0xf]
  %v1843 = vld [vmem:[%s13 + $0x6c] sm:$0xf]
  %v1844 = vld [vmem:[%s13 + $0x70] sm:$0xf]
  %v1845 = vld [vmem:[%s13 + $0x74] sm:$0xf]
  %v1846 = vld [vmem:[%s13 + $0x78] sm:$0xf]
  %v1847 = vld [vmem:[%s13 + $0x7c] sm:$0xf]
  %v1848 = vld [vmem:[%s13 + $0x80] sm:$0xf]
  %v1849 = vld [vmem:[%s13 + $0x84] sm:$0xf]
  %v1850 = vld [vmem:[%s13 + $0x88] sm:$0xf]
  %v1851 = vld [vmem:[%s13 + $0x8c] sm:$0xf]
  %v1852 = vld [vmem:[%s13 + $0x90] sm:$0xf]
  %v1853 = vld [vmem:[%s13 + $0x94] sm:$0xf]
  %v1854 = vld [vmem:[%s13 + $0x98] sm:$0xf]
  %v1855 = vld [vmem:[%s13 + $0x9c] sm:$0xf]
  %v1856 = vld [vmem:[%s13 + $0xa0] sm:$0xf]
  %v1857 = vld [vmem:[%s13 + $0xa4] sm:$0xf]
  %v1858 = vld [vmem:[%s13 + $0xa8] sm:$0xf]
  %v1859 = vld [vmem:[%s13 + $0xac] sm:$0xf]
  %v1860 = vld [vmem:[%s13 + $0xb0] sm:$0xf]
  %v1861 = vld [vmem:[%s13 + $0xb4] sm:$0xf]
  %v1862 = vld [vmem:[%s13 + $0xb8] sm:$0xf]
  %v1863 = vld [vmem:[%s13 + $0xbc] sm:$0xf]
  %v1864 = vld [vmem:[%s13 + $0xc0] sm:$0xf]
  %v1865 = vld [vmem:[%s13 + $0xc4] sm:$0xf]
  %v1866 = vld [vmem:[%s13 + $0xc8] sm:$0xf]
  %v1867 = vld [vmem:[%s13 + $0xcc] sm:$0xf]
  %v1868 = vld [vmem:[%s13 + $0xd0] sm:$0xf]
  %v1869 = vld [vmem:[%s13 + $0xd4] sm:$0xf]
  %v1870 = vld [vmem:[%s13 + $0xd8] sm:$0xf]
  %v1871 = vld [vmem:[%s13 + $0xdc] sm:$0xf]
  %v1872 = vld [vmem:[%s13 + $0xe0] sm:$0xf]
  %v1873 = vld [vmem:[%s13 + $0xe4] sm:$0xf]
  %v1874 = vld [vmem:[%s13 + $0xe8] sm:$0xf]
  %v1875 = vld [vmem:[%s13 + $0xec] sm:$0xf]
  %v1876 = vld [vmem:[%s13 + $0xf0] sm:$0xf]
  %v1877 = vld [vmem:[%s13 + $0xf4] sm:$0xf]
  %v1878 = vld [vmem:[%s13 + $0xf8] sm:$0xf]
  %v1879 = vld [vmem:[%s13 + $0xfc] sm:$0xf]
  %v1944 = vunpack.c.l.b16 %v1816
  %v1945 = vunpack.c.l.b16 %v1817
  %v1946 = vunpack.c.l.b16 %v1818
  %v1947 = vunpack.c.l.b16 %v1819
  %v1948 = vunpack.c.l.b16 %v1820
  %v1949 = vunpack.c.l.b16 %v1821
  %v1950 = vunpack.c.l.b16 %v1822
  %v1951 = vunpack.c.l.b16 %v1823
  %v1952 = vunpack.c.l.b16 %v1824
  %v1953 = vunpack.c.l.b16 %v1825
  %v1954 = vunpack.c.l.b16 %v1826
  %v1955 = vunpack.c.l.b16 %v1827
  %v1956 = vunpack.c.l.b16 %v1828
  %v1957 = vunpack.c.l.b16 %v1829
  %v1958 = vunpack.c.l.b16 %v1830
  %v1959 = vunpack.c.l.b16 %v1831
  %v1960 = vunpack.c.l.b16 %v1832
  %v1961 = vunpack.c.l.b16 %v1833
  %v1962 = vunpack.c.l.b16 %v1834
  %v1963 = vunpack.c.l.b16 %v1835
  %v1964 = vunpack.c.l.b16 %v1836
  %v1965 = vunpack.c.l.b16 %v1837
  %v1966 = vunpack.c.l.b16 %v1838
  %v1967 = vunpack.c.l.b16 %v1839
  %v1968 = vunpack.c.l.b16 %v1840
  %v1969 = vunpack.c.l.b16 %v1841
  %v1970 = vunpack.c.l.b16 %v1842
  %v1971 = vunpack.c.l.b16 %v1843
  %v1972 = vunpack.c.l.b16 %v1844
  %v1973 = vunpack.c.l.b16 %v1845
  %v1974 = vunpack.c.l.b16 %v1846
  %v1975 = vunpack.c.l.b16 %v1847
  %v1976 = vunpack.c.l.b16 %v1848
  %v1977 = vunpack.c.l.b16 %v1849
  %v1978 = vunpack.c.l.b16 %v1850
  %v1979 = vunpack.c.l.b16 %v1851
  %v1980 = vunpack.c.l.b16 %v1852
  %v1981 = vunpack.c.l.b16 %v1853
  %v1982 = vunpack.c.l.b16 %v1854
  %v1983 = vunpack.c.l.b16 %v1855
  %v1984 = vunpack.c.l.b16 %v1856
  %v1985 = vunpack.c.l.b16 %v1857
  %v1986 = vunpack.c.l.b16 %v1858
  %v1987 = vunpack.c.l.b16 %v1859
  %v1988 = vunpack.c.l.b16 %v1860
  %v1989 = vunpack.c.l.b16 %v1861
  %v1990 = vunpack.c.l.b16 %v1862
  %v1991 = vunpack.c.l.b16 %v1863
  %v1992 = vunpack.c.l.b16 %v1864
  %v1993 = vunpack.c.l.b16 %v1865
  %v1994 = vunpack.c.l.b16 %v1866
  %v1995 = vunpack.c.l.b16 %v1867
  %v1996 = vunpack.c.l.b16 %v1868
  %v1997 = vunpack.c.l.b16 %v1869
  %v1998 = vunpack.c.l.b16 %v1870
  %v1999 = vunpack.c.l.b16 %v1871
  %v2000 = vunpack.c.l.b16 %v1872
  %v2001 = vunpack.c.l.b16 %v1873
  %v2002 = vunpack.c.l.b16 %v1874
  %v2003 = vunpack.c.l.b16 %v1875
  %v2004 = vunpack.c.l.b16 %v1876
  %v2005 = vunpack.c.l.b16 %v1877
  %v2006 = vunpack.c.l.b16 %v1878
  %v2007 = vunpack.c.l.b16 %v1879
  %v2008 = vpack.c.b16 %v1945, %v1944
  %v2009 = vpack.c.b16 %v1947, %v1946
  %v2010 = vpack.c.b16 %v1949, %v1948
  %v2011 = vpack.c.b16 %v1951, %v1950
  %v2012 = vpack.c.b16 %v1953, %v1952
  %v2013 = vpack.c.b16 %v1955, %v1954
  %v2014 = vpack.c.b16 %v1957, %v1956
  %v2015 = vpack.c.b16 %v1959, %v1958
  %v2016 = vpack.c.b16 %v1961, %v1960
  %v2017 = vpack.c.b16 %v1963, %v1962
  %v2018 = vpack.c.b16 %v1965, %v1964
  %v2019 = vpack.c.b16 %v1967, %v1966
  %v2020 = vpack.c.b16 %v1969, %v1968
  %v2021 = vpack.c.b16 %v1971, %v1970
  %v2022 = vpack.c.b16 %v1973, %v1972
  %v2023 = vpack.c.b16 %v1975, %v1974
  %v2024 = vpack.c.b16 %v1977, %v1976
  %v2025 = vpack.c.b16 %v1979, %v1978
  %v2026 = vpack.c.b16 %v1981, %v1980
  %v2027 = vpack.c.b16 %v1983, %v1982
  %v2028 = vpack.c.b16 %v1985, %v1984
  %v2029 = vpack.c.b16 %v1987, %v1986
  %v2030 = vpack.c.b16 %v1989, %v1988
  %v2031 = vpack.c.b16 %v1991, %v1990
  %v2032 = vpack.c.b16 %v1993, %v1992
  %v2033 = vpack.c.b16 %v1995, %v1994
  %v2034 = vpack.c.b16 %v1997, %v1996
  %v2035 = vpack.c.b16 %v1999, %v1998
  %v2036 = vpack.c.b16 %v2001, %v2000
  %v2037 = vpack.c.b16 %v2003, %v2002
  %v2038 = vpack.c.b16 %v2005, %v2004
  %v2039 = vpack.c.b16 %v2007, %v2006
  %2072 = vmatprep.subr.bf16.mxu0 0
  %2073 = vmatpush1.bf16.msra.mxu0 %v2008
  %2074 = vmatprep.subr.bf16.mxu0 0
  %2075 = vmatpush1.bf16.msra.mxu0 %v2009
  %2076 = vmatprep.subr.bf16.mxu0 0
  %2077 = vmatpush1.bf16.msra.mxu0 %v2010
  %2078 = vmatprep.subr.bf16.mxu0 0
  %2079 = vmatpush1.bf16.msra.mxu0 %v2011
  %2080 = vmatprep.subr.bf16.mxu0 0
  %2081 = vmatpush1.bf16.msra.mxu0 %v2012
  %2082 = vmatprep.subr.bf16.mxu0 0
  %2083 = vmatpush1.bf16.msra.mxu0 %v2013
  %2084 = vmatprep.subr.bf16.mxu0 0
  %2085 = vmatpush1.bf16.msra.mxu0 %v2014
  %2086 = vmatprep.subr.bf16.mxu0 0
  %2087 = vmatpush1.bf16.msra.mxu0 %v2015
  %2088 = vmatprep.subr.bf16.mxu0 0
  %2089 = vmatpush1.bf16.msra.mxu0 %v2016
  %2090 = vmatprep.subr.bf16.mxu0 0
  %2091 = vmatpush1.bf16.msra.mxu0 %v2017
  %2092 = vmatprep.subr.bf16.mxu0 0
  %2093 = vmatpush1.bf16.msra.mxu0 %v2018
  %2094 = vmatprep.subr.bf16.mxu0 0
  %2095 = vmatpush1.bf16.msra.mxu0 %v2019
  %2096 = vmatprep.subr.bf16.mxu0 0
  %2097 = vmatpush1.bf16.msra.mxu0 %v2020
  %2098 = vmatprep.subr.bf16.mxu0 0
  %2099 = vmatpush1.bf16.msra.mxu0 %v2021
  %2100 = vmatprep.subr.bf16.mxu0 0
  %2101 = vmatpush1.bf16.msra.mxu0 %v2022
  %2102 = vmatprep.subr.bf16.mxu0 0
  %2103 = vmatpush1.bf16.msra.mxu0 %v2023
  %2104 = vmatprep.mubr.bf16.mxu0 %v1813
  %2105 = vmatmul.mubr.bf16.gmra.mrb[0].mxu0 %v1812
  %v2106 = vpop.f32.mrb[0].mxu0
  %v2107 = vadd.f32 0.0, %v2106
  %v2108 = vpop.f32.mrb[0].mxu0
  %v2109 = vpop.f32.mrb[0].mxu0
  %v2110 = vpop.f32.mrb[0].mxu0
  %2111 = vdwg.mxu0
  %2112 = vmatprep.subr.bf16.mxu0 0
  %2113 = vmatpush1.bf16.msra.mxu0 %v2024
  %2114 = vmatprep.subr.bf16.mxu0 0
  %2115 = vmatpush1.bf16.msra.mxu0 %v2025
  %2116 = vmatprep.subr.bf16.mxu0 0
  %2117 = vmatpush1.bf16.msra.mxu0 %v2026
  %2118 = vmatprep.subr.bf16.mxu0 0
  %2119 = vmatpush1.bf16.msra.mxu0 %v2027
  %2120 = vmatprep.subr.bf16.mxu0 0
  %2121 = vmatpush1.bf16.msra.mxu0 %v2028
  %2122 = vmatprep.subr.bf16.mxu0 0
  %2123 = vmatpush1.bf16.msra.mxu0 %v2029
  %2124 = vmatprep.subr.bf16.mxu0 0
  %2125 = vmatpush1.bf16.msra.mxu0 %v2030
  %2126 = vmatprep.subr.bf16.mxu0 0
  %2127 = vmatpush1.bf16.msra.mxu0 %v2031
  %2128 = vmatprep.subr.bf16.mxu0 0
  %2129 = vmatpush1.bf16.msra.mxu0 %v2032
  %2130 = vmatprep.subr.bf16.mxu0 0
  %2131 = vmatpush1.bf16.msra.mxu0 %v2033
  %2132 = vmatprep.subr.bf16.mxu0 0
  %2133 = vmatpush1.bf16.msra.mxu0 %v2034
  %2134 = vmatprep.subr.bf16.mxu0 0
  %2135 = vmatpush1.bf16.msra.mxu0 %v2035
  %2136 = vmatprep.subr.bf16.mxu0 0
  %2137 = vmatpush1.bf16.msra.mxu0 %v2036
  %2138 = vmatprep.subr.bf16.mxu0 0
  %2139 = vmatpush1.bf16.msra.mxu0 %v2037
  %2140 = vmatprep.subr.bf16.mxu0 0
  %2141 = vmatpush1.bf16.msra.mxu0 %v2038
  %2142 = vmatprep.subr.bf16.mxu0 0
  %2143 = vmatpush1.bf16.msra.mxu0 %v2039
  %2144 = vmatprep.mubr.bf16.mxu0 %v1815
  %2145 = vmatmul.mubr.bf16.gmra.mrb[0].mxu0 %v1814
  %v2146 = vpop.f32.mrb[0].mxu0
  %v2147 = vadd.f32 %v2107, %v2146
  %v2148 = vpop.f32.mrb[0].mxu0
  %v2149 = vpop.f32.mrb[0].mxu0
  %v2150 = vpop.f32.mrb[0].mxu0
  %2151 = vdwg.mxu0
  %vm2152 = vcmask 1043456
  %v2153 = vsel %vm2152, %v2147, 0.0
  %v2154 = vrot.slane %v2153, 4
  %v2155 = vadd.f32 %v2153, %v2154
  %v2156 = vrot.slane %v2155, 2
  %v2157 = vadd.f32 %v2155, %v2156
  %v2158 = vrot.slane %v2157, 1
  %v2159 = vadd.f32 %v2157, %v2158
  %v2160 = vmul.f32 %v2147, %v2147
  %v2161 = vsel %vm2152, %v2160, 0.0
  %v2162 = vrot.slane %v2161, 4
  %v2163 = vadd.f32 %v2161, %v2162
  %v2164 = vrot.slane %v2163, 2
  %v2165 = vadd.f32 %v2163, %v2164
  %v2166 = vrot.slane %v2165, 1
  %v2167 = vadd.f32 %v2165, %v2166
  %v2168 = vsel %vm925, %v2159, %v2167
  %v2169 = vld [vmem:[%s14] sm:$0xff]
  %v2170 = vld [vmem:[%s14 + $0x8] sm:$0xff]
  %v2171 = vld [vmem:[%s14 + $0x10] sm:$0xff]
  %v2172 = vld [vmem:[%s14 + $0x18] sm:$0xff]
  %v2173 = vld [vmem:[%s14 + $0x20] sm:$0xff]
  %v2174 = vld [vmem:[%s14 + $0x28] sm:$0xff]
  %v2175 = vld [vmem:[%s14 + $0x30] sm:$0xff]
  %v2176 = vld [vmem:[%s14 + $0x38] sm:$0xff]
  %v2177 = vld [vmem:[%s14 + $0x40] sm:$0xff]
  %v2178 = vld [vmem:[%s14 + $0x48] sm:$0xff]
  %v2179 = vld [vmem:[%s14 + $0x50] sm:$0xff]
  %v2180 = vld [vmem:[%s14 + $0x58] sm:$0xff]
  %v2181 = vld [vmem:[%s14 + $0x60] sm:$0xff]
  %v2182 = vld [vmem:[%s14 + $0x68] sm:$0xff]
  %v2183 = vld [vmem:[%s14 + $0x70] sm:$0xff]
  %v2184 = vld [vmem:[%s14 + $0x78] sm:$0xff]
  %2185 = vmatprep.subr.mxu0 0.0
  %2186 = vmatpush1.msra.mxu0 %v2169
  %2187 = vmatprep.subr.mxu0 0.0
  %2188 = vmatpush1.msra.mxu0 %v2170
  %2189 = vmatprep.subr.mxu0 0.0
  %2190 = vmatpush1.msra.mxu0 %v2171
  %2191 = vmatprep.subr.mxu0 0.0
  %2192 = vmatpush1.msra.mxu0 %v2172
  %2193 = vmatprep.subr.mxu0 0.0
  %2194 = vmatpush1.msra.mxu0 %v2173
  %2195 = vmatprep.subr.mxu0 0.0
  %2196 = vmatpush1.msra.mxu0 %v2174
  %2197 = vmatprep.subr.mxu0 0.0
  %2198 = vmatpush1.msra.mxu0 %v2175
  %2199 = vmatprep.subr.mxu0 0.0
  %2200 = vmatpush1.msra.mxu0 %v2176
  %2201 = vmatprep.subr.mxu0 0.0
  %2202 = vmatpush1.msra.mxu0 %v2177
  %2203 = vmatprep.subr.mxu0 0.0
  %2204 = vmatpush1.msra.mxu0 %v2178
  %2205 = vmatprep.subr.mxu0 0.0
  %2206 = vmatpush1.msra.mxu0 %v2179
  %2207 = vmatprep.subr.mxu0 0.0
  %2208 = vmatpush1.msra.mxu0 %v2180
  %2209 = vmatprep.subr.mxu0 0.0
  %2210 = vmatpush1.msra.mxu0 %v2181
  %2211 = vmatprep.subr.mxu0 0.0
  %2212 = vmatpush1.msra.mxu0 %v2182
  %2213 = vmatprep.subr.mxu0 0.0
  %2214 = vmatpush1.msra.mxu0 %v2183
  %2215 = vmatprep.subr.mxu0 0.0
  %2216 = vmatpush1.msra.mxu0 %v2184
  %2217 = vmatprep.subr.mxu0 0.0
  %2218 = vmatpush1.msra.mxu0 0.0
  %2219 = vmatprep.subr.mxu0 0.0
  %2220 = vmatpush1.msra.mxu0 0.0
  %2221 = vmatprep.subr.mxu0 0.0
  %2222 = vmatpush1.msra.mxu0 0.0
  %2223 = vmatprep.subr.mxu0 0.0
  %2224 = vmatpush1.msra.mxu0 0.0
  %2225 = vmatprep.subr.mxu0 0.0
  %2226 = vmatpush1.msra.mxu0 0.0
  %2227 = vmatprep.subr.mxu0 0.0
  %2228 = vmatpush1.msra.mxu0 0.0
  %2229 = vmatprep.subr.mxu0 0.0
  %2230 = vmatpush1.msra.mxu0 0.0
  %2231 = vmatprep.subr.mxu0 0.0
  %2232 = vmatpush1.msra.mxu0 0.0
  %2233 = vmatprep.subr.mxu0 0.0
  %2234 = vmatpush1.msra.mxu0 0.0
  %2235 = vmatprep.subr.mxu0 0.0
  %2236 = vmatpush1.msra.mxu0 0.0
  %2237 = vmatprep.subr.mxu0 0.0
  %2238 = vmatpush1.msra.mxu0 0.0
  %2239 = vmatprep.subr.mxu0 0.0
  %2240 = vmatpush1.msra.mxu0 0.0
  %2241 = vmatprep.subr.mxu0 0.0
  %2242 = vmatpush1.msra.mxu0 0.0
  %2243 = vmatprep.subr.mxu0 0.0
  %2244 = vmatpush1.msra.mxu0 0.0
  %2245 = vmatprep.subr.mxu0 0.0
  %2246 = vmatpush1.msra.mxu0 0.0
  %2247 = vmatprep.subr.mxu0 0.0
  %2248 = vmatpush1.msra.mxu0 0.0
  %2249 = vmatprep.mubr.f32.mxu0 0.0
  %2250 = vmatmul.mubr.f32.gmra.mrb[0].mxu0 %v2168
  %v2251 = vpop.f32.mrb[0].mxu0
  %v2252 = vadd.f32 0.0, %v2251
  %v2253 = vpop.f32.mrb[0].mxu0
  %2254 = vdwg.mxu0
  %v2255 = vmul.f32 %v2252, 0.125
  %v2256 = vmul.f32 %v2255, %v2255
  %v2258 = vrot.slane %v2256, 7
  %v2260 = vsub.f32 %v2255, %v2258
  %v2261 = vmax.f32 %v2260, 0.0
  %v2262 = vadd.f32 %v2261, 1e-05
  %v2263 = vrsqrt.pop %v2262
  %v2264 = vld [vmem:[%s16] sm:$0x1]
  %v2267 = vunpack.c.l.s4 1966171168
  %v2268 = vunpack.c.0.s8 %v2267
  %v2269 = vlaneseq
  %v2270 = vshrl.u32 %v2269, 7
  %v2271 = vsub.s32 %v2268, %v2270
  %v2272 = vrot.slane %v2263, %v2271
  %v2273 = vcombine.high %v2272, %v2272
  %v2275 = vunpack.c.l.s4 1966171168
  %v2276 = vunpack.c.0.s8 %v2275
  %v2277 = vlaneseq
  %v2278 = vshrl.u32 %v2277, 7
  %v2279 = vsub.s32 %v2276, %v2278
  %v2280 = vrot.slane %v2273, %v2279
  %v2282 = vmul.f32 %v2264, %v2280
  %v2283 = vld [vmem:[%s17] sm:$0x1]
  %v2284 = vmul.f32 %v2255, %v2282
  %v2285 = vsub.f32 %v2283, %v2284
  %v2287 = vlaneseq
  %v2288 = vshrl.u32 %v2287, 7
  %v2289 = vsub.s32 0, %v2288
  %v2290 = vrot.slane %v2285, %v2289
  %v2292 = vsel %vm925, %v2282, %v2290
  %v2293 = vld [vmem:[%s15] sm:$0xff]
  %v2294 = vld [vmem:[%s15 + $0x8] sm:$0xff]
  %v2295 = vld [vmem:[%s15 + $0x10] sm:$0xff]
  %v2296 = vld [vmem:[%s15 + $0x18] sm:$0xff]
  %v2297 = vld [vmem:[%s15 + $0x20] sm:$0xff]
  %v2298 = vld [vmem:[%s15 + $0x28] sm:$0xff]
  %v2299 = vld [vmem:[%s15 + $0x30] sm:$0xff]
  %v2300 = vld [vmem:[%s15 + $0x38] sm:$0xff]
  %vm2301 = vcmask 523264
  %v2303 = vsel %vm2301, %v2292, 0
  %2305 = vmatprep.subr.mxu0 0.0
  %2306 = vmatpush1.msra.mxu0 %v2293
  %2307 = vmatprep.subr.mxu0 0.0
  %2308 = vmatpush1.msra.mxu0 %v2294
  %2309 = vmatprep.subr.mxu0 0.0
  %2310 = vmatpush1.msra.mxu0 %v2295
  %2311 = vmatprep.subr.mxu0 0.0
  %2312 = vmatpush1.msra.mxu0 %v2296
  %2313 = vmatprep.subr.mxu0 0.0
  %2314 = vmatpush1.msra.mxu0 %v2297
  %2315 = vmatprep.subr.mxu0 0.0
  %2316 = vmatpush1.msra.mxu0 %v2298
  %2317 = vmatprep.subr.mxu0 0.0
  %2318 = vmatpush1.msra.mxu0 %v2299
  %2319 = vmatprep.subr.mxu0 0.0
  %2320 = vmatpush1.msra.mxu0 %v2300
  %2321 = vmatprep.subr.mxu0 0.0
  %2322 = vmatpush1.msra.mxu0 0.0
  %2323 = vmatprep.subr.mxu0 0.0
  %2324 = vmatpush1.msra.mxu0 0.0
  %2325 = vmatprep.subr.mxu0 0.0
  %2326 = vmatpush1.msra.mxu0 0.0
  %2327 = vmatprep.subr.mxu0 0.0
  %2328 = vmatpush1.msra.mxu0 0.0
  %2329 = vmatprep.subr.mxu0 0.0
  %2330 = vmatpush1.msra.mxu0 0.0
  %2331 = vmatprep.subr.mxu0 0.0
  %2332 = vmatpush1.msra.mxu0 0.0
  %2333 = vmatprep.subr.mxu0 0.0
  %2334 = vmatpush1.msra.mxu0 0.0
  %2335 = vmatprep.subr.mxu0 0.0
  %2336 = vmatpush1.msra.mxu0 0.0
  %2337 = vmatprep.subr.mxu0 0.0
  %2338 = vmatpush1.msra.mxu0 0.0
  %2339 = vmatprep.subr.mxu0 0.0
  %2340 = vmatpush1.msra.mxu0 0.0
  %2341 = vmatprep.subr.mxu0 0.0
  %2342 = vmatpush1.msra.mxu0 0.0
  %2343 = vmatprep.subr.mxu0 0.0
  %2344 = vmatpush1.msra.mxu0 0.0
  %2345 = vmatprep.subr.mxu0 0.0
  %2346 = vmatpush1.msra.mxu0 0.0
  %2347 = vmatprep.subr.mxu0 0.0
  %2348 = vmatpush1.msra.mxu0 0.0
  %2349 = vmatprep.subr.mxu0 0.0
  %2350 = vmatpush1.msra.mxu0 0.0
  %2351 = vmatprep.subr.mxu0 0.0
  %2352 = vmatpush1.msra.mxu0 0.0
  %2353 = vmatprep.subr.mxu0 0.0
  %2354 = vmatpush1.msra.mxu0 0.0
  %2355 = vmatprep.subr.mxu0 0.0
  %2356 = vmatpush1.msra.mxu0 0.0
  %2357 = vmatprep.subr.mxu0 0.0
  %2358 = vmatpush1.msra.mxu0 0.0
  %2359 = vmatprep.subr.mxu0 0.0
  %2360 = vmatpush1.msra.mxu0 0.0
  %2361 = vmatprep.subr.mxu0 0.0
  %2362 = vmatpush1.msra.mxu0 0.0
  %2363 = vmatprep.subr.mxu0 0.0
  %2364 = vmatpush1.msra.mxu0 0.0
  %2365 = vmatprep.subr.mxu0 0.0
  %2366 = vmatpush1.msra.mxu0 0.0
  %2367 = vmatprep.subr.mxu0 0.0
  %2368 = vmatpush1.msra.mxu0 0.0
  %2369 = vmatprep.mubr.f32.mxu0 0.0
  %2370 = vmatmul.mubr.f32.gmra.mrb[0].mxu0 %v2303
  %v2371 = vpop.f32.mrb[0].mxu0
  %v2372 = vadd.f32 0.0, %v2371
  %v2373 = vpop.f32.mrb[0].mxu0
  %2374 = vdwg.mxu0
  %v2375 = vlaneseq
  %v2376 = vshrl.u32 %v2375, 7
  %v2377 = vsub.s32 0, %v2376
  %v2378 = vrot.slane %v2372, %v2377
  %v2379 = vmul.f32 %v2147, %v2378
  %v2380 = vlaneseq
  %v2381 = vshrl.u32 %v2380, 7
  %v2382 = vsub.s32 1, %v2381
  %v2383 = vrot.slane %v2372, %v2382
  %v2384 = vadd.f32 %v2379, %v2383
  %vm2385 = vcmp.ge.f32.partialorder %v2384, 0.0
  %v2386 = vmul.f32 %v2384, 0.2
  %v2387 = vsel %vm2385, %v2384, %v2386
  %2388 = vst [vmem:[#allocation6] sm:$0x1] 0.0
  %2389 = vst [vmem:[#allocation6 + $0x3] sm:$0x1] 0.0
  %2390 = vst [vmem:[#allocation6 + $0x1] sm:$0x3] %v2387
  %2391 = vst [vmem:[#allocation6 + $0x8] sm:$0x1] 0.0
  %2392 = vst [vmem:[#allocation6 + $0xb] sm:$0x1] 0.0
  %2393 = vst [vmem:[#allocation6 + $0x7] sm:$0xc] %v2387
  %v2394 = vld [vmem:[#allocation6] ss:$2 sm:$0x1]
  %v2395 = vpack.c.bf16 %v2394, %v2394
  %vm2396 = vcmask 1040384
  %vm2397 = vsmask.f32 256
  %vm2398 = vmand %vm2396, %vm2397
  %v2399 = vld [vmem:[#allocation7] sm:$0x1]
  %v2400 = vsel %vm2398, %v2395, %v2399
  %2401 = vst [vmem:[#allocation7] sm:$0x1] %v2400
  %s2402 = scalar_lea.vmem [#allocation6], 1
  %v2403 = vld [vmem:[%s2402] ss:$2 sm:$0x1]
  %v2404 = vpack.c.bf16 %v2403, %v2403
  %v2405 = vld [vmem:[#allocation7 + $0x8] sm:$0x1]
  %v2406 = vsel %vm2398, %v2404, %v2405
  %2407 = vst [vmem:[#allocation7 + $0x8] sm:$0x1] %v2406
  %s2408 = scalar_lea.vmem [#allocation6], 2
  %v2409 = vld [vmem:[%s2408] ss:$2 sm:$0x1]
  %v2410 = vpack.c.bf16 %v2409, %v2409
  %v2411 = vld [vmem:[#allocation7 + $0x10] sm:$0x1]
  %v2412 = vsel %vm2398, %v2410, %v2411
  %2413 = vst [vmem:[#allocation7 + $0x10] sm:$0x1] %v2412
  %s2414 = scalar_lea.vmem [#allocation6], 3
  %v2415 = vld [vmem:[%s2414] ss:$2 sm:$0x1]
  %v2416 = vpack.c.bf16 %v2415, %v2415
  %v2417 = vld [vmem:[#allocation7 + $0x18] sm:$0x1]
  %v2418 = vsel %vm2398, %v2416, %v2417
  %2419 = vst [vmem:[#allocation7 + $0x18] sm:$0x1] %v2418
  %s2420 = scalar_lea.vmem [#allocation6], 8
  %v2421 = vld [vmem:[%s2420] ss:$2 sm:$0x1]
  %v2422 = vpack.c.bf16 %v2421, %v2421
  %v2424 = vshll.u32 %v2422, 16
  %vm2427 = vsmask.f32 7938
  %vm2428 = vmand %vm2396, %vm2427
  %v2429 = vld [vmem:[#allocation7] sm:$0x1]
  %v2430 = vsel %vm2428, %v2424, %v2429
  %2431 = vst [vmem:[#allocation7] sm:$0x1] %v2430
  %s2432 = scalar_lea.vmem [#allocation6], 9
  %v2433 = vld [vmem:[%s2432] ss:$2 sm:$0x1]
  %v2434 = vpack.c.bf16 %v2433, %v2433
  %v2436 = vshll.u32 %v2434, 16
  %v2439 = vld [vmem:[#allocation7 + $0x8] sm:$0x1]
  %v2440 = vsel %vm2428, %v2436, %v2439
  %2441 = vst [vmem:[#allocation7 + $0x8] sm:$0x1] %v2440
  %s2442 = scalar_lea.vmem [#allocation6], 10
  %v2443 = vld [vmem:[%s2442] ss:$2 sm:$0x1]
  %v2444 = vpack.c.bf16 %v2443, %v2443
  %v2446 = vshll.u32 %v2444, 16
  %v2449 = vld [vmem:[#allocation7 + $0x10] sm:$0x1]
  %v2450 = vsel %vm2428, %v2446, %v2449
  %2451 = vst [vmem:[#allocation7 + $0x10] sm:$0x1] %v2450
  %s2452 = scalar_lea.vmem [#allocation6], 11
  %v2453 = vld [vmem:[%s2452] ss:$2 sm:$0x1]
  %v2454 = vpack.c.bf16 %v2453, %v2453
  %v2456 = vshll.u32 %v2454, 16
  %v2459 = vld [vmem:[#allocation7 + $0x18] sm:$0x1]
  %v2460 = vsel %vm2428, %v2456, %v2459
  %2461 = vst [vmem:[#allocation7 + $0x18] sm:$0x1] %v2460
  %v2462 = vld [vmem:[#allocation7] sm:$0x1]
  %v2463 = vld [vmem:[#allocation7 + $0x8] sm:$0x1]
  %v2464 = vld [vmem:[#allocation7 + $0x10] sm:$0x1]
  %v2465 = vld [vmem:[#allocation7 + $0x18] sm:$0x1]
  %v2466 = vld [vmem:[%s18] sm:$0xf]
  %v2467 = vld [vmem:[%s18 + $0x4] sm:$0xf]
  %v2468 = vld [vmem:[%s18 + $0x8] sm:$0xf]
  %v2469 = vld [vmem:[%s18 + $0xc] sm:$0xf]
  %v2470 = vld [vmem:[%s18 + $0x10] sm:$0xf]
  %v2471 = vld [vmem:[%s18 + $0x14] sm:$0xf]
  %v2472 = vld [vmem:[%s18 + $0x18] sm:$0xf]
  %v2473 = vld [vmem:[%s18 + $0x1c] sm:$0xf]
  %v2474 = vld [vmem:[%s18 + $0x20] sm:$0xf]
  %v2475 = vld [vmem:[%s18 + $0x24] sm:$0xf]
  %v2476 = vld [vmem:[%s18 + $0x28] sm:$0xf]
  %v2477 = vld [vmem:[%s18 + $0x2c] sm:$0xf]
  %v2478 = vld [vmem:[%s18 + $0x30] sm:$0xf]
  %v2479 = vld [vmem:[%s18 + $0x34] sm:$0xf]
  %v2480 = vld [vmem:[%s18 + $0x38] sm:$0xf]
  %v2481 = vld [vmem:[%s18 + $0x3c] sm:$0xf]
  %v2482 = vld [vmem:[%s18 + $0x40] sm:$0xf]
  %v2483 = vld [vmem:[%s18 + $0x44] sm:$0xf]
  %v2484 = vld [vmem:[%s18 + $0x48] sm:$0xf]
  %v2485 = vld [vmem:[%s18 + $0x4c] sm:$0xf]
  %v2486 = vld [vmem:[%s18 + $0x50] sm:$0xf]
  %v2487 = vld [vmem:[%s18 + $0x54] sm:$0xf]
  %v2488 = vld [vmem:[%s18 + $0x58] sm:$0xf]
  %v2489 = vld [vmem:[%s18 + $0x5c] sm:$0xf]
  %v2490 = vld [vmem:[%s18 + $0x60] sm:$0xf]
  %v2491 = vld [vmem:[%s18 + $0x64] sm:$0xf]
  %v2492 = vld [vmem:[%s18 + $0x68] sm:$0xf]
  %v2493 = vld [vmem:[%s18 + $0x6c] sm:$0xf]
  %v2494 = vld [vmem:[%s18 + $0x70] sm:$0xf]
  %v2495 = vld [vmem:[%s18 + $0x74] sm:$0xf]
  %v2496 = vld [vmem:[%s18 + $0x78] sm:$0xf]
  %v2497 = vld [vmem:[%s18 + $0x7c] sm:$0xf]
  %v2498 = vld [vmem:[%s18 + $0x80] sm:$0xf]
  %v2499 = vld [vmem:[%s18 + $0x84] sm:$0xf]
  %v2500 = vld [vmem:[%s18 + $0x88] sm:$0xf]
  %v2501 = vld [vmem:[%s18 + $0x8c] sm:$0xf]
  %v2502 = vld [vmem:[%s18 + $0x90] sm:$0xf]
  %v2503 = vld [vmem:[%s18 + $0x94] sm:$0xf]
  %v2504 = vld [vmem:[%s18 + $0x98] sm:$0xf]
  %v2505 = vld [vmem:[%s18 + $0x9c] sm:$0xf]
  %v2506 = vld [vmem:[%s18 + $0xa0] sm:$0xf]
  %v2507 = vld [vmem:[%s18 + $0xa4] sm:$0xf]
  %v2508 = vld [vmem:[%s18 + $0xa8] sm:$0xf]
  %v2509 = vld [vmem:[%s18 + $0xac] sm:$0xf]
  %v2510 = vld [vmem:[%s18 + $0xb0] sm:$0xf]
  %v2511 = vld [vmem:[%s18 + $0xb4] sm:$0xf]
  %v2512 = vld [vmem:[%s18 + $0xb8] sm:$0xf]
  %v2513 = vld [vmem:[%s18 + $0xbc] sm:$0xf]
  %v2514 = vld [vmem:[%s18 + $0xc0] sm:$0xf]
  %v2515 = vld [vmem:[%s18 + $0xc4] sm:$0xf]
  %v2516 = vld [vmem:[%s18 + $0xc8] sm:$0xf]
  %v2517 = vld [vmem:[%s18 + $0xcc] sm:$0xf]
  %v2518 = vld [vmem:[%s18 + $0xd0] sm:$0xf]
  %v2519 = vld [vmem:[%s18 + $0xd4] sm:$0xf]
  %v2520 = vld [vmem:[%s18 + $0xd8] sm:$0xf]
  %v2521 = vld [vmem:[%s18 + $0xdc] sm:$0xf]
  %v2522 = vld [vmem:[%s18 + $0xe0] sm:$0xf]
  %v2523 = vld [vmem:[%s18 + $0xe4] sm:$0xf]
  %v2524 = vld [vmem:[%s18 + $0xe8] sm:$0xf]
  %v2525 = vld [vmem:[%s18 + $0xec] sm:$0xf]
  %v2526 = vld [vmem:[%s18 + $0xf0] sm:$0xf]
  %v2527 = vld [vmem:[%s18 + $0xf4] sm:$0xf]
  %v2528 = vld [vmem:[%s18 + $0xf8] sm:$0xf]
  %v2529 = vld [vmem:[%s18 + $0xfc] sm:$0xf]
  %v2530 = vld [vmem:[#allocation8] sm:$0x1]
  %v2532 = vlaneseq
  %v2533 = vshrl.u32 %v2532, 7
  %v2534 = vsub.s32 0, %v2533
  %v2535 = vrot.slane %v2530, %v2534
  %v2601 = vunpack.c.l.b16 %v2466
  %v2602 = vunpack.c.l.b16 %v2467
  %v2603 = vunpack.c.l.b16 %v2468
  %v2604 = vunpack.c.l.b16 %v2469
  %v2605 = vunpack.c.l.b16 %v2470
  %v2606 = vunpack.c.l.b16 %v2471
  %v2607 = vunpack.c.l.b16 %v2472
  %v2608 = vunpack.c.l.b16 %v2473
  %v2609 = vunpack.c.l.b16 %v2474
  %v2610 = vunpack.c.l.b16 %v2475
  %v2611 = vunpack.c.l.b16 %v2476
  %v2612 = vunpack.c.l.b16 %v2477
  %v2613 = vunpack.c.l.b16 %v2478
  %v2614 = vunpack.c.l.b16 %v2479
  %v2615 = vunpack.c.l.b16 %v2480
  %v2616 = vunpack.c.l.b16 %v2481
  %v2617 = vunpack.c.l.b16 %v2482
  %v2618 = vunpack.c.l.b16 %v2483
  %v2619 = vunpack.c.l.b16 %v2484
  %v2620 = vunpack.c.l.b16 %v2485
  %v2621 = vunpack.c.l.b16 %v2486
  %v2622 = vunpack.c.l.b16 %v2487
  %v2623 = vunpack.c.l.b16 %v2488
  %v2624 = vunpack.c.l.b16 %v2489
  %v2625 = vunpack.c.l.b16 %v2490
  %v2626 = vunpack.c.l.b16 %v2491
  %v2627 = vunpack.c.l.b16 %v2492
  %v2628 = vunpack.c.l.b16 %v2493
  %v2629 = vunpack.c.l.b16 %v2494
  %v2630 = vunpack.c.l.b16 %v2495
  %v2631 = vunpack.c.l.b16 %v2496
  %v2632 = vunpack.c.l.b16 %v2497
  %v2633 = vunpack.c.l.b16 %v2498
  %v2634 = vunpack.c.l.b16 %v2499
  %v2635 = vunpack.c.l.b16 %v2500
  %v2636 = vunpack.c.l.b16 %v2501
  %v2637 = vunpack.c.l.b16 %v2502
  %v2638 = vunpack.c.l.b16 %v2503
  %v2639 = vunpack.c.l.b16 %v2504
  %v2640 = vunpack.c.l.b16 %v2505
  %v2641 = vunpack.c.l.b16 %v2506
  %v2642 = vunpack.c.l.b16 %v2507
  %v2643 = vunpack.c.l.b16 %v2508
  %v2644 = vunpack.c.l.b16 %v2509
  %v2645 = vunpack.c.l.b16 %v2510
  %v2646 = vunpack.c.l.b16 %v2511
  %v2647 = vunpack.c.l.b16 %v2512
  %v2648 = vunpack.c.l.b16 %v2513
  %v2649 = vunpack.c.l.b16 %v2514
  %v2650 = vunpack.c.l.b16 %v2515
  %v2651 = vunpack.c.l.b16 %v2516
  %v2652 = vunpack.c.l.b16 %v2517
  %v2653 = vunpack.c.l.b16 %v2518
  %v2654 = vunpack.c.l.b16 %v2519
  %v2655 = vunpack.c.l.b16 %v2520
  %v2656 = vunpack.c.l.b16 %v2521
  %v2657 = vunpack.c.l.b16 %v2522
  %v2658 = vunpack.c.l.b16 %v2523
  %v2659 = vunpack.c.l.b16 %v2524
  %v2660 = vunpack.c.l.b16 %v2525
  %v2661 = vunpack.c.l.b16 %v2526
  %v2662 = vunpack.c.l.b16 %v2527
  %v2663 = vunpack.c.l.b16 %v2528
  %v2664 = vunpack.c.l.b16 %v2529
  %v2665 = vpack.c.b16 %v2602, %v2601
  %v2666 = vpack.c.b16 %v2604, %v2603
  %v2667 = vpack.c.b16 %v2606, %v2605
  %v2668 = vpack.c.b16 %v2608, %v2607
  %v2669 = vpack.c.b16 %v2610, %v2609
  %v2670 = vpack.c.b16 %v2612, %v2611
  %v2671 = vpack.c.b16 %v2614, %v2613
  %v2672 = vpack.c.b16 %v2616, %v2615
  %v2673 = vpack.c.b16 %v2618, %v2617
  %v2674 = vpack.c.b16 %v2620, %v2619
  %v2675 = vpack.c.b16 %v2622, %v2621
  %v2676 = vpack.c.b16 %v2624, %v2623
  %v2677 = vpack.c.b16 %v2626, %v2625
  %v2678 = vpack.c.b16 %v2628, %v2627
  %v2679 = vpack.c.b16 %v2630, %v2629
  %v2680 = vpack.c.b16 %v2632, %v2631
  %v2681 = vpack.c.b16 %v2634, %v2633
  %v2682 = vpack.c.b16 %v2636, %v2635
  %v2683 = vpack.c.b16 %v2638, %v2637
  %v2684 = vpack.c.b16 %v2640, %v2639
  %v2685 = vpack.c.b16 %v2642, %v2641
  %v2686 = vpack.c.b16 %v2644, %v2643
  %v2687 = vpack.c.b16 %v2646, %v2645
  %v2688 = vpack.c.b16 %v2648, %v2647
  %v2689 = vpack.c.b16 %v2650, %v2649
  %v2690 = vpack.c.b16 %v2652, %v2651
  %v2691 = vpack.c.b16 %v2654, %v2653
  %v2692 = vpack.c.b16 %v2656, %v2655
  %v2693 = vpack.c.b16 %v2658, %v2657
  %v2694 = vpack.c.b16 %v2660, %v2659
  %v2695 = vpack.c.b16 %v2662, %v2661
  %v2696 = vpack.c.b16 %v2664, %v2663
  %2729 = vmatprep.subr.bf16.mxu0 0
  %2730 = vmatpush1.bf16.msra.mxu0 %v2665
  %2731 = vmatprep.subr.bf16.mxu0 0
  %2732 = vmatpush1.bf16.msra.mxu0 %v2666
  %2733 = vmatprep.subr.bf16.mxu0 0
  %2734 = vmatpush1.bf16.msra.mxu0 %v2667
  %2735 = vmatprep.subr.bf16.mxu0 0
  %2736 = vmatpush1.bf16.msra.mxu0 %v2668
  %2737 = vmatprep.subr.bf16.mxu0 0
  %2738 = vmatpush1.bf16.msra.mxu0 %v2669
  %2739 = vmatprep.subr.bf16.mxu0 0
  %2740 = vmatpush1.bf16.msra.mxu0 %v2670
  %2741 = vmatprep.subr.bf16.mxu0 0
  %2742 = vmatpush1.bf16.msra.mxu0 %v2671
  %2743 = vmatprep.subr.bf16.mxu0 0
  %2744 = vmatpush1.bf16.msra.mxu0 %v2672
  %2745 = vmatprep.subr.bf16.mxu0 0
  %2746 = vmatpush1.bf16.msra.mxu0 %v2673
  %2747 = vmatprep.subr.bf16.mxu0 0
  %2748 = vmatpush1.bf16.msra.mxu0 %v2674
  %2749 = vmatprep.subr.bf16.mxu0 0
  %2750 = vmatpush1.bf16.msra.mxu0 %v2675
  %2751 = vmatprep.subr.bf16.mxu0 0
  %2752 = vmatpush1.bf16.msra.mxu0 %v2676
  %2753 = vmatprep.subr.bf16.mxu0 0
  %2754 = vmatpush1.bf16.msra.mxu0 %v2677
  %2755 = vmatprep.subr.bf16.mxu0 0
  %2756 = vmatpush1.bf16.msra.mxu0 %v2678
  %2757 = vmatprep.subr.bf16.mxu0 0
  %2758 = vmatpush1.bf16.msra.mxu0 %v2679
  %2759 = vmatprep.subr.bf16.mxu0 0
  %2760 = vmatpush1.bf16.msra.mxu0 %v2680
  %2761 = vmatprep.mubr.bf16.mxu0 %v2463
  %2762 = vmatmul.mubr.bf16.gmra.mrb[0].mxu0 %v2462
  %v2763 = vpop.f32.mrb[0].mxu0
  %v2764 = vadd.f32 %v2535, %v2763
  %v2765 = vpop.f32.mrb[0].mxu0
  %v2766 = vpop.f32.mrb[0].mxu0
  %v2767 = vpop.f32.mrb[0].mxu0
  %2768 = vdwg.mxu0
  %2769 = vmatprep.subr.bf16.mxu0 0
  %2770 = vmatpush1.bf16.msra.mxu0 %v2681
  %2771 = vmatprep.subr.bf16.mxu0 0
  %2772 = vmatpush1.bf16.msra.mxu0 %v2682
  %2773 = vmatprep.subr.bf16.mxu0 0
  %2774 = vmatpush1.bf16.msra.mxu0 %v2683
  %2775 = vmatprep.subr.bf16.mxu0 0
  %2776 = vmatpush1.bf16.msra.mxu0 %v2684
  %2777 = vmatprep.subr.bf16.mxu0 0
  %2778 = vmatpush1.bf16.msra.mxu0 %v2685
  %2779 = vmatprep.subr.bf16.mxu0 0
  %2780 = vmatpush1.bf16.msra.mxu0 %v2686
  %2781 = vmatprep.subr.bf16.mxu0 0
  %2782 = vmatpush1.bf16.msra.mxu0 %v2687
  %2783 = vmatprep.subr.bf16.mxu0 0
  %2784 = vmatpush1.bf16.msra.mxu0 %v2688
  %2785 = vmatprep.subr.bf16.mxu0 0
  %2786 = vmatpush1.bf16.msra.mxu0 %v2689
  %2787 = vmatprep.subr.bf16.mxu0 0
  %2788 = vmatpush1.bf16.msra.mxu0 %v2690
  %2789 = vmatprep.subr.bf16.mxu0 0
  %2790 = vmatpush1.bf16.msra.mxu0 %v2691
  %2791 = vmatprep.subr.bf16.mxu0 0
  %2792 = vmatpush1.bf16.msra.mxu0 %v2692
  %2793 = vmatprep.subr.bf16.mxu0 0
  %2794 = vmatpush1.bf16.msra.mxu0 %v2693
  %2795 = vmatprep.subr.bf16.mxu0 0
  %2796 = vmatpush1.bf16.msra.mxu0 %v2694
  %2797 = vmatprep.subr.bf16.mxu0 0
  %2798 = vmatpush1.bf16.msra.mxu0 %v2695
  %2799 = vmatprep.subr.bf16.mxu0 0
  %2800 = vmatpush1.bf16.msra.mxu0 %v2696
  %2801 = vmatprep.mubr.bf16.mxu0 %v2465
  %2802 = vmatmul.mubr.bf16.gmra.mrb[0].mxu0 %v2464
  %v2803 = vpop.f32.mrb[0].mxu0
  %v2804 = vadd.f32 %v2764, %v2803
  %v2805 = vpop.f32.mrb[0].mxu0
  %v2806 = vpop.f32.mrb[0].mxu0
  %v2807 = vpop.f32.mrb[0].mxu0
  %2808 = vdwg.mxu0
  %v2809 = vsub.f32 0.0, %v2804
  %v2810 = vmul.f32 %v2809, 1.442695
  %v2811 = vpow.pop %v2810
  %v2812 = vadd.f32 %v2811, 1.0
  %v2813 = vrcp.pop %v2812
  %v2814 = vmul.f32 1.0, %v2813
  %vm2815 = vcmask 1024
  %2816 = vst.msk [vmem:[%s20] sm:$0x3] %vm2815, %v2814
  // Predicated region
  $region82: #{discriminator_forward.1} parent=0 // pred_check
    _
  $region83: #{discriminator_forward.1} parent=0 // pred_check_branch
    %2818 = sbr.rel (0) target = $region85
  $region84: #{discriminator_forward.1} parent=0 // pred_region
    _
  $region85: #{discriminator_forward.1} parent=0 // pred_fallthru
    _
  // Predicated region
  $region86: #{discriminator_forward.1} parent=0 // pred_check
    _
  $region87: #{discriminator_forward.1} parent=0 // pred_check_branch
    %2820 = sbr.rel (0) target = $region89
  $region88: #{discriminator_forward.1} parent=0 // pred_region
    _
  $region89: #{discriminator_forward.1} parent=0 // pred_fallthru
    _

</llo_original>
